<compile_context>
chip_gen: v7x
topology: tpu7x:2x2x1
jax: 0.10.0
libtpu: 0.0.40
codegen_flags: <defaults>
</compile_context>

<pallas_src>
import functools

import jax
import jax.numpy as jnp
import numpy as np
from jax.experimental import pallas as pl
from jax.experimental.pallas import tpu as pltpu

# ----------------------------- hyperparameters -------------------------------
STATIC_FEATURES = 4            # static_features_size
SEQ_LENGTH = 8                 # seq_length
OUTPUT_SIZE = 3                # output_size
NUM_CHANNELS = 32              # num_channels
KERNEL_SIZE = 3                # kernel_size
NUM_LAYERS = 4                 # num_layers (module default is 8; 4 keeps it small)
C_IN_RAW = STATIC_FEATURES + 2          # tcn_input_size
HIDDEN = NUM_CHANNELS // 2              # linear1 output size
C = NUM_CHANNELS                        # padded channel width used inside kernel
L = SEQ_LENGTH

OUT_PAD = 128                  # output lanes (OUTPUT_SIZE padded for dense stores)

# Set to jnp.bfloat16 on v6e/v7x for ~2x MXU throughput (loosen tolerances).
MATMUL_DTYPE = jnp.float32


def _mxu_dot(a, b):
    return jnp.dot(a.astype(MATMUL_DTYPE), b.astype(MATMUL_DTYPE),
                   preferred_element_type=jnp.float32)


# --------------------------------- kernel ------------------------------------
def _pack_taps(v3, tb, dil):
    """Build the fused im2col view for a dilated causal conv.

    v3: (tb, L, C).  Returns (flat, j0, nt) where flat is (tb*L, nt*C) holding
    the nt in-range taps (shift < L) in increasing-j order; out-of-range taps
    are statically dropped (they only see the zero left-pad).
    """
    shifts = [(KERNEL_SIZE - 1 - j) * dil for j in range(KERNEL_SIZE)]
    in_range = [(j, s) for j, s in enumerate(shifts) if s < L]
    j0 = in_range[0][0]
    nt = len(in_range)
    smax = in_range[0][1]                       # shifts decrease with j

    if smax > 0:
        zeros = jnp.zeros((tb, smax, C), v3.dtype)
        vpad = jnp.concatenate([zeros, v3], axis=1)          # (tb, L+smax, C)
    else:
        vpad = v3

    taps = [vpad[:, smax - s: smax - s + L, :] for _, s in in_range]
    packed = taps[0] if nt == 1 else jnp.concatenate(taps, axis=-1)  # (tb, L, nt*C)
    return packed.reshape(tb * L, nt * C), j0, nt


def _fused_causal_conv(v3, w_ref, b_ref, layer, dil, tb):
    """Dilated causal conv1d as a single fused MXU matmul.

    w_ref[layer]: (K*C, C) packed tap-major.  b_ref[layer]: (1, C).
    """
    flat, j0, nt = _pack_taps(v3, tb, dil)
    w = w_ref[layer, j0 * C:(j0 + nt) * C, :]                 # static row slice
    y = _mxu_dot(flat, w) + b_ref[layer]
    return y.reshape(tb, L, C)


def tcn_forward_kernel(
    xseq_ref,                 # (TB, L, C)   batched sequences (NLC, zero-padded channels)
    w10_ref, b10_ref,         # (K*C, 2C), (1, 2C)  fused layer-0 conv1 + 1x1 downsample
    w1_ref, b1_ref,           # (NL, K*C, C), (NL, 1, C)   (layer-0 slot unused)
    w2_ref, b2_ref,           # (NL, K*C, C), (NL, 1, C)
    wl1_ref, bl1_ref,         # (C, H), (1, H)
    wl2_ref, bl2_ref,         # (H, OUT_PAD), (1, OUT_PAD)
    out_ref,                  # (TB, OUT_PAD)
    *, tb,
):
    h3 = xseq_ref[...]                                        # (tb, L, C)

    # ---- layer 0: conv1 and the 1x1 downsample fused into one matmul --------
    flat0, j0, nt = _pack_taps(h3, tb, 1)                     # dil=1 -> all taps in range
    w10 = w10_ref[j0 * C:(j0 + nt) * C, :]                    # (nt*C, 2C)
    y0 = _mxu_dot(flat0, w10) + b10_ref[...]                  # (tb*L, 2C)
    o = jax.nn.relu(y0[:, :C]).reshape(tb, L, C)              # conv1 output
    res3 = y0[:, C:2 * C].reshape(tb, L, C)                   # downsampled residual
    o = jax.nn.relu(_fused_causal_conv(o, w2_ref, b2_ref, 0, 1, tb))
    skip = o                                                  # skip taken pre-residual
    h3 = jax.nn.relu(o + res3)

    # ---- layers 1..NL-1: identity residual -----------------------------------
    for layer in range(1, NUM_LAYERS):
        dil = 2 ** layer
        res3 = h3
        o = jax.nn.relu(_fused_causal_conv(h3, w1_ref, b1_ref, layer, dil, tb))
        o = jax.nn.relu(_fused_causal_conv(o, w2_ref, b2_ref, layer, dil, tb))
        skip = skip + o
        h3 = jax.nn.relu(o + res3)

    # TODO(synk): the TCN class source was not provided; pytorch-tcn-style
    # semantics are assumed (per-block: two dilated causal convs with ReLU,
    # residual with 1x1 downsample when channels differ, skip connections
    # summed over blocks and passed through a final ReLU).
    tcn3 = jax.nn.relu(skip)                                   # (tb, L, C)

    # last timestep via a static slice (selection matmul removed per review)
    last = tcn3[:, L - 1, :]                                   # (tb, C)
    hid = jax.nn.relu(_mxu_dot(last, wl1_ref[...]) + bl1_ref[...])
    out_ref[...] = _mxu_dot(hid, wl2_ref[...]) + bl2_ref[...]


# --------------------------------- wrapper ------------------------------------
def build_sequence(x):
    """Replicates the PyTorch glue: split static / autoregressive features,
    repeat static across time, concat; keep NLC layout.  Channels are
    zero-padded from C_IN_RAW to NUM_CHANNELS (matching zero-padded weight
    rows), which does not change the math."""
    B = x.shape[0]
    static = x[:, :STATIC_FEATURES]                            # (B, S)
    auto = x[:, STATIC_FEATURES:].reshape(B, SEQ_LENGTH, 2)    # (B, L, 2)
    static_rep = jnp.broadcast_to(static[:, None, :], (B, SEQ_LENGTH, STATIC_FEATURES))
    comb = jnp.concatenate([static_rep, auto], axis=2)         # (B, L, S+2)
    comb = jnp.pad(comb, ((0, 0), (0, 0), (0, C - C_IN_RAW)))  # (B, L, C)
    return comb.astype(jnp.float32)


def pack_params(params):
    """Host-side weight packing: tap-fused conv weights, fused layer-0
    conv1+downsample, lane-padded head."""
    w1p = params["w1"].reshape(NUM_LAYERS, KERNEL_SIZE * C, C)
    w2p = params["w2"].reshape(NUM_LAYERS, KERNEL_SIZE * C, C)

    # fused layer-0 conv1 (cols 0:C) + 1x1 downsample (cols C:2C, shift-0 tap rows)
    w10f = jnp.zeros((KERNEL_SIZE * C, 2 * C), jnp.float32)
    w10f = w10f.at[:, :C].set(w1p[0])
    w10f = w10f.at[(KERNEL_SIZE - 1) * C:, C:].set(params["wd0"])
    b10f = jnp.concatenate([params["b1"][0], params["bd0"]], axis=-1)   # (1, 2C)

    wl2p = jnp.zeros((HIDDEN, OUT_PAD), jnp.float32).at[:, :OUTPUT_SIZE].set(params["wl2"])
    bl2p = jnp.zeros((1, OUT_PAD), jnp.float32).at[:, :OUTPUT_SIZE].set(params["bl2"])

    return [w10f, b10f, w1p, params["b1"], w2p, params["b2"],
            params["wl1"], params["bl1"], wl2p, bl2p]


def choose_tb(batch):
    """Batch tile: grow TB (M = TB*L) as far as possible to amortize per-step
    overhead, while keeping >= 2 grid steps so the 'parallel' axis can shard
    across v7x's two TensorCores.  TB is a multiple of 16 (so TB*L % 128 == 0
    and the output block sublane dim is 8-aligned)."""
    tb = min(128, max(16, (batch + 1) // 2))
    return ((tb + 15) // 16) * 16


def autoregressive_tcn_forward(x, params):
    B = x.shape[0]
    xseq = build_sequence(x)                                  # (B, L, C)
    TB = choose_tb(B)
    B_pad = pl.cdiv(B, TB) * TB
    if B_pad != B:
        xseq = jnp.pad(xseq, ((0, B_pad - B), (0, 0), (0, 0)))
    weights = pack_params(params)

    # Weight specs use constant index_maps -> Pallas does not re-DMA them per step.
    in_specs = [pl.BlockSpec((TB, L, C), lambda b: (b, 0, 0))] + [
        pl.BlockSpec(w.shape, lambda b, n=w.ndim: (0,) * n) for w in weights
    ]
    out = pl.pallas_call(
        functools.partial(tcn_forward_kernel, tb=TB),
        out_shape=jax.ShapeDtypeStruct((B_pad, OUT_PAD), jnp.float32),
        grid_spec=pltpu.PrefetchScalarGridSpec(
            num_scalar_prefetch=0,
            grid=(B_pad // TB,),
            in_specs=in_specs,
            out_specs=pl.BlockSpec((TB, OUT_PAD), lambda b: (b, 0)),
        ),
        compiler_params=pltpu.CompilerParams(dimension_semantics=("parallel",)),
    )(xseq, *weights)
    return out[:B, :OUTPUT_SIZE]


# ------------------------ deterministic parameter init ------------------------
def make_params(key):
    def nrm(k, shape, scale=0.1):
        return jax.random.normal(k, shape, dtype=jnp.float32) * scale

    keys = jax.random.split(key, NUM_LAYERS + 5)
    w1s, b1s, w2s, b2s = [], [], [], []
    for layer in range(NUM_LAYERS):
        c_in = C_IN_RAW if layer == 0 else C
        k1, k2, k3, k4 = jax.random.split(keys[layer], 4)
        w1_l = nrm(k1, (KERNEL_SIZE, c_in, C))
        if layer == 0:
            # zero-pad the fake input channels: padded inputs are 0 too.
            w1_l = jnp.pad(w1_l, ((0, 0), (0, C - c_in), (0, 0)))
        w2_l = nrm(k2, (KERNEL_SIZE, C, C))
        w1s.append(w1_l); b1s.append(nrm(k3, (1, C)))
        w2s.append(w2_l); b2s.append(nrm(k4, (1, C)))

    kd, kdb = jax.random.split(keys[NUM_LAYERS], 2)
    wd0 = jnp.pad(nrm(kd, (C_IN_RAW, C)), ((0, C - C_IN_RAW), (0, 0)))
    bd0 = nrm(kdb, (1, C))

    return dict(
        w1=jnp.stack(w1s), b1=jnp.stack(b1s),
        w2=jnp.stack(w2s), b2=jnp.stack(b2s),
        wd0=wd0, bd0=bd0,
        wl1=nrm(keys[NUM_LAYERS + 1], (C, HIDDEN)),
        bl1=nrm(keys[NUM_LAYERS + 2], (1, HIDDEN)),
        wl2=nrm(keys[NUM_LAYERS + 3], (HIDDEN, OUTPUT_SIZE)),
        bl2=nrm(keys[NUM_LAYERS + 4], (1, OUTPUT_SIZE)),
    )


# ------------------------------ pure-JAX reference ----------------------------
def ref_forward(x, params):
    xseq = build_sequence(x)                                  # (B, L, C)

    def shift(v, s):
        if s == 0:
            return v
        return jnp.pad(v, ((0, 0), (s, 0), (0, 0)))[:, :L, :]

    def conv(v, w, b, dil):
        acc = jnp.zeros(v.shape[:-1] + (w.shape[-1],), jnp.float32)
        for j in range(KERNEL_SIZE):
            s = (KERNEL_SIZE - 1 - j) * dil
            if s >= L:
                continue
            acc = acc + jnp.einsum("blc,cd->bld", shift(v, s), w[j])
        return acc + b

    h = xseq
    skip = jnp.zeros_like(h)
    for layer in range(NUM_LAYERS):
        dil = 2 ** layer
        if layer == 0:
            res = jnp.einsum("blc,cd->bld", h, params["wd0"]) + params["bd0"]
        else:
            res = h
        o = jax.nn.relu(conv(h, params["w1"][layer], params["b1"][layer], dil))
        o = jax.nn.relu(conv(o, params["w2"][layer], params["b2"][layer], dil))
        skip = skip + o
        h = jax.nn.relu(o + res)
    t = jax.nn.relu(skip)
    last = t[:, -1, :]
    hid = jax.nn.relu(last @ params["wl1"] + params["bl1"][0])
    return hid @ params["wl2"] + params["bl2"][0]


# ----------------------------------- main -------------------------------------
if __name__ == "__main__":
    key = jax.random.PRNGKey(0)
    kx, kp = jax.random.split(key)

    batch = 20   # not a multiple of TB -> exercises the batch-padding path (grid = 2)
    x = jax.random.normal(
        kx, (batch, STATIC_FEATURES + 2 * SEQ_LENGTH), dtype=jnp.float32
    )
    params = make_params(kp)

    out = jax.block_until_ready(autoregressive_tcn_forward(x, params))
    ref = jax.block_until_ready(ref_forward(x, params))

    assert out.shape == (batch, OUTPUT_SIZE)
    assert np.allclose(np.asarray(out), np.asarray(ref), atol=1e-4, rtol=1e-4), (
        "Pallas kernel output does not match pure-JAX reference"
    )

    print("KERNEL_OK")
</pallas_src>

<mosaic_0001>
module attributes {stable_mosaic.version = 11 : i64} {
  func.func @tcn_forward_kernel(%arg0: i32, %arg1: memref<16x8x32xf32, #tpu.memory_space<vmem>>, %arg2: memref<96x64xf32, #tpu.memory_space<vmem>>, %arg3: memref<1x64xf32, #tpu.memory_space<vmem>>, %arg4: memref<4x96x32xf32, #tpu.memory_space<vmem>>, %arg5: memref<4x1x32xf32, #tpu.memory_space<vmem>>, %arg6: memref<4x96x32xf32, #tpu.memory_space<vmem>>, %arg7: memref<4x1x32xf32, #tpu.memory_space<vmem>>, %arg8: memref<32x16xf32, #tpu.memory_space<vmem>>, %arg9: memref<1x16xf32, #tpu.memory_space<vmem>>, %arg10: memref<16x128xf32, #tpu.memory_space<vmem>>, %arg11: memref<1x128xf32, #tpu.memory_space<vmem>>, %arg12: memref<16x128xf32, #tpu.memory_space<vmem>>) attributes {dimension_semantics = [#tpu.dimension_semantics<parallel>], iteration_bounds = array<i64: 2>, scalar_prefetch = 0 : i64, scratch_operands = 0 : i64, tpu.core_type = #tpu.core_type<tc>, window_params = [{transform_indices = @transform_0, window_bounds = array<i64: 16, 8, 32>}, {pipeline_mode = #tpu.pipeline_mode<synchronous>, transform_indices = @transform_1, window_bounds = array<i64: 96, 64>}, {pipeline_mode = #tpu.pipeline_mode<synchronous>, transform_indices = @transform_2, window_bounds = array<i64: 1, 64>}, {pipeline_mode = #tpu.pipeline_mode<synchronous>, transform_indices = @transform_3, window_bounds = array<i64: 4, 96, 32>}, {pipeline_mode = #tpu.pipeline_mode<synchronous>, transform_indices = @transform_4, window_bounds = array<i64: 4, 1, 32>}, {pipeline_mode = #tpu.pipeline_mode<synchronous>, transform_indices = @transform_5, window_bounds = array<i64: 4, 96, 32>}, {pipeline_mode = #tpu.pipeline_mode<synchronous>, transform_indices = @transform_6, window_bounds = array<i64: 4, 1, 32>}, {pipeline_mode = #tpu.pipeline_mode<synchronous>, transform_indices = @transform_7, window_bounds = array<i64: 32, 16>}, {pipeline_mode = #tpu.pipeline_mode<synchronous>, transform_indices = @transform_8, window_bounds = array<i64: 1, 16>}, {pipeline_mode = #tpu.pipeline_mode<synchronous>, transform_indices = @transform_9, window_bounds = array<i64: 16, 128>}, {pipeline_mode = #tpu.pipeline_mode<synchronous>, transform_indices = @transform_10, window_bounds = array<i64: 1, 128>}, {transform_indices = @transform_11, window_bounds = array<i64: 16, 128>}]} {
    %c0 = arith.constant 0 : index
    %c0_0 = arith.constant 0 : index
    %c0_1 = arith.constant 0 : index
    %0 = vector.load %arg1[%c0, %c0_0, %c0_1] : memref<16x8x32xf32, #tpu.memory_space<vmem>>, vector<16x8x32xf32>
    %cst = arith.constant 0.000000e+00 : f32
    %1 = vector.broadcast %cst : f32 to vector<16x2x32xf32>
    %2 = tpu.concatenate %1, %0 in 1 : vector<16x2x32xf32>, vector<16x8x32xf32> -> vector<16x10x32xf32>
    %3 = vector.extract_strided_slice %2 {offsets = [0, 0, 0], sizes = [16, 8, 32], strides = [1, 1, 1]} : vector<16x10x32xf32> to vector<16x8x32xf32>
    %4 = vector.extract_strided_slice %2 {offsets = [0, 1, 0], sizes = [16, 8, 32], strides = [1, 1, 1]} : vector<16x10x32xf32> to vector<16x8x32xf32>
    %5 = vector.extract_strided_slice %2 {offsets = [0, 2, 0], sizes = [16, 8, 32], strides = [1, 1, 1]} : vector<16x10x32xf32> to vector<16x8x32xf32>
    %6 = tpu.concatenate %3, %4, %5 in 2 : vector<16x8x32xf32>, vector<16x8x32xf32>, vector<16x8x32xf32> -> vector<16x8x96xf32>
    %7 = vector.shape_cast %6 : vector<16x8x96xf32> to vector<128x96xf32>
    %c0_2 = arith.constant 0 : index
    %c0_3 = arith.constant 0 : index
    %8 = vector.load %arg2[%c0_2, %c0_3] : memref<96x64xf32, #tpu.memory_space<vmem>>, vector<96x64xf32>
    %cst_4 = arith.constant dense<0.000000e+00> : vector<128x64xf32>
    %9 = tpu.matmul %7, %8, %cst_4 {dimension_numbers = #tpu.dot_dimension_numbers<[1], [0], [0], [1], [0, 0, 1, 1], [], []>} : vector<128x96xf32>, vector<96x64xf32>, vector<128x64xf32> -> vector<128x64xf32>
    %c0_5 = arith.constant 0 : index
    %c0_6 = arith.constant 0 : index
    %10 = vector.load %arg3[%c0_5, %c0_6] : memref<1x64xf32, #tpu.memory_space<vmem>>, vector<1x64xf32>
    %11 = vector.broadcast %10 : vector<1x64xf32> to vector<128x64xf32>
    %12 = arith.addf %9, %11 : vector<128x64xf32>
    %13 = vector.extract_strided_slice %12 {offsets = [0, 0], sizes = [128, 32], strides = [1, 1]} : vector<128x64xf32> to vector<128x32xf32>
    %cst_7 = arith.constant 0.000000e+00 : f32
    %14 = vector.broadcast %cst_7 : f32 to vector<128x32xf32>
    %15 = arith.maximumf %13, %14 : vector<128x32xf32>
    %16 = vector.shape_cast %15 : vector<128x32xf32> to vector<16x8x32xf32>
    %17 = vector.extract_strided_slice %12 {offsets = [0, 32], sizes = [128, 32], strides = [1, 1]} : vector<128x64xf32> to vector<128x32xf32>
    %18 = vector.shape_cast %17 : vector<128x32xf32> to vector<16x8x32xf32>
    %cst_8 = arith.constant 0.000000e+00 : f32
    %19 = vector.broadcast %cst_8 : f32 to vector<16x2x32xf32>
    %20 = tpu.concatenate %19, %16 in 1 : vector<16x2x32xf32>, vector<16x8x32xf32> -> vector<16x10x32xf32>
    %21 = vector.extract_strided_slice %20 {offsets = [0, 0, 0], sizes = [16, 8, 32], strides = [1, 1, 1]} : vector<16x10x32xf32> to vector<16x8x32xf32>
    %22 = vector.extract_strided_slice %20 {offsets = [0, 1, 0], sizes = [16, 8, 32], strides = [1, 1, 1]} : vector<16x10x32xf32> to vector<16x8x32xf32>
    %23 = vector.extract_strided_slice %20 {offsets = [0, 2, 0], sizes = [16, 8, 32], strides = [1, 1, 1]} : vector<16x10x32xf32> to vector<16x8x32xf32>
    %24 = tpu.concatenate %21, %22, %23 in 2 : vector<16x8x32xf32>, vector<16x8x32xf32>, vector<16x8x32xf32> -> vector<16x8x96xf32>
    %25 = vector.shape_cast %24 : vector<16x8x96xf32> to vector<128x96xf32>
    %c0_9 = arith.constant 0 : index
    %c0_10 = arith.constant 0 : index
    %c0_11 = arith.constant 0 : index
    %26 = vector.load %arg6[%c0_9, %c0_10, %c0_11] : memref<4x96x32xf32, #tpu.memory_space<vmem>>, vector<1x96x32xf32>
    %27 = vector.shape_cast %26 : vector<1x96x32xf32> to vector<96x32xf32>
    %cst_12 = arith.constant dense<0.000000e+00> : vector<128x32xf32>
    %28 = tpu.matmul %25, %27, %cst_12 {dimension_numbers = #tpu.dot_dimension_numbers<[1], [0], [0], [1], [0, 0, 1, 1], [], []>} : vector<128x96xf32>, vector<96x32xf32>, vector<128x32xf32> -> vector<128x32xf32>
    %c0_13 = arith.constant 0 : index
    %c0_14 = arith.constant 0 : index
    %c0_15 = arith.constant 0 : index
    %29 = vector.load %arg7[%c0_13, %c0_14, %c0_15] : memref<4x1x32xf32, #tpu.memory_space<vmem>>, vector<1x1x32xf32>
    %30 = vector.shape_cast %29 : vector<1x1x32xf32> to vector<1x32xf32>
    %31 = vector.broadcast %30 : vector<1x32xf32> to vector<128x32xf32>
    %32 = arith.addf %28, %31 : vector<128x32xf32>
    %33 = vector.shape_cast %32 : vector<128x32xf32> to vector<16x8x32xf32>
    %cst_16 = arith.constant 0.000000e+00 : f32
    %34 = vector.broadcast %cst_16 : f32 to vector<16x8x32xf32>
    %35 = arith.maximumf %33, %34 : vector<16x8x32xf32>
    %36 = arith.addf %35, %18 : vector<16x8x32xf32>
    %cst_17 = arith.constant 0.000000e+00 : f32
    %37 = vector.broadcast %cst_17 : f32 to vector<16x8x32xf32>
    %38 = arith.maximumf %36, %37 : vector<16x8x32xf32>
    %cst_18 = arith.constant 0.000000e+00 : f32
    %39 = vector.broadcast %cst_18 : f32 to vector<16x4x32xf32>
    %40 = tpu.concatenate %39, %38 in 1 : vector<16x4x32xf32>, vector<16x8x32xf32> -> vector<16x12x32xf32>
    %41 = vector.extract_strided_slice %40 {offsets = [0, 0, 0], sizes = [16, 8, 32], strides = [1, 1, 1]} : vector<16x12x32xf32> to vector<16x8x32xf32>
    %42 = vector.extract_strided_slice %40 {offsets = [0, 2, 0], sizes = [16, 8, 32], strides = [1, 1, 1]} : vector<16x12x32xf32> to vector<16x8x32xf32>
    %43 = vector.extract_strided_slice %40 {offsets = [0, 4, 0], sizes = [16, 8, 32], strides = [1, 1, 1]} : vector<16x12x32xf32> to vector<16x8x32xf32>
    %44 = tpu.concatenate %41, %42, %43 in 2 : vector<16x8x32xf32>, vector<16x8x32xf32>, vector<16x8x32xf32> -> vector<16x8x96xf32>
    %45 = vector.shape_cast %44 : vector<16x8x96xf32> to vector<128x96xf32>
    %c1 = arith.constant 1 : index
    %c0_19 = arith.constant 0 : index
    %c0_20 = arith.constant 0 : index
    %46 = vector.load %arg4[%c1, %c0_19, %c0_20] : memref<4x96x32xf32, #tpu.memory_space<vmem>>, vector<1x96x32xf32>
    %47 = vector.shape_cast %46 : vector<1x96x32xf32> to vector<96x32xf32>
    %cst_21 = arith.constant dense<0.000000e+00> : vector<128x32xf32>
    %48 = tpu.matmul %45, %47, %cst_21 {dimension_numbers = #tpu.dot_dimension_numbers<[1], [0], [0], [1], [0, 0, 1, 1], [], []>} : vector<128x96xf32>, vector<96x32xf32>, vector<128x32xf32> -> vector<128x32xf32>
    %c1_22 = arith.constant 1 : index
    %c0_23 = arith.constant 0 : index
    %c0_24 = arith.constant 0 : index
    %49 = vector.load %arg5[%c1_22, %c0_23, %c0_24] : memref<4x1x32xf32, #tpu.memory_space<vmem>>, vector<1x1x32xf32>
    %50 = vector.shape_cast %49 : vector<1x1x32xf32> to vector<1x32xf32>
    %51 = vector.broadcast %50 : vector<1x32xf32> to vector<128x32xf32>
    %52 = arith.addf %48, %51 : vector<128x32xf32>
    %53 = vector.shape_cast %52 : vector<128x32xf32> to vector<16x8x32xf32>
    %cst_25 = arith.constant 0.000000e+00 : f32
    %54 = vector.broadcast %cst_25 : f32 to vector<16x8x32xf32>
    %55 = arith.maximumf %53, %54 : vector<16x8x32xf32>
    %cst_26 = arith.constant 0.000000e+00 : f32
    %56 = vector.broadcast %cst_26 : f32 to vector<16x4x32xf32>
    %57 = tpu.concatenate %56, %55 in 1 : vector<16x4x32xf32>, vector<16x8x32xf32> -> vector<16x12x32xf32>
    %58 = vector.extract_strided_slice %57 {offsets = [0, 0, 0], sizes = [16, 8, 32], strides = [1, 1, 1]} : vector<16x12x32xf32> to vector<16x8x32xf32>
    %59 = vector.extract_strided_slice %57 {offsets = [0, 2, 0], sizes = [16, 8, 32], strides = [1, 1, 1]} : vector<16x12x32xf32> to vector<16x8x32xf32>
    %60 = vector.extract_strided_slice %57 {offsets = [0, 4, 0], sizes = [16, 8, 32], strides = [1, 1, 1]} : vector<16x12x32xf32> to vector<16x8x32xf32>
    %61 = tpu.concatenate %58, %59, %60 in 2 : vector<16x8x32xf32>, vector<16x8x32xf32>, vector<16x8x32xf32> -> vector<16x8x96xf32>
    %62 = vector.shape_cast %61 : vector<16x8x96xf32> to vector<128x96xf32>
    %c1_27 = arith.constant 1 : index
    %c0_28 = arith.constant 0 : index
    %c0_29 = arith.constant 0 : index
    %63 = vector.load %arg6[%c1_27, %c0_28, %c0_29] : memref<4x96x32xf32, #tpu.memory_space<vmem>>, vector<1x96x32xf32>
    %64 = vector.shape_cast %63 : vector<1x96x32xf32> to vector<96x32xf32>
    %cst_30 = arith.constant dense<0.000000e+00> : vector<128x32xf32>
    %65 = tpu.matmul %62, %64, %cst_30 {dimension_numbers = #tpu.dot_dimension_numbers<[1], [0], [0], [1], [0, 0, 1, 1], [], []>} : vector<128x96xf32>, vector<96x32xf32>, vector<128x32xf32> -> vector<128x32xf32>
    %c1_31 = arith.constant 1 : index
    %c0_32 = arith.constant 0 : index
    %c0_33 = arith.constant 0 : index
    %66 = vector.load %arg7[%c1_31, %c0_32, %c0_33] : memref<4x1x32xf32, #tpu.memory_space<vmem>>, vector<1x1x32xf32>
    %67 = vector.shape_cast %66 : vector<1x1x32xf32> to vector<1x32xf32>
    %68 = vector.broadcast %67 : vector<1x32xf32> to vector<128x32xf32>
    %69 = arith.addf %65, %68 : vector<128x32xf32>
    %70 = vector.shape_cast %69 : vector<128x32xf32> to vector<16x8x32xf32>
    %cst_34 = arith.constant 0.000000e+00 : f32
    %71 = vector.broadcast %cst_34 : f32 to vector<16x8x32xf32>
    %72 = arith.maximumf %70, %71 : vector<16x8x32xf32>
    %73 = arith.addf %35, %72 : vector<16x8x32xf32>
    %74 = arith.addf %72, %38 : vector<16x8x32xf32>
    %cst_35 = arith.constant 0.000000e+00 : f32
    %75 = vector.broadcast %cst_35 : f32 to vector<16x8x32xf32>
    %76 = arith.maximumf %74, %75 : vector<16x8x32xf32>
    %cst_36 = arith.constant 0.000000e+00 : f32
    %77 = vector.broadcast %cst_36 : f32 to vector<16x4x32xf32>
    %78 = tpu.concatenate %77, %76 in 1 : vector<16x4x32xf32>, vector<16x8x32xf32> -> vector<16x12x32xf32>
    %79 = vector.extract_strided_slice %78 {offsets = [0, 0, 0], sizes = [16, 8, 32], strides = [1, 1, 1]} : vector<16x12x32xf32> to vector<16x8x32xf32>
    %80 = vector.extract_strided_slice %78 {offsets = [0, 4, 0], sizes = [16, 8, 32], strides = [1, 1, 1]} : vector<16x12x32xf32> to vector<16x8x32xf32>
    %81 = tpu.concatenate %79, %80 in 2 : vector<16x8x32xf32>, vector<16x8x32xf32> -> vector<16x8x64xf32>
    %82 = vector.shape_cast %81 : vector<16x8x64xf32> to vector<128x64xf32>
    %c2 = arith.constant 2 : index
    %c32 = arith.constant 32 : index
    %c0_37 = arith.constant 0 : index
    %83 = vector.load %arg4[%c2, %c32, %c0_37] : memref<4x96x32xf32, #tpu.memory_space<vmem>>, vector<1x64x32xf32>
    %84 = vector.shape_cast %83 : vector<1x64x32xf32> to vector<64x32xf32>
    %cst_38 = arith.constant dense<0.000000e+00> : vector<128x32xf32>
    %85 = tpu.matmul %82, %84, %cst_38 {dimension_numbers = #tpu.dot_dimension_numbers<[1], [0], [0], [1], [0, 0, 1, 1], [], []>} : vector<128x64xf32>, vector<64x32xf32>, vector<128x32xf32> -> vector<128x32xf32>
    %c2_39 = arith.constant 2 : index
    %c0_40 = arith.constant 0 : index
    %c0_41 = arith.constant 0 : index
    %86 = vector.load %arg5[%c2_39, %c0_40, %c0_41] : memref<4x1x32xf32, #tpu.memory_space<vmem>>, vector<1x1x32xf32>
    %87 = vector.shape_cast %86 : vector<1x1x32xf32> to vector<1x32xf32>
    %88 = vector.broadcast %87 : vector<1x32xf32> to vector<128x32xf32>
    %89 = arith.addf %85, %88 : vector<128x32xf32>
    %90 = vector.shape_cast %89 : vector<128x32xf32> to vector<16x8x32xf32>
    %cst_42 = arith.constant 0.000000e+00 : f32
    %91 = vector.broadcast %cst_42 : f32 to vector<16x8x32xf32>
    %92 = arith.maximumf %90, %91 : vector<16x8x32xf32>
    %cst_43 = arith.constant 0.000000e+00 : f32
    %93 = vector.broadcast %cst_43 : f32 to vector<16x4x32xf32>
    %94 = tpu.concatenate %93, %92 in 1 : vector<16x4x32xf32>, vector<16x8x32xf32> -> vector<16x12x32xf32>
    %95 = vector.extract_strided_slice %94 {offsets = [0, 0, 0], sizes = [16, 8, 32], strides = [1, 1, 1]} : vector<16x12x32xf32> to vector<16x8x32xf32>
    %96 = vector.extract_strided_slice %94 {offsets = [0, 4, 0], sizes = [16, 8, 32], strides = [1, 1, 1]} : vector<16x12x32xf32> to vector<16x8x32xf32>
    %97 = tpu.concatenate %95, %96 in 2 : vector<16x8x32xf32>, vector<16x8x32xf32> -> vector<16x8x64xf32>
    %98 = vector.shape_cast %97 : vector<16x8x64xf32> to vector<128x64xf32>
    %c2_44 = arith.constant 2 : index
    %c32_45 = arith.constant 32 : index
    %c0_46 = arith.constant 0 : index
    %99 = vector.load %arg6[%c2_44, %c32_45, %c0_46] : memref<4x96x32xf32, #tpu.memory_space<vmem>>, vector<1x64x32xf32>
    %100 = vector.shape_cast %99 : vector<1x64x32xf32> to vector<64x32xf32>
    %cst_47 = arith.constant dense<0.000000e+00> : vector<128x32xf32>
    %101 = tpu.matmul %98, %100, %cst_47 {dimension_numbers = #tpu.dot_dimension_numbers<[1], [0], [0], [1], [0, 0, 1, 1], [], []>} : vector<128x64xf32>, vector<64x32xf32>, vector<128x32xf32> -> vector<128x32xf32>
    %c2_48 = arith.constant 2 : index
    %c0_49 = arith.constant 0 : index
    %c0_50 = arith.constant 0 : index
    %102 = vector.load %arg7[%c2_48, %c0_49, %c0_50] : memref<4x1x32xf32, #tpu.memory_space<vmem>>, vector<1x1x32xf32>
    %103 = vector.shape_cast %102 : vector<1x1x32xf32> to vector<1x32xf32>
    %104 = vector.broadcast %103 : vector<1x32xf32> to vector<128x32xf32>
    %105 = arith.addf %101, %104 : vector<128x32xf32>
    %106 = vector.shape_cast %105 : vector<128x32xf32> to vector<16x8x32xf32>
    %cst_51 = arith.constant 0.000000e+00 : f32
    %107 = vector.broadcast %cst_51 : f32 to vector<16x8x32xf32>
    %108 = arith.maximumf %106, %107 : vector<16x8x32xf32>
    %109 = arith.addf %73, %108 : vector<16x8x32xf32>
    %110 = arith.addf %108, %76 : vector<16x8x32xf32>
    %cst_52 = arith.constant 0.000000e+00 : f32
    %111 = vector.broadcast %cst_52 : f32 to vector<16x8x32xf32>
    %112 = arith.maximumf %110, %111 : vector<16x8x32xf32>
    %113 = vector.shape_cast %112 : vector<16x8x32xf32> to vector<128x32xf32>
    %c3 = arith.constant 3 : index
    %c64 = arith.constant 64 : index
    %c0_53 = arith.constant 0 : index
    %114 = vector.load %arg4[%c3, %c64, %c0_53] : memref<4x96x32xf32, #tpu.memory_space<vmem>>, vector<1x32x32xf32>
    %115 = vector.shape_cast %114 : vector<1x32x32xf32> to vector<32x32xf32>
    %cst_54 = arith.constant dense<0.000000e+00> : vector<128x32xf32>
    %116 = tpu.matmul %113, %115, %cst_54 {dimension_numbers = #tpu.dot_dimension_numbers<[1], [0], [0], [1], [0, 0, 1, 1], [], []>} : vector<128x32xf32>, vector<32x32xf32>, vector<128x32xf32> -> vector<128x32xf32>
    %c3_55 = arith.constant 3 : index
    %c0_56 = arith.constant 0 : index
    %c0_57 = arith.constant 0 : index
    %117 = vector.load %arg5[%c3_55, %c0_56, %c0_57] : memref<4x1x32xf32, #tpu.memory_space<vmem>>, vector<1x1x32xf32>
    %118 = vector.shape_cast %117 : vector<1x1x32xf32> to vector<1x32xf32>
    %119 = vector.broadcast %118 : vector<1x32xf32> to vector<128x32xf32>
    %120 = arith.addf %116, %119 : vector<128x32xf32>
    %121 = vector.shape_cast %120 : vector<128x32xf32> to vector<16x8x32xf32>
    %cst_58 = arith.constant 0.000000e+00 : f32
    %122 = vector.broadcast %cst_58 : f32 to vector<16x8x32xf32>
    %123 = arith.maximumf %121, %122 : vector<16x8x32xf32>
    %124 = vector.shape_cast %123 : vector<16x8x32xf32> to vector<128x32xf32>
    %c3_59 = arith.constant 3 : index
    %c64_60 = arith.constant 64 : index
    %c0_61 = arith.constant 0 : index
    %125 = vector.load %arg6[%c3_59, %c64_60, %c0_61] : memref<4x96x32xf32, #tpu.memory_space<vmem>>, vector<1x32x32xf32>
    %126 = vector.shape_cast %125 : vector<1x32x32xf32> to vector<32x32xf32>
    %cst_62 = arith.constant dense<0.000000e+00> : vector<128x32xf32>
    %127 = tpu.matmul %124, %126, %cst_62 {dimension_numbers = #tpu.dot_dimension_numbers<[1], [0], [0], [1], [0, 0, 1, 1], [], []>} : vector<128x32xf32>, vector<32x32xf32>, vector<128x32xf32> -> vector<128x32xf32>
    %c3_63 = arith.constant 3 : index
    %c0_64 = arith.constant 0 : index
    %c0_65 = arith.constant 0 : index
    %128 = vector.load %arg7[%c3_63, %c0_64, %c0_65] : memref<4x1x32xf32, #tpu.memory_space<vmem>>, vector<1x1x32xf32>
    %129 = vector.shape_cast %128 : vector<1x1x32xf32> to vector<1x32xf32>
    %130 = vector.broadcast %129 : vector<1x32xf32> to vector<128x32xf32>
    %131 = arith.addf %127, %130 : vector<128x32xf32>
    %132 = vector.shape_cast %131 : vector<128x32xf32> to vector<16x8x32xf32>
    %cst_66 = arith.constant 0.000000e+00 : f32
    %133 = vector.broadcast %cst_66 : f32 to vector<16x8x32xf32>
    %134 = arith.maximumf %132, %133 : vector<16x8x32xf32>
    %135 = arith.addf %109, %134 : vector<16x8x32xf32>
    %cst_67 = arith.constant 0.000000e+00 : f32
    %136 = vector.broadcast %cst_67 : f32 to vector<16x8x32xf32>
    %137 = arith.maximumf %135, %136 : vector<16x8x32xf32>
    %138 = vector.extract_strided_slice %137 {offsets = [0, 7, 0], sizes = [16, 1, 32], strides = [1, 1, 1]} : vector<16x8x32xf32> to vector<16x1x32xf32>
    %139 = vector.shape_cast %138 : vector<16x1x32xf32> to vector<16x32xf32>
    %c0_68 = arith.constant 0 : index
    %c0_69 = arith.constant 0 : index
    %140 = vector.load %arg8[%c0_68, %c0_69] : memref<32x16xf32, #tpu.memory_space<vmem>>, vector<32x16xf32>
    %cst_70 = arith.constant dense<0.000000e+00> : vector<16x16xf32>
    %141 = tpu.matmul %139, %140, %cst_70 {dimension_numbers = #tpu.dot_dimension_numbers<[1], [0], [0], [1], [0, 0, 1, 1], [], []>} : vector<16x32xf32>, vector<32x16xf32>, vector<16x16xf32> -> vector<16x16xf32>
    %c0_71 = arith.constant 0 : index
    %c0_72 = arith.constant 0 : index
    %142 = vector.load %arg9[%c0_71, %c0_72] : memref<1x16xf32, #tpu.memory_space<vmem>>, vector<1x16xf32>
    %143 = vector.broadcast %142 : vector<1x16xf32> to vector<16x16xf32>
    %144 = arith.addf %141, %143 : vector<16x16xf32>
    %cst_73 = arith.constant 0.000000e+00 : f32
    %145 = vector.broadcast %cst_73 : f32 to vector<16x16xf32>
    %146 = arith.maximumf %144, %145 : vector<16x16xf32>
    %c0_74 = arith.constant 0 : index
    %c0_75 = arith.constant 0 : index
    %147 = vector.load %arg10[%c0_74, %c0_75] : memref<16x128xf32, #tpu.memory_space<vmem>>, vector<16x128xf32>
    %cst_76 = arith.constant dense<0.000000e+00> : vector<16x128xf32>
    %148 = tpu.matmul %146, %147, %cst_76 {dimension_numbers = #tpu.dot_dimension_numbers<[1], [0], [0], [1], [0, 0, 1, 1], [], []>} : vector<16x16xf32>, vector<16x128xf32>, vector<16x128xf32> -> vector<16x128xf32>
    %c0_77 = arith.constant 0 : index
    %c0_78 = arith.constant 0 : index
    %149 = vector.load %arg11[%c0_77, %c0_78] : memref<1x128xf32, #tpu.memory_space<vmem>>, vector<1x128xf32>
    %150 = vector.broadcast %149 : vector<1x128xf32> to vector<16x128xf32>
    %151 = arith.addf %148, %150 : vector<16x128xf32>
    %c0_79 = arith.constant 0 : index
    %c0_80 = arith.constant 0 : index
    %152 = vector.load %arg12[%c0_79, %c0_80] : memref<16x128xf32, #tpu.memory_space<vmem>>, vector<16x128xf32>
    tpu.vector_store %arg12[%c0_79, %c0_80], %151 {strides = array<i32>} : memref<16x128xf32, #tpu.memory_space<vmem>>, vector<16x128xf32>,
    return
  }
  func.func @transform_0(%arg0: i32) -> (i32, i32, i32) {
    %c0_i32 = arith.constant 0 : i32
    %c0_i32_0 = arith.constant 0 : i32
    %c0_i32_1 = arith.constant 0 : i32
    return %arg0, %c0_i32, %c0_i32_0 : i32, i32, i32
  }
  func.func @transform_1(%arg0: i32) -> (i32, i32) {
    %c0_i32 = arith.constant 0 : i32
    %c0_i32_0 = arith.constant 0 : i32
    %c0_i32_1 = arith.constant 0 : i32
    return %c0_i32, %c0_i32_0 : i32, i32
  }
  func.func @transform_2(%arg0: i32) -> (i32, i32) {
    %c0_i32 = arith.constant 0 : i32
    %c0_i32_0 = arith.constant 0 : i32
    %c0_i32_1 = arith.constant 0 : i32
    return %c0_i32, %c0_i32_0 : i32, i32
  }
  func.func @transform_3(%arg0: i32) -> (i32, i32, i32) {
    %c0_i32 = arith.constant 0 : i32
    %c0_i32_0 = arith.constant 0 : i32
    %c0_i32_1 = arith.constant 0 : i32
    %c0_i32_2 = arith.constant 0 : i32
    return %c0_i32, %c0_i32_0, %c0_i32_1 : i32, i32, i32
  }
  func.func @transform_4(%arg0: i32) -> (i32, i32, i32) {
    %c0_i32 = arith.constant 0 : i32
    %c0_i32_0 = arith.constant 0 : i32
    %c0_i32_1 = arith.constant 0 : i32
    %c0_i32_2 = arith.constant 0 : i32
    return %c0_i32, %c0_i32_0, %c0_i32_1 : i32, i32, i32
  }
  func.func @transform_5(%arg0: i32) -> (i32, i32, i32) {
    %c0_i32 = arith.constant 0 : i32
    %c0_i32_0 = arith.constant 0 : i32
    %c0_i32_1 = arith.constant 0 : i32
    %c0_i32_2 = arith.constant 0 : i32
    return %c0_i32, %c0_i32_0, %c0_i32_1 : i32, i32, i32
  }
  func.func @transform_6(%arg0: i32) -> (i32, i32, i32) {
    %c0_i32 = arith.constant 0 : i32
    %c0_i32_0 = arith.constant 0 : i32
    %c0_i32_1 = arith.constant 0 : i32
    %c0_i32_2 = arith.constant 0 : i32
    return %c0_i32, %c0_i32_0, %c0_i32_1 : i32, i32, i32
  }
  func.func @transform_7(%arg0: i32) -> (i32, i32) {
    %c0_i32 = arith.constant 0 : i32
    %c0_i32_0 = arith.constant 0 : i32
    %c0_i32_1 = arith.constant 0 : i32
    return %c0_i32, %c0_i32_0 : i32, i32
  }
  func.func @transform_8(%arg0: i32) -> (i32, i32) {
    %c0_i32 = arith.constant 0 : i32
    %c0_i32_0 = arith.constant 0 : i32
    %c0_i32_1 = arith.constant 0 : i32
    return %c0_i32, %c0_i32_0 : i32, i32
  }
  func.func @transform_9(%arg0: i32) -> (i32, i32) {
    %c0_i32 = arith.constant 0 : i32
    %c0_i32_0 = arith.constant 0 : i32
    %c0_i32_1 = arith.constant 0 : i32
    return %c0_i32, %c0_i32_0 : i32, i32
  }
  func.func @transform_10(%arg0: i32) -> (i32, i32) {
    %c0_i32 = arith.constant 0 : i32
    %c0_i32_0 = arith.constant 0 : i32
    %c0_i32_1 = arith.constant 0 : i32
    return %c0_i32, %c0_i32_0 : i32, i32
  }
  func.func @transform_11(%arg0: i32) -> (i32, i32) {
    %c0_i32 = arith.constant 0 : i32
    %c0_i32_0 = arith.constant 0 : i32
    return %arg0, %c0_i32 : i32, i32
  }
}

</mosaic_0001>

<llo_original>
// kernel: tpu_custom_call.1
$region0: #{tpu_custom_call.1}
  #allocation0 [shape = 'u32[]', space=smem, size = 0x4, offset = 0x4, fixed_abs, tag = 'smem constant byte address 0x4 - core index']
  #allocation1 [shape = 'u32[144,128]{1,0:T(1,128)}', space=vmem, size = 0x12000, scoped, tag = 'internal scratch']
  %s0 = inlined_call_operand.vmem [shape: f32[32,8,32], index: 0, kind: input, shape index: {}]
  %s1 = inlined_call_operand.vmem [shape: f32[96,64], index: 1, kind: input, shape index: {}]
  %s2 = inlined_call_operand.vmem [shape: f32[1,64], index: 2, kind: input, shape index: {}]
  %s3 = inlined_call_operand.vmem [shape: f32[4,96,32], index: 3, kind: input, shape index: {}]
  %s4 = inlined_call_operand.vmem [shape: f32[4,1,32], index: 4, kind: input, shape index: {}]
  %s5 = inlined_call_operand.vmem [shape: f32[4,96,32], index: 5, kind: input, shape index: {}]
  %s6 = inlined_call_operand.vmem [shape: f32[4,1,32], index: 6, kind: input, shape index: {}]
  %s7 = inlined_call_operand.vmem [shape: f32[32,16], index: 7, kind: input, shape index: {}]
  %s8 = inlined_call_operand.vmem [shape: f32[1,16], index: 8, kind: input, shape index: {}]
  %s9 = inlined_call_operand.vmem [shape: f32[16,128], index: 9, kind: input, shape index: {}]
  %s10 = inlined_call_operand.vmem [shape: f32[1,128], index: 10, kind: input, shape index: {}]
  %s11 = inlined_call_operand.hbm [shape: f32[32,128], index: 11, kind: output, shape index: {}]
  %s12 = sld [smem:[#allocation0]]
  $region77: #{tpu_custom_call.1} parent=0
    _
  %s14 = ssub.s32 1, %s12
  %s15 = scalar_select 0, %s14, %s12
  $region1: #{tpu_custom_call.1} parent=0
    #allocation2 [shape = 'u8[16384]{0}', space=vmem, size = 0x4000, scoped, tag = 'output window, operand 0']
    #allocation3 [shape = 's32[2]{0}', space=sflag, size = 0x8, scoped, tag = 'scoped memory for tpu_custom_call.1']
    %16 = vsyncpa [#allocation3], 0
    %s17 = scalar_lea.sflag [#allocation3], 1
    %18 = vsyncpa %s17, 0
    loop: start=0, step=1, limit=4
    $region2: #{tpu_custom_call.1} parent=1 // loop_pre_header
      _
    $region3: #{tpu_custom_call.1} parent=1 // loop_header
      %s20 = sphi 0, %s24
      %p21 = scmp.ge.s32.totalorder %s20, 4
      %s30 = sphi 0, %s32
      %s33 = sphi 0, %s30
      %s34 = sphi 0, %s33
      %s50 = sphi 0, %s34
      %s54 = sphi 0, %s54
      %s56 = sphi 0, %s54
      %s57 = sphi 0, %s56
      %s71 = sphi 0, %s57
      %s75 = sphi 0, %s75
      %s77 = sphi 0, %s75
      %s78 = sphi 0, %s77
      %s92 = sphi 0, %s78
      %s96 = sphi 0, %s96
      %s98 = sphi 0, %s96
      %s99 = sphi 0, %s98
      %s113 = sphi 0, %s99
      %s117 = sphi 0, %s117
      %s119 = sphi 0, %s117
      %s120 = sphi 0, %s119
      %s134 = sphi 0, %s120
      %s138 = sphi 0, %s138
      %s140 = sphi 0, %s138
      %s141 = sphi 0, %s140
      %s155 = sphi 0, %s141
      %s159 = sphi 0, %s159
      %s161 = sphi 0, %s159
      %s162 = sphi 0, %s161
      %s176 = sphi 0, %s162
      %s180 = sphi 0, %s180
      %s182 = sphi 0, %s180
      %s183 = sphi 0, %s182
      %s197 = sphi 0, %s183
      %s201 = sphi 0, %s201
      %s203 = sphi 0, %s201
      %s204 = sphi 0, %s203
      %s218 = sphi 0, %s204
      %s222 = sphi 0, %s222
      %s224 = sphi 0, %s222
      %s225 = sphi 0, %s224
      %s239 = sphi 0, %s225
      %s243 = sphi 0, %s243
      %s245 = sphi 0, %s243
      %s246 = sphi 0, %s245
      %s260 = sphi 0, %s246
      %s266 = sphi 0, %s268
      %s269 = sphi 0, %s266
      %s270 = sphi 0, %s269
      %s286 = sphi 0, %s270
    $region4: #{tpu_custom_call.1} parent=1 // loop_header_branch
      %23 = sbr.rel (%p21) target = $region8
    $region5: #{tpu_custom_call.1} parent=1 // loop_body
      %s25 = ssub.s32 %s20, 1
      %s26 = ssub.s32 %s20, 2
      %s27 = sadd.s32 %s20, 1
      %s28 = ssub.s32 %s20, %s27
      %p29 = scmp.eq.s32.totalorder %s28, 0
      %s31 = sadd.s32 %s30, 1
      %s32 = scalar_select %p29, %s30, %s31
      %p35 = pneg %p29
      %p36 = scmp.eq.s32.totalorder %s20, 1
      %p37 = por %p35, %p36
      %p38 = scmp.ne.s32.totalorder %s30, %s33
      %p39 = scmp.eq.s32.totalorder %s20, 0
      %p40 = por %p38, %p39
      %p41 = scmp.ne.s32.totalorder %s30, %s33
      %p42 = scmp.eq.s32.totalorder %s25, 1
      %p43 = por %p41, %p42
      %p44 = scmp.ne.s32.totalorder %s33, %s34
      %p45 = scmp.eq.s32.totalorder %s25, 0
      %p46 = por %p44, %p45
      %p47 = scmp.ne.s32.totalorder %s33, %s34
      %p48 = scmp.eq.s32.totalorder %s26, 1
      %p49 = por %p47, %p48
      %p51 = scmp.ne.s32.totalorder %s34, %s50
      %p52 = scmp.eq.s32.totalorder %s26, 0
      %p53 = por %p51, %p52
      %s55 = sadd.s32 %s54, 1
      %p58 = scmp.eq.s32.totalorder %s20, 1
      %p59 = scmp.ne.s32.totalorder %s54, %s56
      %p60 = scmp.eq.s32.totalorder %s20, 0
      %p61 = por %p59, %p60
      %p62 = scmp.ne.s32.totalorder %s54, %s56
      %p63 = scmp.eq.s32.totalorder %s25, 1
      %p64 = por %p62, %p63
      %p65 = scmp.ne.s32.totalorder %s56, %s57
      %p66 = scmp.eq.s32.totalorder %s25, 0
      %p67 = por %p65, %p66
      %p68 = scmp.ne.s32.totalorder %s56, %s57
      %p69 = scmp.eq.s32.totalorder %s26, 1
      %p70 = por %p68, %p69
      %p72 = scmp.ne.s32.totalorder %s57, %s71
      %p73 = scmp.eq.s32.totalorder %s26, 0
      %p74 = por %p72, %p73
      %s76 = sadd.s32 %s75, 1
      %p79 = scmp.eq.s32.totalorder %s20, 1
      %p80 = scmp.ne.s32.totalorder %s75, %s77
      %p81 = scmp.eq.s32.totalorder %s20, 0
      %p82 = por %p80, %p81
      %p83 = scmp.ne.s32.totalorder %s75, %s77
      %p84 = scmp.eq.s32.totalorder %s25, 1
      %p85 = por %p83, %p84
      %p86 = scmp.ne.s32.totalorder %s77, %s78
      %p87 = scmp.eq.s32.totalorder %s25, 0
      %p88 = por %p86, %p87
      %p89 = scmp.ne.s32.totalorder %s77, %s78
      %p90 = scmp.eq.s32.totalorder %s26, 1
      %p91 = por %p89, %p90
      %p93 = scmp.ne.s32.totalorder %s78, %s92
      %p94 = scmp.eq.s32.totalorder %s26, 0
      %p95 = por %p93, %p94
      %s97 = sadd.s32 %s96, 1
      %p100 = scmp.eq.s32.totalorder %s20, 1
      %p101 = scmp.ne.s32.totalorder %s96, %s98
      %p102 = scmp.eq.s32.totalorder %s20, 0
      %p103 = por %p101, %p102
      %p104 = scmp.ne.s32.totalorder %s96, %s98
      %p105 = scmp.eq.s32.totalorder %s25, 1
      %p106 = por %p104, %p105
      %p107 = scmp.ne.s32.totalorder %s98, %s99
      %p108 = scmp.eq.s32.totalorder %s25, 0
      %p109 = por %p107, %p108
      %p110 = scmp.ne.s32.totalorder %s98, %s99
      %p111 = scmp.eq.s32.totalorder %s26, 1
      %p112 = por %p110, %p111
      %p114 = scmp.ne.s32.totalorder %s99, %s113
      %p115 = scmp.eq.s32.totalorder %s26, 0
      %p116 = por %p114, %p115
      %s118 = sadd.s32 %s117, 1
      %p121 = scmp.eq.s32.totalorder %s20, 1
      %p122 = scmp.ne.s32.totalorder %s117, %s119
      %p123 = scmp.eq.s32.totalorder %s20, 0
      %p124 = por %p122, %p123
      %p125 = scmp.ne.s32.totalorder %s117, %s119
      %p126 = scmp.eq.s32.totalorder %s25, 1
      %p127 = por %p125, %p126
      %p128 = scmp.ne.s32.totalorder %s119, %s120
      %p129 = scmp.eq.s32.totalorder %s25, 0
      %p130 = por %p128, %p129
      %p131 = scmp.ne.s32.totalorder %s119, %s120
      %p132 = scmp.eq.s32.totalorder %s26, 1
      %p133 = por %p131, %p132
      %p135 = scmp.ne.s32.totalorder %s120, %s134
      %p136 = scmp.eq.s32.totalorder %s26, 0
      %p137 = por %p135, %p136
      %s139 = sadd.s32 %s138, 1
      %p142 = scmp.eq.s32.totalorder %s20, 1
      %p143 = scmp.ne.s32.totalorder %s138, %s140
      %p144 = scmp.eq.s32.totalorder %s20, 0
      %p145 = por %p143, %p144
      %p146 = scmp.ne.s32.totalorder %s138, %s140
      %p147 = scmp.eq.s32.totalorder %s25, 1
      %p148 = por %p146, %p147
      %p149 = scmp.ne.s32.totalorder %s140, %s141
      %p150 = scmp.eq.s32.totalorder %s25, 0
      %p151 = por %p149, %p150
      %p152 = scmp.ne.s32.totalorder %s140, %s141
      %p153 = scmp.eq.s32.totalorder %s26, 1
      %p154 = por %p152, %p153
      %p156 = scmp.ne.s32.totalorder %s141, %s155
      %p157 = scmp.eq.s32.totalorder %s26, 0
      %p158 = por %p156, %p157
      %s160 = sadd.s32 %s159, 1
      %p163 = scmp.eq.s32.totalorder %s20, 1
      %p164 = scmp.ne.s32.totalorder %s159, %s161
      %p165 = scmp.eq.s32.totalorder %s20, 0
      %p166 = por %p164, %p165
      %p167 = scmp.ne.s32.totalorder %s159, %s161
      %p168 = scmp.eq.s32.totalorder %s25, 1
      %p169 = por %p167, %p168
      %p170 = scmp.ne.s32.totalorder %s161, %s162
      %p171 = scmp.eq.s32.totalorder %s25, 0
      %p172 = por %p170, %p171
      %p173 = scmp.ne.s32.totalorder %s161, %s162
      %p174 = scmp.eq.s32.totalorder %s26, 1
      %p175 = por %p173, %p174
      %p177 = scmp.ne.s32.totalorder %s162, %s176
      %p178 = scmp.eq.s32.totalorder %s26, 0
      %p179 = por %p177, %p178
      %s181 = sadd.s32 %s180, 1
      %p184 = scmp.eq.s32.totalorder %s20, 1
      %p185 = scmp.ne.s32.totalorder %s180, %s182
      %p186 = scmp.eq.s32.totalorder %s20, 0
      %p187 = por %p185, %p186
      %p188 = scmp.ne.s32.totalorder %s180, %s182
      %p189 = scmp.eq.s32.totalorder %s25, 1
      %p190 = por %p188, %p189
      %p191 = scmp.ne.s32.totalorder %s182, %s183
      %p192 = scmp.eq.s32.totalorder %s25, 0
      %p193 = por %p191, %p192
      %p194 = scmp.ne.s32.totalorder %s182, %s183
      %p195 = scmp.eq.s32.totalorder %s26, 1
      %p196 = por %p194, %p195
      %p198 = scmp.ne.s32.totalorder %s183, %s197
      %p199 = scmp.eq.s32.totalorder %s26, 0
      %p200 = por %p198, %p199
      %s202 = sadd.s32 %s201, 1
      %p205 = scmp.eq.s32.totalorder %s20, 1
      %p206 = scmp.ne.s32.totalorder %s201, %s203
      %p207 = scmp.eq.s32.totalorder %s20, 0
      %p208 = por %p206, %p207
      %p209 = scmp.ne.s32.totalorder %s201, %s203
      %p210 = scmp.eq.s32.totalorder %s25, 1
      %p211 = por %p209, %p210
      %p212 = scmp.ne.s32.totalorder %s203, %s204
      %p213 = scmp.eq.s32.totalorder %s25, 0
      %p214 = por %p212, %p213
      %p215 = scmp.ne.s32.totalorder %s203, %s204
      %p216 = scmp.eq.s32.totalorder %s26, 1
      %p217 = por %p215, %p216
      %p219 = scmp.ne.s32.totalorder %s204, %s218
      %p220 = scmp.eq.s32.totalorder %s26, 0
      %p221 = por %p219, %p220
      %s223 = sadd.s32 %s222, 1
      %p226 = scmp.eq.s32.totalorder %s20, 1
      %p227 = scmp.ne.s32.totalorder %s222, %s224
      %p228 = scmp.eq.s32.totalorder %s20, 0
      %p229 = por %p227, %p228
      %p230 = scmp.ne.s32.totalorder %s222, %s224
      %p231 = scmp.eq.s32.totalorder %s25, 1
      %p232 = por %p230, %p231
      %p233 = scmp.ne.s32.totalorder %s224, %s225
      %p234 = scmp.eq.s32.totalorder %s25, 0
      %p235 = por %p233, %p234
      %p236 = scmp.ne.s32.totalorder %s224, %s225
      %p237 = scmp.eq.s32.totalorder %s26, 1
      %p238 = por %p236, %p237
      %p240 = scmp.ne.s32.totalorder %s225, %s239
      %p241 = scmp.eq.s32.totalorder %s26, 0
      %p242 = por %p240, %p241
      %s244 = sadd.s32 %s243, 1
      %p247 = scmp.eq.s32.totalorder %s20, 1
      %p248 = scmp.ne.s32.totalorder %s243, %s245
      %p249 = scmp.eq.s32.totalorder %s20, 0
      %p250 = por %p248, %p249
      %p251 = scmp.ne.s32.totalorder %s243, %s245
      %p252 = scmp.eq.s32.totalorder %s25, 1
      %p253 = por %p251, %p252
      %p254 = scmp.ne.s32.totalorder %s245, %s246
      %p255 = scmp.eq.s32.totalorder %s25, 0
      %p256 = por %p254, %p255
      %p257 = scmp.ne.s32.totalorder %s245, %s246
      %p258 = scmp.eq.s32.totalorder %s26, 1
      %p259 = por %p257, %p258
      %p261 = scmp.ne.s32.totalorder %s246, %s260
      %p262 = scmp.eq.s32.totalorder %s26, 0
      %p263 = por %p261, %p262
      %s264 = ssub.s32 %s20, %s27
      %p265 = scmp.eq.s32.totalorder %s264, 0
      %s267 = sadd.s32 %s266, 1
      %s268 = scalar_select %p265, %s266, %s267
      %p271 = pneg %p265
      %p272 = scmp.eq.s32.totalorder %s20, 1
      %p273 = por %p271, %p272
      %p274 = scmp.ne.s32.totalorder %s266, %s269
      %p275 = scmp.eq.s32.totalorder %s20, 0
      %p276 = por %p274, %p275
      %p277 = scmp.ne.s32.totalorder %s266, %s269
      %p278 = scmp.eq.s32.totalorder %s25, 1
      %p279 = por %p277, %p278
      %p280 = scmp.ne.s32.totalorder %s269, %s270
      %p281 = scmp.eq.s32.totalorder %s25, 0
      %p282 = por %p280, %p281
      %p283 = scmp.ne.s32.totalorder %s269, %s270
      %p284 = scmp.eq.s32.totalorder %s26, 1
      %p285 = por %p283, %p284
      %p287 = scmp.ne.s32.totalorder %s270, %s286
      %p288 = scmp.eq.s32.totalorder %s26, 0
      %p289 = por %p287, %p288
      %p290 = scmp.le.s32.totalorder 1, %s20
      %p291 = scmp.lt.s32.totalorder %s20, 3
      %p292 = pnand %p290, %p291
      %p293 = pneg %p292
      // Predicated region
      $region9: #{tpu_custom_call.1} parent=5 // pred_check
        _
      $region10: #{tpu_custom_call.1} parent=5 // pred_check_branch
        %295 = sbr.rel (%p292) target = $region12
      $region11: #{tpu_custom_call.1} parent=5 // pred_region
        %s296 = ssub.s32 %s20, 1
        // Predicated region
        $region13: #{tpu_custom_call.1} parent=11 // pred_check
          %p297 = pneg %p67
        $region14: #{tpu_custom_call.1} parent=11 // pred_check_branch
          %299 = sbr.rel (%p297) target = $region16
        $region15: #{tpu_custom_call.1} parent=11 // pred_region
          _
        $region16: #{tpu_custom_call.1} parent=11 // pred_fallthru
          _
        // Predicated region
        $region17: #{tpu_custom_call.1} parent=11 // pred_check
          %p300 = pneg %p88
        $region18: #{tpu_custom_call.1} parent=11 // pred_check_branch
          %302 = sbr.rel (%p300) target = $region20
        $region19: #{tpu_custom_call.1} parent=11 // pred_region
          _
        $region20: #{tpu_custom_call.1} parent=11 // pred_fallthru
          _
        // Predicated region
        $region21: #{tpu_custom_call.1} parent=11 // pred_check
          %p303 = pneg %p109
        $region22: #{tpu_custom_call.1} parent=11 // pred_check_branch
          %305 = sbr.rel (%p303) target = $region24
        $region23: #{tpu_custom_call.1} parent=11 // pred_region
          _
        $region24: #{tpu_custom_call.1} parent=11 // pred_fallthru
          _
        // Predicated region
        $region25: #{tpu_custom_call.1} parent=11 // pred_check
          %p306 = pneg %p130
        $region26: #{tpu_custom_call.1} parent=11 // pred_check_branch
          %308 = sbr.rel (%p306) target = $region28
        $region27: #{tpu_custom_call.1} parent=11 // pred_region
          _
        $region28: #{tpu_custom_call.1} parent=11 // pred_fallthru
          _
        // Predicated region
        $region29: #{tpu_custom_call.1} parent=11 // pred_check
          %p309 = pneg %p151
        $region30: #{tpu_custom_call.1} parent=11 // pred_check_branch
          %311 = sbr.rel (%p309) target = $region32
        $region31: #{tpu_custom_call.1} parent=11 // pred_region
          _
        $region32: #{tpu_custom_call.1} parent=11 // pred_fallthru
          _
        // Predicated region
        $region33: #{tpu_custom_call.1} parent=11 // pred_check
          %p312 = pneg %p172
        $region34: #{tpu_custom_call.1} parent=11 // pred_check_branch
          %314 = sbr.rel (%p312) target = $region36
        $region35: #{tpu_custom_call.1} parent=11 // pred_region
          _
        $region36: #{tpu_custom_call.1} parent=11 // pred_fallthru
          _
        // Predicated region
        $region37: #{tpu_custom_call.1} parent=11 // pred_check
          %p315 = pneg %p193
        $region38: #{tpu_custom_call.1} parent=11 // pred_check_branch
          %317 = sbr.rel (%p315) target = $region40
        $region39: #{tpu_custom_call.1} parent=11 // pred_region
          _
        $region40: #{tpu_custom_call.1} parent=11 // pred_fallthru
          _
        // Predicated region
        $region41: #{tpu_custom_call.1} parent=11 // pred_check
          %p318 = pneg %p214
        $region42: #{tpu_custom_call.1} parent=11 // pred_check_branch
          %320 = sbr.rel (%p318) target = $region44
        $region43: #{tpu_custom_call.1} parent=11 // pred_region
          _
        $region44: #{tpu_custom_call.1} parent=11 // pred_fallthru
          _
        // Predicated region
        $region45: #{tpu_custom_call.1} parent=11 // pred_check
          %p321 = pneg %p235
        $region46: #{tpu_custom_call.1} parent=11 // pred_check_branch
          %323 = sbr.rel (%p321) target = $region48
        $region47: #{tpu_custom_call.1} parent=11 // pred_region
          _
        $region48: #{tpu_custom_call.1} parent=11 // pred_fallthru
          _
        // Predicated region
        $region49: #{tpu_custom_call.1} parent=11 // pred_check
          %p324 = pneg %p256
        $region50: #{tpu_custom_call.1} parent=11 // pred_check_branch
          %326 = sbr.rel (%p324) target = $region52
        $region51: #{tpu_custom_call.1} parent=11 // pred_region
          _
        $region52: #{tpu_custom_call.1} parent=11 // pred_fallthru
          _
      $region12: #{tpu_custom_call.1} parent=5 // pred_fallthru
        _
      %p327 = scmp.lt.s32.totalorder %s20, 2
      // Predicated region
      $region53: #{tpu_custom_call.1} parent=5 // pred_check
        %p328 = pneg %p327
      $region54: #{tpu_custom_call.1} parent=5 // pred_check_branch
        %330 = sbr.rel (%p328) target = $region56
      $region55: #{tpu_custom_call.1} parent=5 // pred_region
        // Predicated region
        $region57: #{tpu_custom_call.1} parent=55 // pred_check
          %p331 = pneg %p40
        $region58: #{tpu_custom_call.1} parent=55 // pred_check_branch
          %333 = sbr.rel (%p331) target = $region60
        $region59: #{tpu_custom_call.1} parent=55 // pred_region
          %s334 = smul.u32 16, %s20
          %p335 = scmp.lt.s32.totalorder %s334, 31
          %s336 = scalar_select %p335, %s334, 31
          %s337 = smul.addr %s336, 8
          %s338 = scalar_lea.vmem %s0, %s337
          %s339 = smul.u32 16, %s20
        $region60: #{tpu_custom_call.1} parent=55 // pred_fallthru
          _
      $region56: #{tpu_custom_call.1} parent=5 // pred_fallthru
        _
      %p340 = scmp.le.s32.totalorder 1, %s20
      %p341 = scmp.lt.s32.totalorder %s20, 3
      %p342 = pnand %p340, %p341
      %p343 = pneg %p342
      // Predicated region
      $region61: #{tpu_custom_call.1} parent=5 // pred_check
        _
      $region62: #{tpu_custom_call.1} parent=5 // pred_check_branch
        %345 = sbr.rel (%p342) target = $region64
      $region63: #{tpu_custom_call.1} parent=5 // pred_region
        %s346 = ssub.s32 %s20, 1
        %s347 = smul.u32 16, %s25
        %p348 = scmp.lt.s32.totalorder %s347, 31
        %s349 = scalar_select %p348, %s347, 31
        %s350 = smul.addr %s349, 8
        %s351 = scalar_lea.vmem %s0, %s350
        %p352 = pneg %p46
        %p353 = pneg %p43
        %p354 = pneg %p67
        %p355 = pneg %p64
        %p356 = pneg %p88
        %p357 = pneg %p85
        %p358 = pneg %p109
        %p359 = pneg %p106
        %p360 = pneg %p130
        %p361 = pneg %p127
        %p362 = pneg %p151
        %p363 = pneg %p148
        %p364 = pneg %p172
        %p365 = pneg %p169
        %p366 = pneg %p193
        %p367 = pneg %p190
        %p368 = pneg %p214
        %p369 = pneg %p211
        %p370 = pneg %p235
        %p371 = pneg %p232
        %p372 = pneg %p256
        %p373 = pneg %p253
        %p374 = pneg %p282
        %p375 = pneg %p279
        %s376 = sand.u32 %s269, 1
        %s377 = scalar_lea.sflag [#allocation3], %s376
        %s378 = sand.u32 %s269, 1
        %s379 = smul.addr %s378, 16
        %s380 = scalar_lea.vmem [#allocation2], %s379
        %s381 = smul.u32 16, %s25
        %p382 = scmp.lt.s32.totalorder %s381, 31
        %s383 = scalar_select %p382, %s381, 31
        %s384 = smul.addr %s383, 8
        %s385 = scalar_lea.vmem %s0, %s384
        %s386 = smul.u32 16, %s25
        %s387 = smul.u32 2, %s25
        %v388 = vld [vmem:[%s385] sm:$0xff]
        %v389 = vld [vmem:[%s385 + $0x8] sm:$0xff]
        %v390 = vld [vmem:[%s385 + $0x10] sm:$0xff]
        %v391 = vld [vmem:[%s385 + $0x18] sm:$0xff]
        %v392 = vld [vmem:[%s385 + $0x20] sm:$0xff]
        %v393 = vld [vmem:[%s385 + $0x28] sm:$0xff]
        %v394 = vld [vmem:[%s385 + $0x30] sm:$0xff]
        %v395 = vld [vmem:[%s385 + $0x38] sm:$0xff]
        %v396 = vld [vmem:[%s385 + $0x40] sm:$0xff]
        %v397 = vld [vmem:[%s385 + $0x48] sm:$0xff]
        %v398 = vld [vmem:[%s385 + $0x50] sm:$0xff]
        %v399 = vld [vmem:[%s385 + $0x58] sm:$0xff]
        %v400 = vld [vmem:[%s385 + $0x60] sm:$0xff]
        %v401 = vld [vmem:[%s385 + $0x68] sm:$0xff]
        %v402 = vld [vmem:[%s385 + $0x70] sm:$0xff]
        %v403 = vld [vmem:[%s385 + $0x78] sm:$0xff]
        %v420 = vrot.slane %v388, 6
        %v421 = vrot.slane %v389, 6
        %v422 = vrot.slane %v390, 6
        %v423 = vrot.slane %v391, 6
        %v424 = vrot.slane %v392, 6
        %v425 = vrot.slane %v393, 6
        %v426 = vrot.slane %v394, 6
        %v427 = vrot.slane %v395, 6
        %v428 = vrot.slane %v396, 6
        %v429 = vrot.slane %v397, 6
        %v430 = vrot.slane %v398, 6
        %v431 = vrot.slane %v399, 6
        %v432 = vrot.slane %v400, 6
        %v433 = vrot.slane %v401, 6
        %v434 = vrot.slane %v402, 6
        %v435 = vrot.slane %v403, 6
        %vm452 = vcmask 1041408
        %v453 = vsel %vm452, 0.0, %v420
        %v454 = vsel %vm452, 0.0, %v421
        %v455 = vsel %vm452, 0.0, %v422
        %v456 = vsel %vm452, 0.0, %v423
        %v457 = vsel %vm452, 0.0, %v424
        %v458 = vsel %vm452, 0.0, %v425
        %v459 = vsel %vm452, 0.0, %v426
        %v460 = vsel %vm452, 0.0, %v427
        %v461 = vsel %vm452, 0.0, %v428
        %v462 = vsel %vm452, 0.0, %v429
        %v463 = vsel %vm452, 0.0, %v430
        %v464 = vsel %vm452, 0.0, %v431
        %v465 = vsel %vm452, 0.0, %v432
        %v466 = vsel %vm452, 0.0, %v433
        %v467 = vsel %vm452, 0.0, %v434
        %v468 = vsel %vm452, 0.0, %v435
        %vm485 = vcmask 1046528
        %v486 = vrot.slane %v453, 1
        %v487 = vrot.slane %v420, 1
        %v488 = vsel %vm485, %v486, %v487
        %v489 = vrot.slane %v454, 1
        %v490 = vrot.slane %v421, 1
        %v491 = vsel %vm485, %v489, %v490
        %v492 = vrot.slane %v455, 1
        %v493 = vrot.slane %v422, 1
        %v494 = vsel %vm485, %v492, %v493
        %v495 = vrot.slane %v456, 1
        %v496 = vrot.slane %v423, 1
        %v497 = vsel %vm485, %v495, %v496
        %v498 = vrot.slane %v457, 1
        %v499 = vrot.slane %v424, 1
        %v500 = vsel %vm485, %v498, %v499
        %v501 = vrot.slane %v458, 1
        %v502 = vrot.slane %v425, 1
        %v503 = vsel %vm485, %v501, %v502
        %v504 = vrot.slane %v459, 1
        %v505 = vrot.slane %v426, 1
        %v506 = vsel %vm485, %v504, %v505
        %v507 = vrot.slane %v460, 1
        %v508 = vrot.slane %v427, 1
        %v509 = vsel %vm485, %v507, %v508
        %v510 = vrot.slane %v461, 1
        %v511 = vrot.slane %v428, 1
        %v512 = vsel %vm485, %v510, %v511
        %v513 = vrot.slane %v462, 1
        %v514 = vrot.slane %v429, 1
        %v515 = vsel %vm485, %v513, %v514
        %v516 = vrot.slane %v463, 1
        %v517 = vrot.slane %v430, 1
        %v518 = vsel %vm485, %v516, %v517
        %v519 = vrot.slane %v464, 1
        %v520 = vrot.slane %v431, 1
        %v521 = vsel %vm485, %v519, %v520
        %v522 = vrot.slane %v465, 1
        %v523 = vrot.slane %v432, 1
        %v524 = vsel %vm485, %v522, %v523
        %v525 = vrot.slane %v466, 1
        %v526 = vrot.slane %v433, 1
        %v527 = vsel %vm485, %v525, %v526
        %v528 = vrot.slane %v467, 1
        %v529 = vrot.slane %v434, 1
        %v530 = vsel %vm485, %v528, %v529
        %v531 = vrot.slane %v468, 1
        %v532 = vrot.slane %v435, 1
        %v533 = vsel %vm485, %v531, %v532
        %534 = vrot.lane.b32.xlu0 %v488, 32
        %v535 = vpop.permute.xlu0 %534
        %536 = vrot.lane.b32.xlu0 %v491, 32
        %v537 = vpop.permute.xlu0 %536
        %538 = vrot.lane.b32.xlu0 %v494, 32
        %v539 = vpop.permute.xlu0 %538
        %540 = vrot.lane.b32.xlu0 %v497, 32
        %v541 = vpop.permute.xlu0 %540
        %542 = vrot.lane.b32.xlu0 %v500, 32
        %v543 = vpop.permute.xlu0 %542
        %544 = vrot.lane.b32.xlu0 %v503, 32
        %v545 = vpop.permute.xlu0 %544
        %546 = vrot.lane.b32.xlu0 %v506, 32
        %v547 = vpop.permute.xlu0 %546
        %548 = vrot.lane.b32.xlu0 %v509, 32
        %v549 = vpop.permute.xlu0 %548
        %550 = vrot.lane.b32.xlu0 %v512, 32
        %v551 = vpop.permute.xlu0 %550
        %552 = vrot.lane.b32.xlu0 %v515, 32
        %v553 = vpop.permute.xlu0 %552
        %554 = vrot.lane.b32.xlu0 %v518, 32
        %v555 = vpop.permute.xlu0 %554
        %556 = vrot.lane.b32.xlu0 %v521, 32
        %v557 = vpop.permute.xlu0 %556
        %558 = vrot.lane.b32.xlu0 %v524, 32
        %v559 = vpop.permute.xlu0 %558
        %560 = vrot.lane.b32.xlu0 %v527, 32
        %v561 = vpop.permute.xlu0 %560
        %562 = vrot.lane.b32.xlu0 %v530, 32
        %v563 = vpop.permute.xlu0 %562
        %564 = vrot.lane.b32.xlu0 %v533, 32
        %v565 = vpop.permute.xlu0 %564
        %vm582 = vcmask 1045504
        %v583 = vrot.slane %v453, 2
        %v584 = vrot.slane %v420, 2
        %v585 = vsel %vm582, %v583, %v584
        %v586 = vrot.slane %v454, 2
        %v587 = vrot.slane %v421, 2
        %v588 = vsel %vm582, %v586, %v587
        %v589 = vrot.slane %v455, 2
        %v590 = vrot.slane %v422, 2
        %v591 = vsel %vm582, %v589, %v590
        %v592 = vrot.slane %v456, 2
        %v593 = vrot.slane %v423, 2
        %v594 = vsel %vm582, %v592, %v593
        %v595 = vrot.slane %v457, 2
        %v596 = vrot.slane %v424, 2
        %v597 = vsel %vm582, %v595, %v596
        %v598 = vrot.slane %v458, 2
        %v599 = vrot.slane %v425, 2
        %v600 = vsel %vm582, %v598, %v599
        %v601 = vrot.slane %v459, 2
        %v602 = vrot.slane %v426, 2
        %v603 = vsel %vm582, %v601, %v602
        %v604 = vrot.slane %v460, 2
        %v605 = vrot.slane %v427, 2
        %v606 = vsel %vm582, %v604, %v605
        %v607 = vrot.slane %v461, 2
        %v608 = vrot.slane %v428, 2
        %v609 = vsel %vm582, %v607, %v608
        %v610 = vrot.slane %v462, 2
        %v611 = vrot.slane %v429, 2
        %v612 = vsel %vm582, %v610, %v611
        %v613 = vrot.slane %v463, 2
        %v614 = vrot.slane %v430, 2
        %v615 = vsel %vm582, %v613, %v614
        %v616 = vrot.slane %v464, 2
        %v617 = vrot.slane %v431, 2
        %v618 = vsel %vm582, %v616, %v617
        %v619 = vrot.slane %v465, 2
        %v620 = vrot.slane %v432, 2
        %v621 = vsel %vm582, %v619, %v620
        %v622 = vrot.slane %v466, 2
        %v623 = vrot.slane %v433, 2
        %v624 = vsel %vm582, %v622, %v623
        %v625 = vrot.slane %v467, 2
        %v626 = vrot.slane %v434, 2
        %v627 = vsel %vm582, %v625, %v626
        %v628 = vrot.slane %v468, 2
        %v629 = vrot.slane %v435, 2
        %v630 = vsel %vm582, %v628, %v629
        %631 = vrot.lane.b32.xlu0 %v585, 64
        %v632 = vpop.permute.xlu0 %631
        %633 = vrot.lane.b32.xlu0 %v588, 64
        %v634 = vpop.permute.xlu0 %633
        %635 = vrot.lane.b32.xlu0 %v591, 64
        %v636 = vpop.permute.xlu0 %635
        %637 = vrot.lane.b32.xlu0 %v594, 64
        %v638 = vpop.permute.xlu0 %637
        %639 = vrot.lane.b32.xlu0 %v597, 64
        %v640 = vpop.permute.xlu0 %639
        %641 = vrot.lane.b32.xlu0 %v600, 64
        %v642 = vpop.permute.xlu0 %641
        %643 = vrot.lane.b32.xlu0 %v603, 64
        %v644 = vpop.permute.xlu0 %643
        %645 = vrot.lane.b32.xlu0 %v606, 64
        %v646 = vpop.permute.xlu0 %645
        %647 = vrot.lane.b32.xlu0 %v609, 64
        %v648 = vpop.permute.xlu0 %647
        %649 = vrot.lane.b32.xlu0 %v612, 64
        %v650 = vpop.permute.xlu0 %649
        %651 = vrot.lane.b32.xlu0 %v615, 64
        %v652 = vpop.permute.xlu0 %651
        %653 = vrot.lane.b32.xlu0 %v618, 64
        %v654 = vpop.permute.xlu0 %653
        %655 = vrot.lane.b32.xlu0 %v621, 64
        %v656 = vpop.permute.xlu0 %655
        %657 = vrot.lane.b32.xlu0 %v624, 64
        %v658 = vpop.permute.xlu0 %657
        %659 = vrot.lane.b32.xlu0 %v627, 64
        %v660 = vpop.permute.xlu0 %659
        %661 = vrot.lane.b32.xlu0 %v630, 64
        %v662 = vpop.permute.xlu0 %661
        %vm679 = vcmask 261120
        %v680 = vsel %vm679, %v453, %v535
        %v681 = vsel %vm679, %v454, %v537
        %v682 = vsel %vm679, %v455, %v539
        %v683 = vsel %vm679, %v456, %v541
        %v684 = vsel %vm679, %v457, %v543
        %v685 = vsel %vm679, %v458, %v545
        %v686 = vsel %vm679, %v459, %v547
        %v687 = vsel %vm679, %v460, %v549
        %v688 = vsel %vm679, %v461, %v551
        %v689 = vsel %vm679, %v462, %v553
        %v690 = vsel %vm679, %v463, %v555
        %v691 = vsel %vm679, %v464, %v557
        %v692 = vsel %vm679, %v465, %v559
        %v693 = vsel %vm679, %v466, %v561
        %v694 = vsel %vm679, %v467, %v563
        %v695 = vsel %vm679, %v468, %v565
        %vm696 = vcmask 523264
        %v697 = vsel %vm696, %v680, %v632
        %v698 = vsel %vm696, %v681, %v634
        %v699 = vsel %vm696, %v682, %v636
        %v700 = vsel %vm696, %v683, %v638
        %v701 = vsel %vm696, %v684, %v640
        %v702 = vsel %vm696, %v685, %v642
        %v703 = vsel %vm696, %v686, %v644
        %v704 = vsel %vm696, %v687, %v646
        %v705 = vsel %vm696, %v688, %v648
        %v706 = vsel %vm696, %v689, %v650
        %v707 = vsel %vm696, %v690, %v652
        %v708 = vsel %vm696, %v691, %v654
        %v709 = vsel %vm696, %v692, %v656
        %v710 = vsel %vm696, %v693, %v658
        %v711 = vsel %vm696, %v694, %v660
        %v712 = vsel %vm696, %v695, %v662
        %v713 = vld [vmem:[%s1] sm:$0xff]
        %v714 = vld [vmem:[%s1 + $0x8] sm:$0xff]
        %v715 = vld [vmem:[%s1 + $0x10] sm:$0xff]
        %v716 = vld [vmem:[%s1 + $0x18] sm:$0xff]
        %v717 = vld [vmem:[%s1 + $0x20] sm:$0xff]
        %v718 = vld [vmem:[%s1 + $0x28] sm:$0xff]
        %v719 = vld [vmem:[%s1 + $0x30] sm:$0xff]
        %v720 = vld [vmem:[%s1 + $0x38] sm:$0xff]
        %v721 = vld [vmem:[%s1 + $0x40] sm:$0xff]
        %v722 = vld [vmem:[%s1 + $0x48] sm:$0xff]
        %v723 = vld [vmem:[%s1 + $0x50] sm:$0xff]
        %v724 = vld [vmem:[%s1 + $0x58] sm:$0xff]
        %v725 = vld [vmem:[%s2] sm:$0x1]
        %v727 = vlaneseq
        %v728 = vshrl.u32 %v727, 7
        %v729 = vsub.s32 0, %v728
        %v730 = vrot.slane %v725, %v729
        %vm732 = vcmask 785408
        %v734 = vsel %vm732, %v697, 0
        %v737 = vsel %vm732, %v698, 0
        %v740 = vsel %vm732, %v699, 0
        %v743 = vsel %vm732, %v700, 0
        %v746 = vsel %vm732, %v701, 0
        %v749 = vsel %vm732, %v702, 0
        %v752 = vsel %vm732, %v703, 0
        %v755 = vsel %vm732, %v704, 0
        %v758 = vsel %vm732, %v705, 0
        %v761 = vsel %vm732, %v706, 0
        %v764 = vsel %vm732, %v707, 0
        %v767 = vsel %vm732, %v708, 0
        %v770 = vsel %vm732, %v709, 0
        %v773 = vsel %vm732, %v710, 0
        %v776 = vsel %vm732, %v711, 0
        %v779 = vsel %vm732, %v712, 0
        %781 = vmatprep.subr.mxu0 0.0
        %782 = vmatpush1.msra.mxu0 %v713
        %783 = vmatprep.subr.mxu0 0.0
        %784 = vmatpush1.msra.mxu0 %v714
        %785 = vmatprep.subr.mxu0 0.0
        %786 = vmatpush1.msra.mxu0 %v715
        %787 = vmatprep.subr.mxu0 0.0
        %788 = vmatpush1.msra.mxu0 %v716
        %789 = vmatprep.subr.mxu0 0.0
        %790 = vmatpush1.msra.mxu0 %v717
        %791 = vmatprep.subr.mxu0 0.0
        %792 = vmatpush1.msra.mxu0 %v718
        %793 = vmatprep.subr.mxu0 0.0
        %794 = vmatpush1.msra.mxu0 %v719
        %795 = vmatprep.subr.mxu0 0.0
        %796 = vmatpush1.msra.mxu0 %v720
        %797 = vmatprep.subr.mxu0 0.0
        %798 = vmatpush1.msra.mxu0 %v721
        %799 = vmatprep.subr.mxu0 0.0
        %800 = vmatpush1.msra.mxu0 %v722
        %801 = vmatprep.subr.mxu0 0.0
        %802 = vmatpush1.msra.mxu0 %v723
        %803 = vmatprep.subr.mxu0 0.0
        %804 = vmatpush1.msra.mxu0 %v724
        %805 = vmatprep.subr.mxu0 0.0
        %806 = vmatpush1.msra.mxu0 0.0
        %807 = vmatprep.subr.mxu0 0.0
        %808 = vmatpush1.msra.mxu0 0.0
        %809 = vmatprep.subr.mxu0 0.0
        %810 = vmatpush1.msra.mxu0 0.0
        %811 = vmatprep.subr.mxu0 0.0
        %812 = vmatpush1.msra.mxu0 0.0
        %813 = vmatprep.subr.mxu0 0.0
        %814 = vmatpush1.msra.mxu0 0.0
        %815 = vmatprep.subr.mxu0 0.0
        %816 = vmatpush1.msra.mxu0 0.0
        %817 = vmatprep.subr.mxu0 0.0
        %818 = vmatpush1.msra.mxu0 0.0
        %819 = vmatprep.subr.mxu0 0.0
        %820 = vmatpush1.msra.mxu0 0.0
        %821 = vmatprep.subr.mxu0 0.0
        %822 = vmatpush1.msra.mxu0 0.0
        %823 = vmatprep.subr.mxu0 0.0
        %824 = vmatpush1.msra.mxu0 0.0
        %825 = vmatprep.subr.mxu0 0.0
        %826 = vmatpush1.msra.mxu0 0.0
        %827 = vmatprep.subr.mxu0 0.0
        %828 = vmatpush1.msra.mxu0 0.0
        %829 = vmatprep.subr.mxu0 0.0
        %830 = vmatpush1.msra.mxu0 0.0
        %831 = vmatprep.subr.mxu0 0.0
        %832 = vmatpush1.msra.mxu0 0.0
        %833 = vmatprep.subr.mxu0 0.0
        %834 = vmatpush1.msra.mxu0 0.0
        %835 = vmatprep.subr.mxu0 0.0
        %836 = vmatpush1.msra.mxu0 0.0
        %837 = vmatprep.subr.mxu0 0.0
        %838 = vmatpush1.msra.mxu0 0.0
        %839 = vmatprep.subr.mxu0 0.0
        %840 = vmatpush1.msra.mxu0 0.0
        %841 = vmatprep.subr.mxu0 0.0
        %842 = vmatpush1.msra.mxu0 0.0
        %843 = vmatprep.subr.mxu0 0.0
        %844 = vmatpush1.msra.mxu0 0.0
        %845 = vmatprep.mubr.f32.mxu0 0.0
        %846 = vmatmul.mubr.f32.gmra.mrb[0].mxu0 %v734
        %v847 = vpop.f32.mrb[0].mxu0
        %v848 = vadd.f32 %v730, %v847
        %v849 = vpop.f32.mrb[0].mxu0
        %850 = vmatprep.mubr.f32.mxu0 0.0
        %851 = vmatmul.mubr.f32.gmra.mrb[0].mxu0 %v737
        %v852 = vpop.f32.mrb[0].mxu0
        %v853 = vadd.f32 %v730, %v852
        %v854 = vpop.f32.mrb[0].mxu0
        %855 = vmatprep.mubr.f32.mxu0 0.0
        %856 = vmatmul.mubr.f32.gmra.mrb[0].mxu0 %v740
        %v857 = vpop.f32.mrb[0].mxu0
        %v858 = vadd.f32 %v730, %v857
        %v859 = vpop.f32.mrb[0].mxu0
        %860 = vmatprep.mubr.f32.mxu0 0.0
        %861 = vmatmul.mubr.f32.gmra.mrb[0].mxu0 %v743
        %v862 = vpop.f32.mrb[0].mxu0
        %v863 = vadd.f32 %v730, %v862
        %v864 = vpop.f32.mrb[0].mxu0
        %865 = vmatprep.mubr.f32.mxu0 0.0
        %866 = vmatmul.mubr.f32.gmra.mrb[0].mxu0 %v746
        %v867 = vpop.f32.mrb[0].mxu0
        %v868 = vadd.f32 %v730, %v867
        %v869 = vpop.f32.mrb[0].mxu0
        %870 = vmatprep.mubr.f32.mxu0 0.0
        %871 = vmatmul.mubr.f32.gmra.mrb[0].mxu0 %v749
        %v872 = vpop.f32.mrb[0].mxu0
        %v873 = vadd.f32 %v730, %v872
        %v874 = vpop.f32.mrb[0].mxu0
        %875 = vmatprep.mubr.f32.mxu0 0.0
        %876 = vmatmul.mubr.f32.gmra.mrb[0].mxu0 %v752
        %v877 = vpop.f32.mrb[0].mxu0
        %v878 = vadd.f32 %v730, %v877
        %v879 = vpop.f32.mrb[0].mxu0
        %880 = vmatprep.mubr.f32.mxu0 0.0
        %881 = vmatmul.mubr.f32.gmra.mrb[0].mxu0 %v755
        %v882 = vpop.f32.mrb[0].mxu0
        %v883 = vadd.f32 %v730, %v882
        %v884 = vpop.f32.mrb[0].mxu0
        %885 = vmatprep.mubr.f32.mxu0 0.0
        %886 = vmatmul.mubr.f32.gmra.mrb[0].mxu0 %v758
        %v887 = vpop.f32.mrb[0].mxu0
        %v888 = vadd.f32 %v730, %v887
        %v889 = vpop.f32.mrb[0].mxu0
        %890 = vmatprep.mubr.f32.mxu0 0.0
        %891 = vmatmul.mubr.f32.gmra.mrb[0].mxu0 %v761
        %v892 = vpop.f32.mrb[0].mxu0
        %v893 = vadd.f32 %v730, %v892
        %v894 = vpop.f32.mrb[0].mxu0
        %895 = vmatprep.mubr.f32.mxu0 0.0
        %896 = vmatmul.mubr.f32.gmra.mrb[0].mxu0 %v764
        %v897 = vpop.f32.mrb[0].mxu0
        %v898 = vadd.f32 %v730, %v897
        %v899 = vpop.f32.mrb[0].mxu0
        %900 = vmatprep.mubr.f32.mxu0 0.0
        %901 = vmatmul.mubr.f32.gmra.mrb[0].mxu0 %v767
        %v902 = vpop.f32.mrb[0].mxu0
        %v903 = vadd.f32 %v730, %v902
        %v904 = vpop.f32.mrb[0].mxu0
        %905 = vmatprep.mubr.f32.mxu0 0.0
        %906 = vmatmul.mubr.f32.gmra.mrb[0].mxu0 %v770
        %v907 = vpop.f32.mrb[0].mxu0
        %v908 = vadd.f32 %v730, %v907
        %v909 = vpop.f32.mrb[0].mxu0
        %910 = vmatprep.mubr.f32.mxu0 0.0
        %911 = vmatmul.mubr.f32.gmra.mrb[0].mxu0 %v773
        %v912 = vpop.f32.mrb[0].mxu0
        %v913 = vadd.f32 %v730, %v912
        %v914 = vpop.f32.mrb[0].mxu0
        %915 = vmatprep.mubr.f32.mxu0 0.0
        %916 = vmatmul.mubr.f32.gmra.mrb[0].mxu0 %v776
        %v917 = vpop.f32.mrb[0].mxu0
        %v918 = vadd.f32 %v730, %v917
        %v919 = vpop.f32.mrb[0].mxu0
        %920 = vmatprep.mubr.f32.mxu0 0.0
        %921 = vmatmul.mubr.f32.gmra.mrb[0].mxu0 %v779
        %v922 = vpop.f32.mrb[0].mxu0
        %v923 = vadd.f32 %v730, %v922
        %v924 = vpop.f32.mrb[0].mxu0
        %925 = vdwg.mxu0
        %v926 = vmax.f32 %v848, 0.0
        %v927 = vmax.f32 %v853, 0.0
        %v928 = vmax.f32 %v858, 0.0
        %v929 = vmax.f32 %v863, 0.0
        %v930 = vmax.f32 %v868, 0.0
        %v931 = vmax.f32 %v873, 0.0
        %v932 = vmax.f32 %v878, 0.0
        %v933 = vmax.f32 %v883, 0.0
        %v934 = vmax.f32 %v888, 0.0
        %v935 = vmax.f32 %v893, 0.0
        %v936 = vmax.f32 %v898, 0.0
        %v937 = vmax.f32 %v903, 0.0
        %v938 = vmax.f32 %v908, 0.0
        %v939 = vmax.f32 %v913, 0.0
        %v940 = vmax.f32 %v918, 0.0
        %v941 = vmax.f32 %v923, 0.0
        %v958 = vrot.slane %v926, 6
        %v959 = vrot.slane %v927, 6
        %v960 = vrot.slane %v928, 6
        %v961 = vrot.slane %v929, 6
        %v962 = vrot.slane %v930, 6
        %v963 = vrot.slane %v931, 6
        %v964 = vrot.slane %v932, 6
        %v965 = vrot.slane %v933, 6
        %v966 = vrot.slane %v934, 6
        %v967 = vrot.slane %v935, 6
        %v968 = vrot.slane %v936, 6
        %v969 = vrot.slane %v937, 6
        %v970 = vrot.slane %v938, 6
        %v971 = vrot.slane %v939, 6
        %v972 = vrot.slane %v940, 6
        %v973 = vrot.slane %v941, 6
        %v990 = vsel %vm452, 0.0, %v958
        %v991 = vsel %vm452, 0.0, %v959
        %v992 = vsel %vm452, 0.0, %v960
        %v993 = vsel %vm452, 0.0, %v961
        %v994 = vsel %vm452, 0.0, %v962
        %v995 = vsel %vm452, 0.0, %v963
        %v996 = vsel %vm452, 0.0, %v964
        %v997 = vsel %vm452, 0.0, %v965
        %v998 = vsel %vm452, 0.0, %v966
        %v999 = vsel %vm452, 0.0, %v967
        %v1000 = vsel %vm452, 0.0, %v968
        %v1001 = vsel %vm452, 0.0, %v969
        %v1002 = vsel %vm452, 0.0, %v970
        %v1003 = vsel %vm452, 0.0, %v971
        %v1004 = vsel %vm452, 0.0, %v972
        %v1005 = vsel %vm452, 0.0, %v973
        %v1022 = vrot.slane %v990, 1
        %v1023 = vrot.slane %v958, 1
        %v1024 = vsel %vm485, %v1022, %v1023
        %v1025 = vrot.slane %v991, 1
        %v1026 = vrot.slane %v959, 1
        %v1027 = vsel %vm485, %v1025, %v1026
        %v1028 = vrot.slane %v992, 1
        %v1029 = vrot.slane %v960, 1
        %v1030 = vsel %vm485, %v1028, %v1029
        %v1031 = vrot.slane %v993, 1
        %v1032 = vrot.slane %v961, 1
        %v1033 = vsel %vm485, %v1031, %v1032
        %v1034 = vrot.slane %v994, 1
        %v1035 = vrot.slane %v962, 1
        %v1036 = vsel %vm485, %v1034, %v1035
        %v1037 = vrot.slane %v995, 1
        %v1038 = vrot.slane %v963, 1
        %v1039 = vsel %vm485, %v1037, %v1038
        %v1040 = vrot.slane %v996, 1
        %v1041 = vrot.slane %v964, 1
        %v1042 = vsel %vm485, %v1040, %v1041
        %v1043 = vrot.slane %v997, 1
        %v1044 = vrot.slane %v965, 1
        %v1045 = vsel %vm485, %v1043, %v1044
        %v1046 = vrot.slane %v998, 1
        %v1047 = vrot.slane %v966, 1
        %v1048 = vsel %vm485, %v1046, %v1047
        %v1049 = vrot.slane %v999, 1
        %v1050 = vrot.slane %v967, 1
        %v1051 = vsel %vm485, %v1049, %v1050
        %v1052 = vrot.slane %v1000, 1
        %v1053 = vrot.slane %v968, 1
        %v1054 = vsel %vm485, %v1052, %v1053
        %v1055 = vrot.slane %v1001, 1
        %v1056 = vrot.slane %v969, 1
        %v1057 = vsel %vm485, %v1055, %v1056
        %v1058 = vrot.slane %v1002, 1
        %v1059 = vrot.slane %v970, 1
        %v1060 = vsel %vm485, %v1058, %v1059
        %v1061 = vrot.slane %v1003, 1
        %v1062 = vrot.slane %v971, 1
        %v1063 = vsel %vm485, %v1061, %v1062
        %v1064 = vrot.slane %v1004, 1
        %v1065 = vrot.slane %v972, 1
        %v1066 = vsel %vm485, %v1064, %v1065
        %v1067 = vrot.slane %v1005, 1
        %v1068 = vrot.slane %v973, 1
        %v1069 = vsel %vm485, %v1067, %v1068
        %1070 = vrot.lane.b32.xlu0 %v1024, 32
        %v1071 = vpop.permute.xlu0 %1070
        %1072 = vrot.lane.b32.xlu0 %v1027, 32
        %v1073 = vpop.permute.xlu0 %1072
        %1074 = vrot.lane.b32.xlu0 %v1030, 32
        %v1075 = vpop.permute.xlu0 %1074
        %1076 = vrot.lane.b32.xlu0 %v1033, 32
        %v1077 = vpop.permute.xlu0 %1076
        %1078 = vrot.lane.b32.xlu0 %v1036, 32
        %v1079 = vpop.permute.xlu0 %1078
        %1080 = vrot.lane.b32.xlu0 %v1039, 32
        %v1081 = vpop.permute.xlu0 %1080
        %1082 = vrot.lane.b32.xlu0 %v1042, 32
        %v1083 = vpop.permute.xlu0 %1082
        %1084 = vrot.lane.b32.xlu0 %v1045, 32
        %v1085 = vpop.permute.xlu0 %1084
        %1086 = vrot.lane.b32.xlu0 %v1048, 32
        %v1087 = vpop.permute.xlu0 %1086
        %1088 = vrot.lane.b32.xlu0 %v1051, 32
        %v1089 = vpop.permute.xlu0 %1088
        %1090 = vrot.lane.b32.xlu0 %v1054, 32
        %v1091 = vpop.permute.xlu0 %1090
        %1092 = vrot.lane.b32.xlu0 %v1057, 32
        %v1093 = vpop.permute.xlu0 %1092
        %1094 = vrot.lane.b32.xlu0 %v1060, 32
        %v1095 = vpop.permute.xlu0 %1094
        %1096 = vrot.lane.b32.xlu0 %v1063, 32
        %v1097 = vpop.permute.xlu0 %1096
        %1098 = vrot.lane.b32.xlu0 %v1066, 32
        %v1099 = vpop.permute.xlu0 %1098
        %1100 = vrot.lane.b32.xlu0 %v1069, 32
        %v1101 = vpop.permute.xlu0 %1100
        %v1118 = vrot.slane %v990, 2
        %v1119 = vrot.slane %v958, 2
        %v1120 = vsel %vm582, %v1118, %v1119
        %v1121 = vrot.slane %v991, 2
        %v1122 = vrot.slane %v959, 2
        %v1123 = vsel %vm582, %v1121, %v1122
        %v1124 = vrot.slane %v992, 2
        %v1125 = vrot.slane %v960, 2
        %v1126 = vsel %vm582, %v1124, %v1125
        %v1127 = vrot.slane %v993, 2
        %v1128 = vrot.slane %v961, 2
        %v1129 = vsel %vm582, %v1127, %v1128
        %v1130 = vrot.slane %v994, 2
        %v1131 = vrot.slane %v962, 2
        %v1132 = vsel %vm582, %v1130, %v1131
        %v1133 = vrot.slane %v995, 2
        %v1134 = vrot.slane %v963, 2
        %v1135 = vsel %vm582, %v1133, %v1134
        %v1136 = vrot.slane %v996, 2
        %v1137 = vrot.slane %v964, 2
        %v1138 = vsel %vm582, %v1136, %v1137
        %v1139 = vrot.slane %v997, 2
        %v1140 = vrot.slane %v965, 2
        %v1141 = vsel %vm582, %v1139, %v1140
        %v1142 = vrot.slane %v998, 2
        %v1143 = vrot.slane %v966, 2
        %v1144 = vsel %vm582, %v1142, %v1143
        %v1145 = vrot.slane %v999, 2
        %v1146 = vrot.slane %v967, 2
        %v1147 = vsel %vm582, %v1145, %v1146
        %v1148 = vrot.slane %v1000, 2
        %v1149 = vrot.slane %v968, 2
        %v1150 = vsel %vm582, %v1148, %v1149
        %v1151 = vrot.slane %v1001, 2
        %v1152 = vrot.slane %v969, 2
        %v1153 = vsel %vm582, %v1151, %v1152
        %v1154 = vrot.slane %v1002, 2
        %v1155 = vrot.slane %v970, 2
        %v1156 = vsel %vm582, %v1154, %v1155
        %v1157 = vrot.slane %v1003, 2
        %v1158 = vrot.slane %v971, 2
        %v1159 = vsel %vm582, %v1157, %v1158
        %v1160 = vrot.slane %v1004, 2
        %v1161 = vrot.slane %v972, 2
        %v1162 = vsel %vm582, %v1160, %v1161
        %v1163 = vrot.slane %v1005, 2
        %v1164 = vrot.slane %v973, 2
        %v1165 = vsel %vm582, %v1163, %v1164
        %1166 = vrot.lane.b32.xlu0 %v1120, 64
        %v1167 = vpop.permute.xlu0 %1166
        %1168 = vrot.lane.b32.xlu0 %v1123, 64
        %v1169 = vpop.permute.xlu0 %1168
        %1170 = vrot.lane.b32.xlu0 %v1126, 64
        %v1171 = vpop.permute.xlu0 %1170
        %1172 = vrot.lane.b32.xlu0 %v1129, 64
        %v1173 = vpop.permute.xlu0 %1172
        %1174 = vrot.lane.b32.xlu0 %v1132, 64
        %v1175 = vpop.permute.xlu0 %1174
        %1176 = vrot.lane.b32.xlu0 %v1135, 64
        %v1177 = vpop.permute.xlu0 %1176
        %1178 = vrot.lane.b32.xlu0 %v1138, 64
        %v1179 = vpop.permute.xlu0 %1178
        %1180 = vrot.lane.b32.xlu0 %v1141, 64
        %v1181 = vpop.permute.xlu0 %1180
        %1182 = vrot.lane.b32.xlu0 %v1144, 64
        %v1183 = vpop.permute.xlu0 %1182
        %1184 = vrot.lane.b32.xlu0 %v1147, 64
        %v1185 = vpop.permute.xlu0 %1184
        %1186 = vrot.lane.b32.xlu0 %v1150, 64
        %v1187 = vpop.permute.xlu0 %1186
        %1188 = vrot.lane.b32.xlu0 %v1153, 64
        %v1189 = vpop.permute.xlu0 %1188
        %1190 = vrot.lane.b32.xlu0 %v1156, 64
        %v1191 = vpop.permute.xlu0 %1190
        %1192 = vrot.lane.b32.xlu0 %v1159, 64
        %v1193 = vpop.permute.xlu0 %1192
        %1194 = vrot.lane.b32.xlu0 %v1162, 64
        %v1195 = vpop.permute.xlu0 %1194
        %1196 = vrot.lane.b32.xlu0 %v1165, 64
        %v1197 = vpop.permute.xlu0 %1196
        %v1214 = vsel %vm679, %v990, %v1071
        %v1215 = vsel %vm679, %v991, %v1073
        %v1216 = vsel %vm679, %v992, %v1075
        %v1217 = vsel %vm679, %v993, %v1077
        %v1218 = vsel %vm679, %v994, %v1079
        %v1219 = vsel %vm679, %v995, %v1081
        %v1220 = vsel %vm679, %v996, %v1083
        %v1221 = vsel %vm679, %v997, %v1085
        %v1222 = vsel %vm679, %v998, %v1087
        %v1223 = vsel %vm679, %v999, %v1089
        %v1224 = vsel %vm679, %v1000, %v1091
        %v1225 = vsel %vm679, %v1001, %v1093
        %v1226 = vsel %vm679, %v1002, %v1095
        %v1227 = vsel %vm679, %v1003, %v1097
        %v1228 = vsel %vm679, %v1004, %v1099
        %v1229 = vsel %vm679, %v1005, %v1101
        %v1230 = vsel %vm696, %v1214, %v1167
        %v1231 = vsel %vm696, %v1215, %v1169
        %v1232 = vsel %vm696, %v1216, %v1171
        %v1233 = vsel %vm696, %v1217, %v1173
        %v1234 = vsel %vm696, %v1218, %v1175
        %v1235 = vsel %vm696, %v1219, %v1177
        %v1236 = vsel %vm696, %v1220, %v1179
        %v1237 = vsel %vm696, %v1221, %v1181
        %v1238 = vsel %vm696, %v1222, %v1183
        %v1239 = vsel %vm696, %v1223, %v1185
        %v1240 = vsel %vm696, %v1224, %v1187
        %v1241 = vsel %vm696, %v1225, %v1189
        %v1242 = vsel %vm696, %v1226, %v1191
        %v1243 = vsel %vm696, %v1227, %v1193
        %v1244 = vsel %vm696, %v1228, %v1195
        %v1245 = vsel %vm696, %v1229, %v1197
        %v1246 = vld [vmem:[%s5] sm:$0xff]
        %v1247 = vld [vmem:[%s5 + $0x8] sm:$0xff]
        %v1248 = vld [vmem:[%s5 + $0x10] sm:$0xff]
        %v1249 = vld [vmem:[%s5 + $0x18] sm:$0xff]
        %v1250 = vld [vmem:[%s5 + $0x20] sm:$0xff]
        %v1251 = vld [vmem:[%s5 + $0x28] sm:$0xff]
        %v1252 = vld [vmem:[%s5 + $0x30] sm:$0xff]
        %v1253 = vld [vmem:[%s5 + $0x38] sm:$0xff]
        %v1254 = vld [vmem:[%s5 + $0x40] sm:$0xff]
        %v1255 = vld [vmem:[%s5 + $0x48] sm:$0xff]
        %v1256 = vld [vmem:[%s5 + $0x50] sm:$0xff]
        %v1257 = vld [vmem:[%s5 + $0x58] sm:$0xff]
        %v1258 = vld [vmem:[%s6] sm:$0x1]
        %v1260 = vlaneseq
        %v1261 = vshrl.u32 %v1260, 7
        %v1262 = vsub.s32 0, %v1261
        %v1263 = vrot.slane %v1258, %v1262
        %v1266 = vsel %vm732, %v1230, 0
        %v1269 = vsel %vm732, %v1231, 0
        %v1272 = vsel %vm732, %v1232, 0
        %v1275 = vsel %vm732, %v1233, 0
        %v1278 = vsel %vm732, %v1234, 0
        %v1281 = vsel %vm732, %v1235, 0
        %v1284 = vsel %vm732, %v1236, 0
        %v1287 = vsel %vm732, %v1237, 0
        %v1290 = vsel %vm732, %v1238, 0
        %v1293 = vsel %vm732, %v1239, 0
        %v1296 = vsel %vm732, %v1240, 0
        %v1299 = vsel %vm732, %v1241, 0
        %v1302 = vsel %vm732, %v1242, 0
        %v1305 = vsel %vm732, %v1243, 0
        %v1308 = vsel %vm732, %v1244, 0
        %v1311 = vsel %vm732, %v1245, 0
        %1313 = vmatprep.subr.mxu0 0.0
        %1314 = vmatpush1.msra.mxu0 %v1246
        %1315 = vmatprep.subr.mxu0 0.0
        %1316 = vmatpush1.msra.mxu0 %v1247
        %1317 = vmatprep.subr.mxu0 0.0
        %1318 = vmatpush1.msra.mxu0 %v1248
        %1319 = vmatprep.subr.mxu0 0.0
        %1320 = vmatpush1.msra.mxu0 %v1249
        %1321 = vmatprep.subr.mxu0 0.0
        %1322 = vmatpush1.msra.mxu0 %v1250
        %1323 = vmatprep.subr.mxu0 0.0
        %1324 = vmatpush1.msra.mxu0 %v1251
        %1325 = vmatprep.subr.mxu0 0.0
        %1326 = vmatpush1.msra.mxu0 %v1252
        %1327 = vmatprep.subr.mxu0 0.0
        %1328 = vmatpush1.msra.mxu0 %v1253
        %1329 = vmatprep.subr.mxu0 0.0
        %1330 = vmatpush1.msra.mxu0 %v1254
        %1331 = vmatprep.subr.mxu0 0.0
        %1332 = vmatpush1.msra.mxu0 %v1255
        %1333 = vmatprep.subr.mxu0 0.0
        %1334 = vmatpush1.msra.mxu0 %v1256
        %1335 = vmatprep.subr.mxu0 0.0
        %1336 = vmatpush1.msra.mxu0 %v1257
        %1337 = vmatprep.subr.mxu0 0.0
        %1338 = vmatpush1.msra.mxu0 0.0
        %1339 = vmatprep.subr.mxu0 0.0
        %1340 = vmatpush1.msra.mxu0 0.0
        %1341 = vmatprep.subr.mxu0 0.0
        %1342 = vmatpush1.msra.mxu0 0.0
        %1343 = vmatprep.subr.mxu0 0.0
        %1344 = vmatpush1.msra.mxu0 0.0
        %1345 = vmatprep.subr.mxu0 0.0
        %1346 = vmatpush1.msra.mxu0 0.0
        %1347 = vmatprep.subr.mxu0 0.0
        %1348 = vmatpush1.msra.mxu0 0.0
        %1349 = vmatprep.subr.mxu0 0.0
        %1350 = vmatpush1.msra.mxu0 0.0
        %1351 = vmatprep.subr.mxu0 0.0
        %1352 = vmatpush1.msra.mxu0 0.0
        %1353 = vmatprep.subr.mxu0 0.0
        %1354 = vmatpush1.msra.mxu0 0.0
        %1355 = vmatprep.subr.mxu0 0.0
        %1356 = vmatpush1.msra.mxu0 0.0
        %1357 = vmatprep.subr.mxu0 0.0
        %1358 = vmatpush1.msra.mxu0 0.0
        %1359 = vmatprep.subr.mxu0 0.0
        %1360 = vmatpush1.msra.mxu0 0.0
        %1361 = vmatprep.subr.mxu0 0.0
        %1362 = vmatpush1.msra.mxu0 0.0
        %1363 = vmatprep.subr.mxu0 0.0
        %1364 = vmatpush1.msra.mxu0 0.0
        %1365 = vmatprep.subr.mxu0 0.0
        %1366 = vmatpush1.msra.mxu0 0.0
        %1367 = vmatprep.subr.mxu0 0.0
        %1368 = vmatpush1.msra.mxu0 0.0
        %1369 = vmatprep.subr.mxu0 0.0
        %1370 = vmatpush1.msra.mxu0 0.0
        %1371 = vmatprep.subr.mxu0 0.0
        %1372 = vmatpush1.msra.mxu0 0.0
        %1373 = vmatprep.subr.mxu0 0.0
        %1374 = vmatpush1.msra.mxu0 0.0
        %1375 = vmatprep.subr.mxu0 0.0
        %1376 = vmatpush1.msra.mxu0 0.0
        %1377 = vmatprep.mubr.f32.mxu0 0.0
        %1378 = vmatmul.mubr.f32.gmra.mrb[0].mxu0 %v1266
        %v1379 = vpop.f32.mrb[0].mxu0
        %v1380 = vadd.f32 %v1263, %v1379
        %v1381 = vpop.f32.mrb[0].mxu0
        %1382 = vmatprep.mubr.f32.mxu0 0.0
        %1383 = vmatmul.mubr.f32.gmra.mrb[0].mxu0 %v1269
        %v1384 = vpop.f32.mrb[0].mxu0
        %v1385 = vadd.f32 %v1263, %v1384
        %v1386 = vpop.f32.mrb[0].mxu0
        %1387 = vmatprep.mubr.f32.mxu0 0.0
        %1388 = vmatmul.mubr.f32.gmra.mrb[0].mxu0 %v1272
        %v1389 = vpop.f32.mrb[0].mxu0
        %v1390 = vadd.f32 %v1263, %v1389
        %v1391 = vpop.f32.mrb[0].mxu0
        %1392 = vmatprep.mubr.f32.mxu0 0.0
        %1393 = vmatmul.mubr.f32.gmra.mrb[0].mxu0 %v1275
        %v1394 = vpop.f32.mrb[0].mxu0
        %v1395 = vadd.f32 %v1263, %v1394
        %v1396 = vpop.f32.mrb[0].mxu0
        %1397 = vmatprep.mubr.f32.mxu0 0.0
        %1398 = vmatmul.mubr.f32.gmra.mrb[0].mxu0 %v1278
        %v1399 = vpop.f32.mrb[0].mxu0
        %v1400 = vadd.f32 %v1263, %v1399
        %v1401 = vpop.f32.mrb[0].mxu0
        %1402 = vmatprep.mubr.f32.mxu0 0.0
        %1403 = vmatmul.mubr.f32.gmra.mrb[0].mxu0 %v1281
        %v1404 = vpop.f32.mrb[0].mxu0
        %v1405 = vadd.f32 %v1263, %v1404
        %v1406 = vpop.f32.mrb[0].mxu0
        %1407 = vmatprep.mubr.f32.mxu0 0.0
        %1408 = vmatmul.mubr.f32.gmra.mrb[0].mxu0 %v1284
        %v1409 = vpop.f32.mrb[0].mxu0
        %v1410 = vadd.f32 %v1263, %v1409
        %v1411 = vpop.f32.mrb[0].mxu0
        %1412 = vmatprep.mubr.f32.mxu0 0.0
        %1413 = vmatmul.mubr.f32.gmra.mrb[0].mxu0 %v1287
        %v1414 = vpop.f32.mrb[0].mxu0
        %v1415 = vadd.f32 %v1263, %v1414
        %v1416 = vpop.f32.mrb[0].mxu0
        %1417 = vmatprep.mubr.f32.mxu0 0.0
        %1418 = vmatmul.mubr.f32.gmra.mrb[0].mxu0 %v1290
        %v1419 = vpop.f32.mrb[0].mxu0
        %v1420 = vadd.f32 %v1263, %v1419
        %v1421 = vpop.f32.mrb[0].mxu0
        %1422 = vmatprep.mubr.f32.mxu0 0.0
        %1423 = vmatmul.mubr.f32.gmra.mrb[0].mxu0 %v1293
        %v1424 = vpop.f32.mrb[0].mxu0
        %v1425 = vadd.f32 %v1263, %v1424
        %v1426 = vpop.f32.mrb[0].mxu0
        %1427 = vmatprep.mubr.f32.mxu0 0.0
        %1428 = vmatmul.mubr.f32.gmra.mrb[0].mxu0 %v1296
        %v1429 = vpop.f32.mrb[0].mxu0
        %v1430 = vadd.f32 %v1263, %v1429
        %v1431 = vpop.f32.mrb[0].mxu0
        %1432 = vmatprep.mubr.f32.mxu0 0.0
        %1433 = vmatmul.mubr.f32.gmra.mrb[0].mxu0 %v1299
        %v1434 = vpop.f32.mrb[0].mxu0
        %v1435 = vadd.f32 %v1263, %v1434
        %v1436 = vpop.f32.mrb[0].mxu0
        %1437 = vmatprep.mubr.f32.mxu0 0.0
        %1438 = vmatmul.mubr.f32.gmra.mrb[0].mxu0 %v1302
        %v1439 = vpop.f32.mrb[0].mxu0
        %v1440 = vadd.f32 %v1263, %v1439
        %v1441 = vpop.f32.mrb[0].mxu0
        %1442 = vmatprep.mubr.f32.mxu0 0.0
        %1443 = vmatmul.mubr.f32.gmra.mrb[0].mxu0 %v1305
        %v1444 = vpop.f32.mrb[0].mxu0
        %v1445 = vadd.f32 %v1263, %v1444
        %v1446 = vpop.f32.mrb[0].mxu0
        %1447 = vmatprep.mubr.f32.mxu0 0.0
        %1448 = vmatmul.mubr.f32.gmra.mrb[0].mxu0 %v1308
        %v1449 = vpop.f32.mrb[0].mxu0
        %v1450 = vadd.f32 %v1263, %v1449
        %v1451 = vpop.f32.mrb[0].mxu0
        %1452 = vmatprep.mubr.f32.mxu0 0.0
        %1453 = vmatmul.mubr.f32.gmra.mrb[0].mxu0 %v1311
        %v1454 = vpop.f32.mrb[0].mxu0
        %v1455 = vadd.f32 %v1263, %v1454
        %v1456 = vpop.f32.mrb[0].mxu0
        %1457 = vdwg.mxu0
        %v1458 = vmax.f32 %v1380, 0.0
        %v1459 = vmax.f32 %v1385, 0.0
        %v1460 = vmax.f32 %v1390, 0.0
        %v1461 = vmax.f32 %v1395, 0.0
        %v1462 = vmax.f32 %v1400, 0.0
        %v1463 = vmax.f32 %v1405, 0.0
        %v1464 = vmax.f32 %v1410, 0.0
        %v1465 = vmax.f32 %v1415, 0.0
        %v1466 = vmax.f32 %v1420, 0.0
        %v1467 = vmax.f32 %v1425, 0.0
        %v1468 = vmax.f32 %v1430, 0.0
        %v1469 = vmax.f32 %v1435, 0.0
        %v1470 = vmax.f32 %v1440, 0.0
        %v1471 = vmax.f32 %v1445, 0.0
        %v1472 = vmax.f32 %v1450, 0.0
        %v1473 = vmax.f32 %v1455, 0.0
        %1490 = vrot.lane.b32.xlu0 %v848, 96
        %v1491 = vpop.permute.xlu0 %1490
        %1492 = vrot.lane.b32.xlu0 %v853, 96
        %v1493 = vpop.permute.xlu0 %1492
        %1494 = vrot.lane.b32.xlu0 %v858, 96
        %v1495 = vpop.permute.xlu0 %1494
        %1496 = vrot.lane.b32.xlu0 %v863, 96
        %v1497 = vpop.permute.xlu0 %1496
        %1498 = vrot.lane.b32.xlu0 %v868, 96
        %v1499 = vpop.permute.xlu0 %1498
        %1500 = vrot.lane.b32.xlu0 %v873, 96
        %v1501 = vpop.permute.xlu0 %1500
        %1502 = vrot.lane.b32.xlu0 %v878, 96
        %v1503 = vpop.permute.xlu0 %1502
        %1504 = vrot.lane.b32.xlu0 %v883, 96
        %v1505 = vpop.permute.xlu0 %1504
        %1506 = vrot.lane.b32.xlu0 %v888, 96
        %v1507 = vpop.permute.xlu0 %1506
        %1508 = vrot.lane.b32.xlu0 %v893, 96
        %v1509 = vpop.permute.xlu0 %1508
        %1510 = vrot.lane.b32.xlu0 %v898, 96
        %v1511 = vpop.permute.xlu0 %1510
        %1512 = vrot.lane.b32.xlu0 %v903, 96
        %v1513 = vpop.permute.xlu0 %1512
        %1514 = vrot.lane.b32.xlu0 %v908, 96
        %v1515 = vpop.permute.xlu0 %1514
        %1516 = vrot.lane.b32.xlu0 %v913, 96
        %v1517 = vpop.permute.xlu0 %1516
        %1518 = vrot.lane.b32.xlu0 %v918, 96
        %v1519 = vpop.permute.xlu0 %1518
        %1520 = vrot.lane.b32.xlu0 %v923, 96
        %v1521 = vpop.permute.xlu0 %1520
        %v1538 = vadd.f32 %v1458, %v1491
        %v1539 = vadd.f32 %v1459, %v1493
        %v1540 = vadd.f32 %v1460, %v1495
        %v1541 = vadd.f32 %v1461, %v1497
        %v1542 = vadd.f32 %v1462, %v1499
        %v1543 = vadd.f32 %v1463, %v1501
        %v1544 = vadd.f32 %v1464, %v1503
        %v1545 = vadd.f32 %v1465, %v1505
        %v1546 = vadd.f32 %v1466, %v1507
        %v1547 = vadd.f32 %v1467, %v1509
        %v1548 = vadd.f32 %v1468, %v1511
        %v1549 = vadd.f32 %v1469, %v1513
        %v1550 = vadd.f32 %v1470, %v1515
        %v1551 = vadd.f32 %v1471, %v1517
        %v1552 = vadd.f32 %v1472, %v1519
        %v1553 = vadd.f32 %v1473, %v1521
        %v1554 = vmax.f32 %v1538, 0.0
        %v1555 = vmax.f32 %v1539, 0.0
        %v1556 = vmax.f32 %v1540, 0.0
        %v1557 = vmax.f32 %v1541, 0.0
        %v1558 = vmax.f32 %v1542, 0.0
        %v1559 = vmax.f32 %v1543, 0.0
        %v1560 = vmax.f32 %v1544, 0.0
        %v1561 = vmax.f32 %v1545, 0.0
        %v1562 = vmax.f32 %v1546, 0.0
        %v1563 = vmax.f32 %v1547, 0.0
        %v1564 = vmax.f32 %v1548, 0.0
        %v1565 = vmax.f32 %v1549, 0.0
        %v1566 = vmax.f32 %v1550, 0.0
        %v1567 = vmax.f32 %v1551, 0.0
        %v1568 = vmax.f32 %v1552, 0.0
        %v1569 = vmax.f32 %v1553, 0.0
        %v1586 = vrot.slane %v1554, 4
        %v1587 = vrot.slane %v1555, 4
        %v1588 = vrot.slane %v1556, 4
        %v1589 = vrot.slane %v1557, 4
        %v1590 = vrot.slane %v1558, 4
        %v1591 = vrot.slane %v1559, 4
        %v1592 = vrot.slane %v1560, 4
        %v1593 = vrot.slane %v1561, 4
        %v1594 = vrot.slane %v1562, 4
        %v1595 = vrot.slane %v1563, 4
        %v1596 = vrot.slane %v1564, 4
        %v1597 = vrot.slane %v1565, 4
        %v1598 = vrot.slane %v1566, 4
        %v1599 = vrot.slane %v1567, 4
        %v1600 = vrot.slane %v1568, 4
        %v1601 = vrot.slane %v1569, 4
        %vm1618 = vcmask 1043456
        %v1619 = vsel %vm1618, 0.0, %v1586
        %v1620 = vsel %vm1618, 0.0, %v1587
        %v1621 = vsel %vm1618, 0.0, %v1588
        %v1622 = vsel %vm1618, 0.0, %v1589
        %v1623 = vsel %vm1618, 0.0, %v1590
        %v1624 = vsel %vm1618, 0.0, %v1591
        %v1625 = vsel %vm1618, 0.0, %v1592
        %v1626 = vsel %vm1618, 0.0, %v1593
        %v1627 = vsel %vm1618, 0.0, %v1594
        %v1628 = vsel %vm1618, 0.0, %v1595
        %v1629 = vsel %vm1618, 0.0, %v1596
        %v1630 = vsel %vm1618, 0.0, %v1597
        %v1631 = vsel %vm1618, 0.0, %v1598
        %v1632 = vsel %vm1618, 0.0, %v1599
        %v1633 = vsel %vm1618, 0.0, %v1600
        %v1634 = vsel %vm1618, 0.0, %v1601
        %v1651 = vrot.slane %v1619, 2
        %v1652 = vrot.slane %v1586, 2
        %v1653 = vsel %vm582, %v1651, %v1652
        %v1654 = vrot.slane %v1620, 2
        %v1655 = vrot.slane %v1587, 2
        %v1656 = vsel %vm582, %v1654, %v1655
        %v1657 = vrot.slane %v1621, 2
        %v1658 = vrot.slane %v1588, 2
        %v1659 = vsel %vm582, %v1657, %v1658
        %v1660 = vrot.slane %v1622, 2
        %v1661 = vrot.slane %v1589, 2
        %v1662 = vsel %vm582, %v1660, %v1661
        %v1663 = vrot.slane %v1623, 2
        %v1664 = vrot.slane %v1590, 2
        %v1665 = vsel %vm582, %v1663, %v1664
        %v1666 = vrot.slane %v1624, 2
        %v1667 = vrot.slane %v1591, 2
        %v1668 = vsel %vm582, %v1666, %v1667
        %v1669 = vrot.slane %v1625, 2
        %v1670 = vrot.slane %v1592, 2
        %v1671 = vsel %vm582, %v1669, %v1670
        %v1672 = vrot.slane %v1626, 2
        %v1673 = vrot.slane %v1593, 2
        %v1674 = vsel %vm582, %v1672, %v1673
        %v1675 = vrot.slane %v1627, 2
        %v1676 = vrot.slane %v1594, 2
        %v1677 = vsel %vm582, %v1675, %v1676
        %v1678 = vrot.slane %v1628, 2
        %v1679 = vrot.slane %v1595, 2
        %v1680 = vsel %vm582, %v1678, %v1679
        %v1681 = vrot.slane %v1629, 2
        %v1682 = vrot.slane %v1596, 2
        %v1683 = vsel %vm582, %v1681, %v1682
        %v1684 = vrot.slane %v1630, 2
        %v1685 = vrot.slane %v1597, 2
        %v1686 = vsel %vm582, %v1684, %v1685
        %v1687 = vrot.slane %v1631, 2
        %v1688 = vrot.slane %v1598, 2
        %v1689 = vsel %vm582, %v1687, %v1688
        %v1690 = vrot.slane %v1632, 2
        %v1691 = vrot.slane %v1599, 2
        %v1692 = vsel %vm582, %v1690, %v1691
        %v1693 = vrot.slane %v1633, 2
        %v1694 = vrot.slane %v1600, 2
        %v1695 = vsel %vm582, %v1693, %v1694
        %v1696 = vrot.slane %v1634, 2
        %v1697 = vrot.slane %v1601, 2
        %v1698 = vsel %vm582, %v1696, %v1697
        %1699 = vrot.lane.b32.xlu0 %v1653, 32
        %v1700 = vpop.permute.xlu0 %1699
        %1701 = vrot.lane.b32.xlu0 %v1656, 32
        %v1702 = vpop.permute.xlu0 %1701
        %1703 = vrot.lane.b32.xlu0 %v1659, 32
        %v1704 = vpop.permute.xlu0 %1703
        %1705 = vrot.lane.b32.xlu0 %v1662, 32
        %v1706 = vpop.permute.xlu0 %1705
        %1707 = vrot.lane.b32.xlu0 %v1665, 32
        %v1708 = vpop.permute.xlu0 %1707
        %1709 = vrot.lane.b32.xlu0 %v1668, 32
        %v1710 = vpop.permute.xlu0 %1709
        %1711 = vrot.lane.b32.xlu0 %v1671, 32
        %v1712 = vpop.permute.xlu0 %1711
        %1713 = vrot.lane.b32.xlu0 %v1674, 32
        %v1714 = vpop.permute.xlu0 %1713
        %1715 = vrot.lane.b32.xlu0 %v1677, 32
        %v1716 = vpop.permute.xlu0 %1715
        %1717 = vrot.lane.b32.xlu0 %v1680, 32
        %v1718 = vpop.permute.xlu0 %1717
        %1719 = vrot.lane.b32.xlu0 %v1683, 32
        %v1720 = vpop.permute.xlu0 %1719
        %1721 = vrot.lane.b32.xlu0 %v1686, 32
        %v1722 = vpop.permute.xlu0 %1721
        %1723 = vrot.lane.b32.xlu0 %v1689, 32
        %v1724 = vpop.permute.xlu0 %1723
        %1725 = vrot.lane.b32.xlu0 %v1692, 32
        %v1726 = vpop.permute.xlu0 %1725
        %1727 = vrot.lane.b32.xlu0 %v1695, 32
        %v1728 = vpop.permute.xlu0 %1727
        %1729 = vrot.lane.b32.xlu0 %v1698, 32
        %v1730 = vpop.permute.xlu0 %1729
        %v1747 = vrot.slane %v1619, 4
        %v1748 = vrot.slane %v1586, 4
        %v1749 = vsel %vm1618, %v1747, %v1748
        %v1750 = vrot.slane %v1620, 4
        %v1751 = vrot.slane %v1587, 4
        %v1752 = vsel %vm1618, %v1750, %v1751
        %v1753 = vrot.slane %v1621, 4
        %v1754 = vrot.slane %v1588, 4
        %v1755 = vsel %vm1618, %v1753, %v1754
        %v1756 = vrot.slane %v1622, 4
        %v1757 = vrot.slane %v1589, 4
        %v1758 = vsel %vm1618, %v1756, %v1757
        %v1759 = vrot.slane %v1623, 4
        %v1760 = vrot.slane %v1590, 4
        %v1761 = vsel %vm1618, %v1759, %v1760
        %v1762 = vrot.slane %v1624, 4
        %v1763 = vrot.slane %v1591, 4
        %v1764 = vsel %vm1618, %v1762, %v1763
        %v1765 = vrot.slane %v1625, 4
        %v1766 = vrot.slane %v1592, 4
        %v1767 = vsel %vm1618, %v1765, %v1766
        %v1768 = vrot.slane %v1626, 4
        %v1769 = vrot.slane %v1593, 4
        %v1770 = vsel %vm1618, %v1768, %v1769
        %v1771 = vrot.slane %v1627, 4
        %v1772 = vrot.slane %v1594, 4
        %v1773 = vsel %vm1618, %v1771, %v1772
        %v1774 = vrot.slane %v1628, 4
        %v1775 = vrot.slane %v1595, 4
        %v1776 = vsel %vm1618, %v1774, %v1775
        %v1777 = vrot.slane %v1629, 4
        %v1778 = vrot.slane %v1596, 4
        %v1779 = vsel %vm1618, %v1777, %v1778
        %v1780 = vrot.slane %v1630, 4
        %v1781 = vrot.slane %v1597, 4
        %v1782 = vsel %vm1618, %v1780, %v1781
        %v1783 = vrot.slane %v1631, 4
        %v1784 = vrot.slane %v1598, 4
        %v1785 = vsel %vm1618, %v1783, %v1784
        %v1786 = vrot.slane %v1632, 4
        %v1787 = vrot.slane %v1599, 4
        %v1788 = vsel %vm1618, %v1786, %v1787
        %v1789 = vrot.slane %v1633, 4
        %v1790 = vrot.slane %v1600, 4
        %v1791 = vsel %vm1618, %v1789, %v1790
        %v1792 = vrot.slane %v1634, 4
        %v1793 = vrot.slane %v1601, 4
        %v1794 = vsel %vm1618, %v1792, %v1793
        %1795 = vrot.lane.b32.xlu0 %v1749, 64
        %v1796 = vpop.permute.xlu0 %1795
        %1797 = vrot.lane.b32.xlu0 %v1752, 64
        %v1798 = vpop.permute.xlu0 %1797
        %1799 = vrot.lane.b32.xlu0 %v1755, 64
        %v1800 = vpop.permute.xlu0 %1799
        %1801 = vrot.lane.b32.xlu0 %v1758, 64
        %v1802 = vpop.permute.xlu0 %1801
        %1803 = vrot.lane.b32.xlu0 %v1761, 64
        %v1804 = vpop.permute.xlu0 %1803
        %1805 = vrot.lane.b32.xlu0 %v1764, 64
        %v1806 = vpop.permute.xlu0 %1805
        %1807 = vrot.lane.b32.xlu0 %v1767, 64
        %v1808 = vpop.permute.xlu0 %1807
        %1809 = vrot.lane.b32.xlu0 %v1770, 64
        %v1810 = vpop.permute.xlu0 %1809
        %1811 = vrot.lane.b32.xlu0 %v1773, 64
        %v1812 = vpop.permute.xlu0 %1811
        %1813 = vrot.lane.b32.xlu0 %v1776, 64
        %v1814 = vpop.permute.xlu0 %1813
        %1815 = vrot.lane.b32.xlu0 %v1779, 64
        %v1816 = vpop.permute.xlu0 %1815
        %1817 = vrot.lane.b32.xlu0 %v1782, 64
        %v1818 = vpop.permute.xlu0 %1817
        %1819 = vrot.lane.b32.xlu0 %v1785, 64
        %v1820 = vpop.permute.xlu0 %1819
        %1821 = vrot.lane.b32.xlu0 %v1788, 64
        %v1822 = vpop.permute.xlu0 %1821
        %1823 = vrot.lane.b32.xlu0 %v1791, 64
        %v1824 = vpop.permute.xlu0 %1823
        %1825 = vrot.lane.b32.xlu0 %v1794, 64
        %v1826 = vpop.permute.xlu0 %1825
        %v1843 = vsel %vm679, %v1619, %v1700
        %v1844 = vsel %vm679, %v1620, %v1702
        %v1845 = vsel %vm679, %v1621, %v1704
        %v1846 = vsel %vm679, %v1622, %v1706
        %v1847 = vsel %vm679, %v1623, %v1708
        %v1848 = vsel %vm679, %v1624, %v1710
        %v1849 = vsel %vm679, %v1625, %v1712
        %v1850 = vsel %vm679, %v1626, %v1714
        %v1851 = vsel %vm679, %v1627, %v1716
        %v1852 = vsel %vm679, %v1628, %v1718
        %v1853 = vsel %vm679, %v1629, %v1720
        %v1854 = vsel %vm679, %v1630, %v1722
        %v1855 = vsel %vm679, %v1631, %v1724
        %v1856 = vsel %vm679, %v1632, %v1726
        %v1857 = vsel %vm679, %v1633, %v1728
        %v1858 = vsel %vm679, %v1634, %v1730
        %v1859 = vsel %vm696, %v1843, %v1796
        %v1860 = vsel %vm696, %v1844, %v1798
        %v1861 = vsel %vm696, %v1845, %v1800
        %v1862 = vsel %vm696, %v1846, %v1802
        %v1863 = vsel %vm696, %v1847, %v1804
        %v1864 = vsel %vm696, %v1848, %v1806
        %v1865 = vsel %vm696, %v1849, %v1808
        %v1866 = vsel %vm696, %v1850, %v1810
        %v1867 = vsel %vm696, %v1851, %v1812
        %v1868 = vsel %vm696, %v1852, %v1814
        %v1869 = vsel %vm696, %v1853, %v1816
        %v1870 = vsel %vm696, %v1854, %v1818
        %v1871 = vsel %vm696, %v1855, %v1820
        %v1872 = vsel %vm696, %v1856, %v1822
        %v1873 = vsel %vm696, %v1857, %v1824
        %v1874 = vsel %vm696, %v1858, %v1826
        %s1875 = scalar_lea.vmem %s3, 96
        %v1876 = vld [vmem:[%s1875] sm:$0xff]
        %v1877 = vld [vmem:[%s1875 + $0x8] sm:$0xff]
        %v1878 = vld [vmem:[%s1875 + $0x10] sm:$0xff]
        %v1879 = vld [vmem:[%s1875 + $0x18] sm:$0xff]
        %v1880 = vld [vmem:[%s1875 + $0x20] sm:$0xff]
        %v1881 = vld [vmem:[%s1875 + $0x28] sm:$0xff]
        %v1882 = vld [vmem:[%s1875 + $0x30] sm:$0xff]
        %v1883 = vld [vmem:[%s1875 + $0x38] sm:$0xff]
        %v1884 = vld [vmem:[%s1875 + $0x40] sm:$0xff]
        %v1885 = vld [vmem:[%s1875 + $0x48] sm:$0xff]
        %v1886 = vld [vmem:[%s1875 + $0x50] sm:$0xff]
        %v1887 = vld [vmem:[%s1875 + $0x58] sm:$0xff]
        %s1888 = scalar_lea.vmem %s4, 1
        %v1889 = vld [vmem:[%s1888] sm:$0x1]
        %v1891 = vlaneseq
        %v1892 = vshrl.u32 %v1891, 7
        %v1893 = vsub.s32 0, %v1892
        %v1894 = vrot.slane %v1889, %v1893
        %v1897 = vsel %vm732, %v1859, 0
        %v1900 = vsel %vm732, %v1860, 0
        %v1903 = vsel %vm732, %v1861, 0
        %v1906 = vsel %vm732, %v1862, 0
        %v1909 = vsel %vm732, %v1863, 0
        %v1912 = vsel %vm732, %v1864, 0
        %v1915 = vsel %vm732, %v1865, 0
        %v1918 = vsel %vm732, %v1866, 0
        %v1921 = vsel %vm732, %v1867, 0
        %v1924 = vsel %vm732, %v1868, 0
        %v1927 = vsel %vm732, %v1869, 0
        %v1930 = vsel %vm732, %v1870, 0
        %v1933 = vsel %vm732, %v1871, 0
        %v1936 = vsel %vm732, %v1872, 0
        %v1939 = vsel %vm732, %v1873, 0
        %v1942 = vsel %vm732, %v1874, 0
        %1944 = vmatprep.subr.mxu0 0.0
        %1945 = vmatpush1.msra.mxu0 %v1876
        %1946 = vmatprep.subr.mxu0 0.0
        %1947 = vmatpush1.msra.mxu0 %v1877
        %1948 = vmatprep.subr.mxu0 0.0
        %1949 = vmatpush1.msra.mxu0 %v1878
        %1950 = vmatprep.subr.mxu0 0.0
        %1951 = vmatpush1.msra.mxu0 %v1879
        %1952 = vmatprep.subr.mxu0 0.0
        %1953 = vmatpush1.msra.mxu0 %v1880
        %1954 = vmatprep.subr.mxu0 0.0
        %1955 = vmatpush1.msra.mxu0 %v1881
        %1956 = vmatprep.subr.mxu0 0.0
        %1957 = vmatpush1.msra.mxu0 %v1882
        %1958 = vmatprep.subr.mxu0 0.0
        %1959 = vmatpush1.msra.mxu0 %v1883
        %1960 = vmatprep.subr.mxu0 0.0
        %1961 = vmatpush1.msra.mxu0 %v1884
        %1962 = vmatprep.subr.mxu0 0.0
        %1963 = vmatpush1.msra.mxu0 %v1885
        %1964 = vmatprep.subr.mxu0 0.0
        %1965 = vmatpush1.msra.mxu0 %v1886
        %1966 = vmatprep.subr.mxu0 0.0
        %1967 = vmatpush1.msra.mxu0 %v1887
        %1968 = vmatprep.subr.mxu0 0.0
        %1969 = vmatpush1.msra.mxu0 0.0
        %1970 = vmatprep.subr.mxu0 0.0
        %1971 = vmatpush1.msra.mxu0 0.0
        %1972 = vmatprep.subr.mxu0 0.0
        %1973 = vmatpush1.msra.mxu0 0.0
        %1974 = vmatprep.subr.mxu0 0.0
        %1975 = vmatpush1.msra.mxu0 0.0
        %1976 = vmatprep.subr.mxu0 0.0
        %1977 = vmatpush1.msra.mxu0 0.0
        %1978 = vmatprep.subr.mxu0 0.0
        %1979 = vmatpush1.msra.mxu0 0.0
        %1980 = vmatprep.subr.mxu0 0.0
        %1981 = vmatpush1.msra.mxu0 0.0
        %1982 = vmatprep.subr.mxu0 0.0
        %1983 = vmatpush1.msra.mxu0 0.0
        %1984 = vmatprep.subr.mxu0 0.0
        %1985 = vmatpush1.msra.mxu0 0.0
        %1986 = vmatprep.subr.mxu0 0.0
        %1987 = vmatpush1.msra.mxu0 0.0
        %1988 = vmatprep.subr.mxu0 0.0
        %1989 = vmatpush1.msra.mxu0 0.0
        %1990 = vmatprep.subr.mxu0 0.0
        %1991 = vmatpush1.msra.mxu0 0.0
        %1992 = vmatprep.subr.mxu0 0.0
        %1993 = vmatpush1.msra.mxu0 0.0
        %1994 = vmatprep.subr.mxu0 0.0
        %1995 = vmatpush1.msra.mxu0 0.0
        %1996 = vmatprep.subr.mxu0 0.0
        %1997 = vmatpush1.msra.mxu0 0.0
        %1998 = vmatprep.subr.mxu0 0.0
        %1999 = vmatpush1.msra.mxu0 0.0
        %2000 = vmatprep.subr.mxu0 0.0
        %2001 = vmatpush1.msra.mxu0 0.0
        %2002 = vmatprep.subr.mxu0 0.0
        %2003 = vmatpush1.msra.mxu0 0.0
        %2004 = vmatprep.subr.mxu0 0.0
        %2005 = vmatpush1.msra.mxu0 0.0
        %2006 = vmatprep.subr.mxu0 0.0
        %2007 = vmatpush1.msra.mxu0 0.0
        %2008 = vmatprep.mubr.f32.mxu0 0.0
        %2009 = vmatmul.mubr.f32.gmra.mrb[0].mxu0 %v1897
        %v2010 = vpop.f32.mrb[0].mxu0
        %v2011 = vadd.f32 %v1894, %v2010
        %v2012 = vpop.f32.mrb[0].mxu0
        %2013 = vmatprep.mubr.f32.mxu0 0.0
        %2014 = vmatmul.mubr.f32.gmra.mrb[0].mxu0 %v1900
        %v2015 = vpop.f32.mrb[0].mxu0
        %v2016 = vadd.f32 %v1894, %v2015
        %v2017 = vpop.f32.mrb[0].mxu0
        %2018 = vmatprep.mubr.f32.mxu0 0.0
        %2019 = vmatmul.mubr.f32.gmra.mrb[0].mxu0 %v1903
        %v2020 = vpop.f32.mrb[0].mxu0
        %v2021 = vadd.f32 %v1894, %v2020
        %v2022 = vpop.f32.mrb[0].mxu0
        %2023 = vmatprep.mubr.f32.mxu0 0.0
        %2024 = vmatmul.mubr.f32.gmra.mrb[0].mxu0 %v1906
        %v2025 = vpop.f32.mrb[0].mxu0
        %v2026 = vadd.f32 %v1894, %v2025
        %v2027 = vpop.f32.mrb[0].mxu0
        %2028 = vmatprep.mubr.f32.mxu0 0.0
        %2029 = vmatmul.mubr.f32.gmra.mrb[0].mxu0 %v1909
        %v2030 = vpop.f32.mrb[0].mxu0
        %v2031 = vadd.f32 %v1894, %v2030
        %v2032 = vpop.f32.mrb[0].mxu0
        %2033 = vmatprep.mubr.f32.mxu0 0.0
        %2034 = vmatmul.mubr.f32.gmra.mrb[0].mxu0 %v1912
        %v2035 = vpop.f32.mrb[0].mxu0
        %v2036 = vadd.f32 %v1894, %v2035
        %v2037 = vpop.f32.mrb[0].mxu0
        %2038 = vmatprep.mubr.f32.mxu0 0.0
        %2039 = vmatmul.mubr.f32.gmra.mrb[0].mxu0 %v1915
        %v2040 = vpop.f32.mrb[0].mxu0
        %v2041 = vadd.f32 %v1894, %v2040
        %v2042 = vpop.f32.mrb[0].mxu0
        %2043 = vmatprep.mubr.f32.mxu0 0.0
        %2044 = vmatmul.mubr.f32.gmra.mrb[0].mxu0 %v1918
        %v2045 = vpop.f32.mrb[0].mxu0
        %v2046 = vadd.f32 %v1894, %v2045
        %v2047 = vpop.f32.mrb[0].mxu0
        %2048 = vmatprep.mubr.f32.mxu0 0.0
        %2049 = vmatmul.mubr.f32.gmra.mrb[0].mxu0 %v1921
        %v2050 = vpop.f32.mrb[0].mxu0
        %v2051 = vadd.f32 %v1894, %v2050
        %v2052 = vpop.f32.mrb[0].mxu0
        %2053 = vmatprep.mubr.f32.mxu0 0.0
        %2054 = vmatmul.mubr.f32.gmra.mrb[0].mxu0 %v1924
        %v2055 = vpop.f32.mrb[0].mxu0
        %v2056 = vadd.f32 %v1894, %v2055
        %v2057 = vpop.f32.mrb[0].mxu0
        %2058 = vmatprep.mubr.f32.mxu0 0.0
        %2059 = vmatmul.mubr.f32.gmra.mrb[0].mxu0 %v1927
        %v2060 = vpop.f32.mrb[0].mxu0
        %v2061 = vadd.f32 %v1894, %v2060
        %v2062 = vpop.f32.mrb[0].mxu0
        %2063 = vmatprep.mubr.f32.mxu0 0.0
        %2064 = vmatmul.mubr.f32.gmra.mrb[0].mxu0 %v1930
        %v2065 = vpop.f32.mrb[0].mxu0
        %v2066 = vadd.f32 %v1894, %v2065
        %v2067 = vpop.f32.mrb[0].mxu0
        %2068 = vmatprep.mubr.f32.mxu0 0.0
        %2069 = vmatmul.mubr.f32.gmra.mrb[0].mxu0 %v1933
        %v2070 = vpop.f32.mrb[0].mxu0
        %v2071 = vadd.f32 %v1894, %v2070
        %v2072 = vpop.f32.mrb[0].mxu0
        %2073 = vmatprep.mubr.f32.mxu0 0.0
        %2074 = vmatmul.mubr.f32.gmra.mrb[0].mxu0 %v1936
        %v2075 = vpop.f32.mrb[0].mxu0
        %v2076 = vadd.f32 %v1894, %v2075
        %v2077 = vpop.f32.mrb[0].mxu0
        %2078 = vmatprep.mubr.f32.mxu0 0.0
        %2079 = vmatmul.mubr.f32.gmra.mrb[0].mxu0 %v1939
        %v2080 = vpop.f32.mrb[0].mxu0
        %v2081 = vadd.f32 %v1894, %v2080
        %v2082 = vpop.f32.mrb[0].mxu0
        %2083 = vmatprep.mubr.f32.mxu0 0.0
        %2084 = vmatmul.mubr.f32.gmra.mrb[0].mxu0 %v1942
        %v2085 = vpop.f32.mrb[0].mxu0
        %v2086 = vadd.f32 %v1894, %v2085
        %v2087 = vpop.f32.mrb[0].mxu0
        %2088 = vdwg.mxu0
        %v2089 = vmax.f32 %v2011, 0.0
        %v2090 = vmax.f32 %v2016, 0.0
        %v2091 = vmax.f32 %v2021, 0.0
        %v2092 = vmax.f32 %v2026, 0.0
        %v2093 = vmax.f32 %v2031, 0.0
        %v2094 = vmax.f32 %v2036, 0.0
        %v2095 = vmax.f32 %v2041, 0.0
        %v2096 = vmax.f32 %v2046, 0.0
        %v2097 = vmax.f32 %v2051, 0.0
        %v2098 = vmax.f32 %v2056, 0.0
        %v2099 = vmax.f32 %v2061, 0.0
        %v2100 = vmax.f32 %v2066, 0.0
        %v2101 = vmax.f32 %v2071, 0.0
        %v2102 = vmax.f32 %v2076, 0.0
        %v2103 = vmax.f32 %v2081, 0.0
        %v2104 = vmax.f32 %v2086, 0.0
        %v2121 = vrot.slane %v2089, 4
        %v2122 = vrot.slane %v2090, 4
        %v2123 = vrot.slane %v2091, 4
        %v2124 = vrot.slane %v2092, 4
        %v2125 = vrot.slane %v2093, 4
        %v2126 = vrot.slane %v2094, 4
        %v2127 = vrot.slane %v2095, 4
        %v2128 = vrot.slane %v2096, 4
        %v2129 = vrot.slane %v2097, 4
        %v2130 = vrot.slane %v2098, 4
        %v2131 = vrot.slane %v2099, 4
        %v2132 = vrot.slane %v2100, 4
        %v2133 = vrot.slane %v2101, 4
        %v2134 = vrot.slane %v2102, 4
        %v2135 = vrot.slane %v2103, 4
        %v2136 = vrot.slane %v2104, 4
        %v2153 = vsel %vm1618, 0.0, %v2121
        %v2154 = vsel %vm1618, 0.0, %v2122
        %v2155 = vsel %vm1618, 0.0, %v2123
        %v2156 = vsel %vm1618, 0.0, %v2124
        %v2157 = vsel %vm1618, 0.0, %v2125
        %v2158 = vsel %vm1618, 0.0, %v2126
        %v2159 = vsel %vm1618, 0.0, %v2127
        %v2160 = vsel %vm1618, 0.0, %v2128
        %v2161 = vsel %vm1618, 0.0, %v2129
        %v2162 = vsel %vm1618, 0.0, %v2130
        %v2163 = vsel %vm1618, 0.0, %v2131
        %v2164 = vsel %vm1618, 0.0, %v2132
        %v2165 = vsel %vm1618, 0.0, %v2133
        %v2166 = vsel %vm1618, 0.0, %v2134
        %v2167 = vsel %vm1618, 0.0, %v2135
        %v2168 = vsel %vm1618, 0.0, %v2136
        %v2185 = vrot.slane %v2153, 2
        %v2186 = vrot.slane %v2121, 2
        %v2187 = vsel %vm582, %v2185, %v2186
        %v2188 = vrot.slane %v2154, 2
        %v2189 = vrot.slane %v2122, 2
        %v2190 = vsel %vm582, %v2188, %v2189
        %v2191 = vrot.slane %v2155, 2
        %v2192 = vrot.slane %v2123, 2
        %v2193 = vsel %vm582, %v2191, %v2192
        %v2194 = vrot.slane %v2156, 2
        %v2195 = vrot.slane %v2124, 2
        %v2196 = vsel %vm582, %v2194, %v2195
        %v2197 = vrot.slane %v2157, 2
        %v2198 = vrot.slane %v2125, 2
        %v2199 = vsel %vm582, %v2197, %v2198
        %v2200 = vrot.slane %v2158, 2
        %v2201 = vrot.slane %v2126, 2
        %v2202 = vsel %vm582, %v2200, %v2201
        %v2203 = vrot.slane %v2159, 2
        %v2204 = vrot.slane %v2127, 2
        %v2205 = vsel %vm582, %v2203, %v2204
        %v2206 = vrot.slane %v2160, 2
        %v2207 = vrot.slane %v2128, 2
        %v2208 = vsel %vm582, %v2206, %v2207
        %v2209 = vrot.slane %v2161, 2
        %v2210 = vrot.slane %v2129, 2
        %v2211 = vsel %vm582, %v2209, %v2210
        %v2212 = vrot.slane %v2162, 2
        %v2213 = vrot.slane %v2130, 2
        %v2214 = vsel %vm582, %v2212, %v2213
        %v2215 = vrot.slane %v2163, 2
        %v2216 = vrot.slane %v2131, 2
        %v2217 = vsel %vm582, %v2215, %v2216
        %v2218 = vrot.slane %v2164, 2
        %v2219 = vrot.slane %v2132, 2
        %v2220 = vsel %vm582, %v2218, %v2219
        %v2221 = vrot.slane %v2165, 2
        %v2222 = vrot.slane %v2133, 2
        %v2223 = vsel %vm582, %v2221, %v2222
        %v2224 = vrot.slane %v2166, 2
        %v2225 = vrot.slane %v2134, 2
        %v2226 = vsel %vm582, %v2224, %v2225
        %v2227 = vrot.slane %v2167, 2
        %v2228 = vrot.slane %v2135, 2
        %v2229 = vsel %vm582, %v2227, %v2228
        %v2230 = vrot.slane %v2168, 2
        %v2231 = vrot.slane %v2136, 2
        %v2232 = vsel %vm582, %v2230, %v2231
        %2233 = vrot.lane.b32.xlu0 %v2187, 32
        %v2234 = vpop.permute.xlu0 %2233
        %2235 = vrot.lane.b32.xlu0 %v2190, 32
        %v2236 = vpop.permute.xlu0 %2235
        %2237 = vrot.lane.b32.xlu0 %v2193, 32
        %v2238 = vpop.permute.xlu0 %2237
        %2239 = vrot.lane.b32.xlu0 %v2196, 32
        %v2240 = vpop.permute.xlu0 %2239
        %2241 = vrot.lane.b32.xlu0 %v2199, 32
        %v2242 = vpop.permute.xlu0 %2241
        %2243 = vrot.lane.b32.xlu0 %v2202, 32
        %v2244 = vpop.permute.xlu0 %2243
        %2245 = vrot.lane.b32.xlu0 %v2205, 32
        %v2246 = vpop.permute.xlu0 %2245
        %2247 = vrot.lane.b32.xlu0 %v2208, 32
        %v2248 = vpop.permute.xlu0 %2247
        %2249 = vrot.lane.b32.xlu0 %v2211, 32
        %v2250 = vpop.permute.xlu0 %2249
        %2251 = vrot.lane.b32.xlu0 %v2214, 32
        %v2252 = vpop.permute.xlu0 %2251
        %2253 = vrot.lane.b32.xlu0 %v2217, 32
        %v2254 = vpop.permute.xlu0 %2253
        %2255 = vrot.lane.b32.xlu0 %v2220, 32
        %v2256 = vpop.permute.xlu0 %2255
        %2257 = vrot.lane.b32.xlu0 %v2223, 32
        %v2258 = vpop.permute.xlu0 %2257
        %2259 = vrot.lane.b32.xlu0 %v2226, 32
        %v2260 = vpop.permute.xlu0 %2259
        %2261 = vrot.lane.b32.xlu0 %v2229, 32
        %v2262 = vpop.permute.xlu0 %2261
        %2263 = vrot.lane.b32.xlu0 %v2232, 32
        %v2264 = vpop.permute.xlu0 %2263
        %v2281 = vrot.slane %v2153, 4
        %v2282 = vrot.slane %v2121, 4
        %v2283 = vsel %vm1618, %v2281, %v2282
        %v2284 = vrot.slane %v2154, 4
        %v2285 = vrot.slane %v2122, 4
        %v2286 = vsel %vm1618, %v2284, %v2285
        %v2287 = vrot.slane %v2155, 4
        %v2288 = vrot.slane %v2123, 4
        %v2289 = vsel %vm1618, %v2287, %v2288
        %v2290 = vrot.slane %v2156, 4
        %v2291 = vrot.slane %v2124, 4
        %v2292 = vsel %vm1618, %v2290, %v2291
        %v2293 = vrot.slane %v2157, 4
        %v2294 = vrot.slane %v2125, 4
        %v2295 = vsel %vm1618, %v2293, %v2294
        %v2296 = vrot.slane %v2158, 4
        %v2297 = vrot.slane %v2126, 4
        %v2298 = vsel %vm1618, %v2296, %v2297
        %v2299 = vrot.slane %v2159, 4
        %v2300 = vrot.slane %v2127, 4
        %v2301 = vsel %vm1618, %v2299, %v2300
        %v2302 = vrot.slane %v2160, 4
        %v2303 = vrot.slane %v2128, 4
        %v2304 = vsel %vm1618, %v2302, %v2303
        %v2305 = vrot.slane %v2161, 4
        %v2306 = vrot.slane %v2129, 4
        %v2307 = vsel %vm1618, %v2305, %v2306
        %v2308 = vrot.slane %v2162, 4
        %v2309 = vrot.slane %v2130, 4
        %v2310 = vsel %vm1618, %v2308, %v2309
        %v2311 = vrot.slane %v2163, 4
        %v2312 = vrot.slane %v2131, 4
        %v2313 = vsel %vm1618, %v2311, %v2312
        %v2314 = vrot.slane %v2164, 4
        %v2315 = vrot.slane %v2132, 4
        %v2316 = vsel %vm1618, %v2314, %v2315
        %v2317 = vrot.slane %v2165, 4
        %v2318 = vrot.slane %v2133, 4
        %v2319 = vsel %vm1618, %v2317, %v2318
        %v2320 = vrot.slane %v2166, 4
        %v2321 = vrot.slane %v2134, 4
        %v2322 = vsel %vm1618, %v2320, %v2321
        %v2323 = vrot.slane %v2167, 4
        %v2324 = vrot.slane %v2135, 4
        %v2325 = vsel %vm1618, %v2323, %v2324
        %v2326 = vrot.slane %v2168, 4
        %v2327 = vrot.slane %v2136, 4
        %v2328 = vsel %vm1618, %v2326, %v2327
        %2329 = vrot.lane.b32.xlu0 %v2283, 64
        %v2330 = vpop.permute.xlu0 %2329
        %2331 = vrot.lane.b32.xlu0 %v2286, 64
        %v2332 = vpop.permute.xlu0 %2331
        %2333 = vrot.lane.b32.xlu0 %v2289, 64
        %v2334 = vpop.permute.xlu0 %2333
        %2335 = vrot.lane.b32.xlu0 %v2292, 64
        %v2336 = vpop.permute.xlu0 %2335
        %2337 = vrot.lane.b32.xlu0 %v2295, 64
        %v2338 = vpop.permute.xlu0 %2337
        %2339 = vrot.lane.b32.xlu0 %v2298, 64
        %v2340 = vpop.permute.xlu0 %2339
        %2341 = vrot.lane.b32.xlu0 %v2301, 64
        %v2342 = vpop.permute.xlu0 %2341
        %2343 = vrot.lane.b32.xlu0 %v2304, 64
        %v2344 = vpop.permute.xlu0 %2343
        %2345 = vrot.lane.b32.xlu0 %v2307, 64
        %v2346 = vpop.permute.xlu0 %2345
        %2347 = vrot.lane.b32.xlu0 %v2310, 64
        %v2348 = vpop.permute.xlu0 %2347
        %2349 = vrot.lane.b32.xlu0 %v2313, 64
        %v2350 = vpop.permute.xlu0 %2349
        %2351 = vrot.lane.b32.xlu0 %v2316, 64
        %v2352 = vpop.permute.xlu0 %2351
        %2353 = vrot.lane.b32.xlu0 %v2319, 64
        %v2354 = vpop.permute.xlu0 %2353
        %2355 = vrot.lane.b32.xlu0 %v2322, 64
        %v2356 = vpop.permute.xlu0 %2355
        %2357 = vrot.lane.b32.xlu0 %v2325, 64
        %v2358 = vpop.permute.xlu0 %2357
        %2359 = vrot.lane.b32.xlu0 %v2328, 64
        %v2360 = vpop.permute.xlu0 %2359
        %v2377 = vsel %vm679, %v2153, %v2234
        %v2378 = vsel %vm679, %v2154, %v2236
        %v2379 = vsel %vm679, %v2155, %v2238
        %v2380 = vsel %vm679, %v2156, %v2240
        %v2381 = vsel %vm679, %v2157, %v2242
        %v2382 = vsel %vm679, %v2158, %v2244
        %v2383 = vsel %vm679, %v2159, %v2246
        %v2384 = vsel %vm679, %v2160, %v2248
        %v2385 = vsel %vm679, %v2161, %v2250
        %v2386 = vsel %vm679, %v2162, %v2252
        %v2387 = vsel %vm679, %v2163, %v2254
        %v2388 = vsel %vm679, %v2164, %v2256
        %v2389 = vsel %vm679, %v2165, %v2258
        %v2390 = vsel %vm679, %v2166, %v2260
        %v2391 = vsel %vm679, %v2167, %v2262
        %v2392 = vsel %vm679, %v2168, %v2264
        %v2393 = vsel %vm696, %v2377, %v2330
        %v2394 = vsel %vm696, %v2378, %v2332
        %v2395 = vsel %vm696, %v2379, %v2334
        %v2396 = vsel %vm696, %v2380, %v2336
        %v2397 = vsel %vm696, %v2381, %v2338
        %v2398 = vsel %vm696, %v2382, %v2340
        %v2399 = vsel %vm696, %v2383, %v2342
        %v2400 = vsel %vm696, %v2384, %v2344
        %v2401 = vsel %vm696, %v2385, %v2346
        %v2402 = vsel %vm696, %v2386, %v2348
        %v2403 = vsel %vm696, %v2387, %v2350
        %v2404 = vsel %vm696, %v2388, %v2352
        %v2405 = vsel %vm696, %v2389, %v2354
        %v2406 = vsel %vm696, %v2390, %v2356
        %v2407 = vsel %vm696, %v2391, %v2358
        %v2408 = vsel %vm696, %v2392, %v2360
        %s2409 = scalar_lea.vmem %s5, 96
        %v2410 = vld [vmem:[%s2409] sm:$0xff]
        %v2411 = vld [vmem:[%s2409 + $0x8] sm:$0xff]
        %v2412 = vld [vmem:[%s2409 + $0x10] sm:$0xff]
        %v2413 = vld [vmem:[%s2409 + $0x18] sm:$0xff]
        %v2414 = vld [vmem:[%s2409 + $0x20] sm:$0xff]
        %v2415 = vld [vmem:[%s2409 + $0x28] sm:$0xff]
        %v2416 = vld [vmem:[%s2409 + $0x30] sm:$0xff]
        %v2417 = vld [vmem:[%s2409 + $0x38] sm:$0xff]
        %v2418 = vld [vmem:[%s2409 + $0x40] sm:$0xff]
        %v2419 = vld [vmem:[%s2409 + $0x48] sm:$0xff]
        %v2420 = vld [vmem:[%s2409 + $0x50] sm:$0xff]
        %v2421 = vld [vmem:[%s2409 + $0x58] sm:$0xff]
        %s2422 = scalar_lea.vmem %s6, 1
        %v2423 = vld [vmem:[%s2422] sm:$0x1]
        %v2425 = vlaneseq
        %v2426 = vshrl.u32 %v2425, 7
        %v2427 = vsub.s32 0, %v2426
        %v2428 = vrot.slane %v2423, %v2427
        %v2431 = vsel %vm732, %v2393, 0
        %v2434 = vsel %vm732, %v2394, 0
        %v2437 = vsel %vm732, %v2395, 0
        %v2440 = vsel %vm732, %v2396, 0
        %v2443 = vsel %vm732, %v2397, 0
        %v2446 = vsel %vm732, %v2398, 0
        %v2449 = vsel %vm732, %v2399, 0
        %v2452 = vsel %vm732, %v2400, 0
        %v2455 = vsel %vm732, %v2401, 0
        %v2458 = vsel %vm732, %v2402, 0
        %v2461 = vsel %vm732, %v2403, 0
        %v2464 = vsel %vm732, %v2404, 0
        %v2467 = vsel %vm732, %v2405, 0
        %v2470 = vsel %vm732, %v2406, 0
        %v2473 = vsel %vm732, %v2407, 0
        %v2476 = vsel %vm732, %v2408, 0
        %2478 = vmatprep.subr.mxu0 0.0
        %2479 = vmatpush1.msra.mxu0 %v2410
        %2480 = vmatprep.subr.mxu0 0.0
        %2481 = vmatpush1.msra.mxu0 %v2411
        %2482 = vmatprep.subr.mxu0 0.0
        %2483 = vmatpush1.msra.mxu0 %v2412
        %2484 = vmatprep.subr.mxu0 0.0
        %2485 = vmatpush1.msra.mxu0 %v2413
        %2486 = vmatprep.subr.mxu0 0.0
        %2487 = vmatpush1.msra.mxu0 %v2414
        %2488 = vmatprep.subr.mxu0 0.0
        %2489 = vmatpush1.msra.mxu0 %v2415
        %2490 = vmatprep.subr.mxu0 0.0
        %2491 = vmatpush1.msra.mxu0 %v2416
        %2492 = vmatprep.subr.mxu0 0.0
        %2493 = vmatpush1.msra.mxu0 %v2417
        %2494 = vmatprep.subr.mxu0 0.0
        %2495 = vmatpush1.msra.mxu0 %v2418
        %2496 = vmatprep.subr.mxu0 0.0
        %2497 = vmatpush1.msra.mxu0 %v2419
        %2498 = vmatprep.subr.mxu0 0.0
        %2499 = vmatpush1.msra.mxu0 %v2420
        %2500 = vmatprep.subr.mxu0 0.0
        %2501 = vmatpush1.msra.mxu0 %v2421
        %2502 = vmatprep.subr.mxu0 0.0
        %2503 = vmatpush1.msra.mxu0 0.0
        %2504 = vmatprep.subr.mxu0 0.0
        %2505 = vmatpush1.msra.mxu0 0.0
        %2506 = vmatprep.subr.mxu0 0.0
        %2507 = vmatpush1.msra.mxu0 0.0
        %2508 = vmatprep.subr.mxu0 0.0
        %2509 = vmatpush1.msra.mxu0 0.0
        %2510 = vmatprep.subr.mxu0 0.0
        %2511 = vmatpush1.msra.mxu0 0.0
        %2512 = vmatprep.subr.mxu0 0.0
        %2513 = vmatpush1.msra.mxu0 0.0
        %2514 = vmatprep.subr.mxu0 0.0
        %2515 = vmatpush1.msra.mxu0 0.0
        %2516 = vmatprep.subr.mxu0 0.0
        %2517 = vmatpush1.msra.mxu0 0.0
        %2518 = vmatprep.subr.mxu0 0.0
        %2519 = vmatpush1.msra.mxu0 0.0
        %2520 = vmatprep.subr.mxu0 0.0
        %2521 = vmatpush1.msra.mxu0 0.0
        %2522 = vmatprep.subr.mxu0 0.0
        %2523 = vmatpush1.msra.mxu0 0.0
        %2524 = vmatprep.subr.mxu0 0.0
        %2525 = vmatpush1.msra.mxu0 0.0
        %2526 = vmatprep.subr.mxu0 0.0
        %2527 = vmatpush1.msra.mxu0 0.0
        %2528 = vmatprep.subr.mxu0 0.0
        %2529 = vmatpush1.msra.mxu0 0.0
        %2530 = vmatprep.subr.mxu0 0.0
        %2531 = vmatpush1.msra.mxu0 0.0
        %2532 = vmatprep.subr.mxu0 0.0
        %2533 = vmatpush1.msra.mxu0 0.0
        %2534 = vmatprep.subr.mxu0 0.0
        %2535 = vmatpush1.msra.mxu0 0.0
        %2536 = vmatprep.subr.mxu0 0.0
        %2537 = vmatpush1.msra.mxu0 0.0
        %2538 = vmatprep.subr.mxu0 0.0
        %2539 = vmatpush1.msra.mxu0 0.0
        %2540 = vmatprep.subr.mxu0 0.0
        %2541 = vmatpush1.msra.mxu0 0.0
        %2542 = vmatprep.mubr.f32.mxu0 0.0
        %2543 = vmatmul.mubr.f32.gmra.mrb[0].mxu0 %v2431
        %v2544 = vpop.f32.mrb[0].mxu0
        %v2545 = vadd.f32 %v2428, %v2544
        %v2546 = vpop.f32.mrb[0].mxu0
        %2547 = vmatprep.mubr.f32.mxu0 0.0
        %2548 = vmatmul.mubr.f32.gmra.mrb[0].mxu0 %v2434
        %v2549 = vpop.f32.mrb[0].mxu0
        %v2550 = vadd.f32 %v2428, %v2549
        %v2551 = vpop.f32.mrb[0].mxu0
        %2552 = vmatprep.mubr.f32.mxu0 0.0
        %2553 = vmatmul.mubr.f32.gmra.mrb[0].mxu0 %v2437
        %v2554 = vpop.f32.mrb[0].mxu0
        %v2555 = vadd.f32 %v2428, %v2554
        %v2556 = vpop.f32.mrb[0].mxu0
        %2557 = vmatprep.mubr.f32.mxu0 0.0
        %2558 = vmatmul.mubr.f32.gmra.mrb[0].mxu0 %v2440
        %v2559 = vpop.f32.mrb[0].mxu0
        %v2560 = vadd.f32 %v2428, %v2559
        %v2561 = vpop.f32.mrb[0].mxu0
        %2562 = vmatprep.mubr.f32.mxu0 0.0
        %2563 = vmatmul.mubr.f32.gmra.mrb[0].mxu0 %v2443
        %v2564 = vpop.f32.mrb[0].mxu0
        %v2565 = vadd.f32 %v2428, %v2564
        %v2566 = vpop.f32.mrb[0].mxu0
        %2567 = vmatprep.mubr.f32.mxu0 0.0
        %2568 = vmatmul.mubr.f32.gmra.mrb[0].mxu0 %v2446
        %v2569 = vpop.f32.mrb[0].mxu0
        %v2570 = vadd.f32 %v2428, %v2569
        %v2571 = vpop.f32.mrb[0].mxu0
        %2572 = vmatprep.mubr.f32.mxu0 0.0
        %2573 = vmatmul.mubr.f32.gmra.mrb[0].mxu0 %v2449
        %v2574 = vpop.f32.mrb[0].mxu0
        %v2575 = vadd.f32 %v2428, %v2574
        %v2576 = vpop.f32.mrb[0].mxu0
        %2577 = vmatprep.mubr.f32.mxu0 0.0
        %2578 = vmatmul.mubr.f32.gmra.mrb[0].mxu0 %v2452
        %v2579 = vpop.f32.mrb[0].mxu0
        %v2580 = vadd.f32 %v2428, %v2579
        %v2581 = vpop.f32.mrb[0].mxu0
        %2582 = vmatprep.mubr.f32.mxu0 0.0
        %2583 = vmatmul.mubr.f32.gmra.mrb[0].mxu0 %v2455
        %v2584 = vpop.f32.mrb[0].mxu0
        %v2585 = vadd.f32 %v2428, %v2584
        %v2586 = vpop.f32.mrb[0].mxu0
        %2587 = vmatprep.mubr.f32.mxu0 0.0
        %2588 = vmatmul.mubr.f32.gmra.mrb[0].mxu0 %v2458
        %v2589 = vpop.f32.mrb[0].mxu0
        %v2590 = vadd.f32 %v2428, %v2589
        %v2591 = vpop.f32.mrb[0].mxu0
        %2592 = vmatprep.mubr.f32.mxu0 0.0
        %2593 = vmatmul.mubr.f32.gmra.mrb[0].mxu0 %v2461
        %v2594 = vpop.f32.mrb[0].mxu0
        %v2595 = vadd.f32 %v2428, %v2594
        %v2596 = vpop.f32.mrb[0].mxu0
        %2597 = vmatprep.mubr.f32.mxu0 0.0
        %2598 = vmatmul.mubr.f32.gmra.mrb[0].mxu0 %v2464
        %v2599 = vpop.f32.mrb[0].mxu0
        %v2600 = vadd.f32 %v2428, %v2599
        %v2601 = vpop.f32.mrb[0].mxu0
        %2602 = vmatprep.mubr.f32.mxu0 0.0
        %2603 = vmatmul.mubr.f32.gmra.mrb[0].mxu0 %v2467
        %v2604 = vpop.f32.mrb[0].mxu0
        %v2605 = vadd.f32 %v2428, %v2604
        %v2606 = vpop.f32.mrb[0].mxu0
        %2607 = vmatprep.mubr.f32.mxu0 0.0
        %2608 = vmatmul.mubr.f32.gmra.mrb[0].mxu0 %v2470
        %v2609 = vpop.f32.mrb[0].mxu0
        %v2610 = vadd.f32 %v2428, %v2609
        %v2611 = vpop.f32.mrb[0].mxu0
        %2612 = vmatprep.mubr.f32.mxu0 0.0
        %2613 = vmatmul.mubr.f32.gmra.mrb[0].mxu0 %v2473
        %v2614 = vpop.f32.mrb[0].mxu0
        %v2615 = vadd.f32 %v2428, %v2614
        %v2616 = vpop.f32.mrb[0].mxu0
        %2617 = vmatprep.mubr.f32.mxu0 0.0
        %2618 = vmatmul.mubr.f32.gmra.mrb[0].mxu0 %v2476
        %v2619 = vpop.f32.mrb[0].mxu0
        %v2620 = vadd.f32 %v2428, %v2619
        %v2621 = vpop.f32.mrb[0].mxu0
        %2622 = vdwg.mxu0
        %v2623 = vmax.f32 %v2545, 0.0
        %v2624 = vmax.f32 %v2550, 0.0
        %v2625 = vmax.f32 %v2555, 0.0
        %v2626 = vmax.f32 %v2560, 0.0
        %v2627 = vmax.f32 %v2565, 0.0
        %v2628 = vmax.f32 %v2570, 0.0
        %v2629 = vmax.f32 %v2575, 0.0
        %v2630 = vmax.f32 %v2580, 0.0
        %v2631 = vmax.f32 %v2585, 0.0
        %v2632 = vmax.f32 %v2590, 0.0
        %v2633 = vmax.f32 %v2595, 0.0
        %v2634 = vmax.f32 %v2600, 0.0
        %v2635 = vmax.f32 %v2605, 0.0
        %v2636 = vmax.f32 %v2610, 0.0
        %v2637 = vmax.f32 %v2615, 0.0
        %v2638 = vmax.f32 %v2620, 0.0
        %v2639 = vadd.f32 %v1458, %v2623
        %v2640 = vadd.f32 %v1459, %v2624
        %v2641 = vadd.f32 %v1460, %v2625
        %v2642 = vadd.f32 %v1461, %v2626
        %v2643 = vadd.f32 %v1462, %v2627
        %v2644 = vadd.f32 %v1463, %v2628
        %v2645 = vadd.f32 %v1464, %v2629
        %v2646 = vadd.f32 %v1465, %v2630
        %v2647 = vadd.f32 %v1466, %v2631
        %v2648 = vadd.f32 %v1467, %v2632
        %v2649 = vadd.f32 %v1468, %v2633
        %v2650 = vadd.f32 %v1469, %v2634
        %v2651 = vadd.f32 %v1470, %v2635
        %v2652 = vadd.f32 %v1471, %v2636
        %v2653 = vadd.f32 %v1472, %v2637
        %v2654 = vadd.f32 %v1473, %v2638
        %v2655 = vadd.f32 %v2623, %v1554
        %v2656 = vadd.f32 %v2624, %v1555
        %v2657 = vadd.f32 %v2625, %v1556
        %v2658 = vadd.f32 %v2626, %v1557
        %v2659 = vadd.f32 %v2627, %v1558
        %v2660 = vadd.f32 %v2628, %v1559
        %v2661 = vadd.f32 %v2629, %v1560
        %v2662 = vadd.f32 %v2630, %v1561
        %v2663 = vadd.f32 %v2631, %v1562
        %v2664 = vadd.f32 %v2632, %v1563
        %v2665 = vadd.f32 %v2633, %v1564
        %v2666 = vadd.f32 %v2634, %v1565
        %v2667 = vadd.f32 %v2635, %v1566
        %v2668 = vadd.f32 %v2636, %v1567
        %v2669 = vadd.f32 %v2637, %v1568
        %v2670 = vadd.f32 %v2638, %v1569
        %v2671 = vmax.f32 %v2655, 0.0
        %v2672 = vmax.f32 %v2656, 0.0
        %v2673 = vmax.f32 %v2657, 0.0
        %v2674 = vmax.f32 %v2658, 0.0
        %v2675 = vmax.f32 %v2659, 0.0
        %v2676 = vmax.f32 %v2660, 0.0
        %v2677 = vmax.f32 %v2661, 0.0
        %v2678 = vmax.f32 %v2662, 0.0
        %v2679 = vmax.f32 %v2663, 0.0
        %v2680 = vmax.f32 %v2664, 0.0
        %v2681 = vmax.f32 %v2665, 0.0
        %v2682 = vmax.f32 %v2666, 0.0
        %v2683 = vmax.f32 %v2667, 0.0
        %v2684 = vmax.f32 %v2668, 0.0
        %v2685 = vmax.f32 %v2669, 0.0
        %v2686 = vmax.f32 %v2670, 0.0
        %v2703 = vrot.slane %v2671, 4
        %v2704 = vrot.slane %v2672, 4
        %v2705 = vrot.slane %v2673, 4
        %v2706 = vrot.slane %v2674, 4
        %v2707 = vrot.slane %v2675, 4
        %v2708 = vrot.slane %v2676, 4
        %v2709 = vrot.slane %v2677, 4
        %v2710 = vrot.slane %v2678, 4
        %v2711 = vrot.slane %v2679, 4
        %v2712 = vrot.slane %v2680, 4
        %v2713 = vrot.slane %v2681, 4
        %v2714 = vrot.slane %v2682, 4
        %v2715 = vrot.slane %v2683, 4
        %v2716 = vrot.slane %v2684, 4
        %v2717 = vrot.slane %v2685, 4
        %v2718 = vrot.slane %v2686, 4
        %v2735 = vsel %vm1618, 0.0, %v2703
        %v2736 = vsel %vm1618, 0.0, %v2704
        %v2737 = vsel %vm1618, 0.0, %v2705
        %v2738 = vsel %vm1618, 0.0, %v2706
        %v2739 = vsel %vm1618, 0.0, %v2707
        %v2740 = vsel %vm1618, 0.0, %v2708
        %v2741 = vsel %vm1618, 0.0, %v2709
        %v2742 = vsel %vm1618, 0.0, %v2710
        %v2743 = vsel %vm1618, 0.0, %v2711
        %v2744 = vsel %vm1618, 0.0, %v2712
        %v2745 = vsel %vm1618, 0.0, %v2713
        %v2746 = vsel %vm1618, 0.0, %v2714
        %v2747 = vsel %vm1618, 0.0, %v2715
        %v2748 = vsel %vm1618, 0.0, %v2716
        %v2749 = vsel %vm1618, 0.0, %v2717
        %v2750 = vsel %vm1618, 0.0, %v2718
        %v2767 = vrot.slane %v2735, 4
        %v2768 = vrot.slane %v2703, 4
        %v2769 = vsel %vm1618, %v2767, %v2768
        %v2770 = vrot.slane %v2736, 4
        %v2771 = vrot.slane %v2704, 4
        %v2772 = vsel %vm1618, %v2770, %v2771
        %v2773 = vrot.slane %v2737, 4
        %v2774 = vrot.slane %v2705, 4
        %v2775 = vsel %vm1618, %v2773, %v2774
        %v2776 = vrot.slane %v2738, 4
        %v2777 = vrot.slane %v2706, 4
        %v2778 = vsel %vm1618, %v2776, %v2777
        %v2779 = vrot.slane %v2739, 4
        %v2780 = vrot.slane %v2707, 4
        %v2781 = vsel %vm1618, %v2779, %v2780
        %v2782 = vrot.slane %v2740, 4
        %v2783 = vrot.slane %v2708, 4
        %v2784 = vsel %vm1618, %v2782, %v2783
        %v2785 = vrot.slane %v2741, 4
        %v2786 = vrot.slane %v2709, 4
        %v2787 = vsel %vm1618, %v2785, %v2786
        %v2788 = vrot.slane %v2742, 4
        %v2789 = vrot.slane %v2710, 4
        %v2790 = vsel %vm1618, %v2788, %v2789
        %v2791 = vrot.slane %v2743, 4
        %v2792 = vrot.slane %v2711, 4
        %v2793 = vsel %vm1618, %v2791, %v2792
        %v2794 = vrot.slane %v2744, 4
        %v2795 = vrot.slane %v2712, 4
        %v2796 = vsel %vm1618, %v2794, %v2795
        %v2797 = vrot.slane %v2745, 4
        %v2798 = vrot.slane %v2713, 4
        %v2799 = vsel %vm1618, %v2797, %v2798
        %v2800 = vrot.slane %v2746, 4
        %v2801 = vrot.slane %v2714, 4
        %v2802 = vsel %vm1618, %v2800, %v2801
        %v2803 = vrot.slane %v2747, 4
        %v2804 = vrot.slane %v2715, 4
        %v2805 = vsel %vm1618, %v2803, %v2804
        %v2806 = vrot.slane %v2748, 4
        %v2807 = vrot.slane %v2716, 4
        %v2808 = vsel %vm1618, %v2806, %v2807
        %v2809 = vrot.slane %v2749, 4
        %v2810 = vrot.slane %v2717, 4
        %v2811 = vsel %vm1618, %v2809, %v2810
        %v2812 = vrot.slane %v2750, 4
        %v2813 = vrot.slane %v2718, 4
        %v2814 = vsel %vm1618, %v2812, %v2813
        %2815 = vrot.lane.b32.xlu0 %v2769, 32
        %v2816 = vpop.permute.xlu0 %2815
        %2817 = vrot.lane.b32.xlu0 %v2772, 32
        %v2818 = vpop.permute.xlu0 %2817
        %2819 = vrot.lane.b32.xlu0 %v2775, 32
        %v2820 = vpop.permute.xlu0 %2819
        %2821 = vrot.lane.b32.xlu0 %v2778, 32
        %v2822 = vpop.permute.xlu0 %2821
        %2823 = vrot.lane.b32.xlu0 %v2781, 32
        %v2824 = vpop.permute.xlu0 %2823
        %2825 = vrot.lane.b32.xlu0 %v2784, 32
        %v2826 = vpop.permute.xlu0 %2825
        %2827 = vrot.lane.b32.xlu0 %v2787, 32
        %v2828 = vpop.permute.xlu0 %2827
        %2829 = vrot.lane.b32.xlu0 %v2790, 32
        %v2830 = vpop.permute.xlu0 %2829
        %2831 = vrot.lane.b32.xlu0 %v2793, 32
        %v2832 = vpop.permute.xlu0 %2831
        %2833 = vrot.lane.b32.xlu0 %v2796, 32
        %v2834 = vpop.permute.xlu0 %2833
        %2835 = vrot.lane.b32.xlu0 %v2799, 32
        %v2836 = vpop.permute.xlu0 %2835
        %2837 = vrot.lane.b32.xlu0 %v2802, 32
        %v2838 = vpop.permute.xlu0 %2837
        %2839 = vrot.lane.b32.xlu0 %v2805, 32
        %v2840 = vpop.permute.xlu0 %2839
        %2841 = vrot.lane.b32.xlu0 %v2808, 32
        %v2842 = vpop.permute.xlu0 %2841
        %2843 = vrot.lane.b32.xlu0 %v2811, 32
        %v2844 = vpop.permute.xlu0 %2843
        %2845 = vrot.lane.b32.xlu0 %v2814, 32
        %v2846 = vpop.permute.xlu0 %2845
        %v2863 = vsel %vm679, %v2735, %v2816
        %v2864 = vsel %vm679, %v2736, %v2818
        %v2865 = vsel %vm679, %v2737, %v2820
        %v2866 = vsel %vm679, %v2738, %v2822
        %v2867 = vsel %vm679, %v2739, %v2824
        %v2868 = vsel %vm679, %v2740, %v2826
        %v2869 = vsel %vm679, %v2741, %v2828
        %v2870 = vsel %vm679, %v2742, %v2830
        %v2871 = vsel %vm679, %v2743, %v2832
        %v2872 = vsel %vm679, %v2744, %v2834
        %v2873 = vsel %vm679, %v2745, %v2836
        %v2874 = vsel %vm679, %v2746, %v2838
        %v2875 = vsel %vm679, %v2747, %v2840
        %v2876 = vsel %vm679, %v2748, %v2842
        %v2877 = vsel %vm679, %v2749, %v2844
        %v2878 = vsel %vm679, %v2750, %v2846
        %s2879 = scalar_lea.vmem %s3, 192
        %v2880 = vld [vmem:[%s2879 + $0x20] sm:$0xff]
        %v2881 = vld [vmem:[%s2879 + $0x28] sm:$0xff]
        %v2882 = vld [vmem:[%s2879 + $0x30] sm:$0xff]
        %v2883 = vld [vmem:[%s2879 + $0x38] sm:$0xff]
        %v2884 = vld [vmem:[%s2879 + $0x40] sm:$0xff]
        %v2885 = vld [vmem:[%s2879 + $0x48] sm:$0xff]
        %v2886 = vld [vmem:[%s2879 + $0x50] sm:$0xff]
        %v2887 = vld [vmem:[%s2879 + $0x58] sm:$0xff]
        %s2888 = scalar_lea.vmem %s4, 2
        %v2889 = vld [vmem:[%s2888] sm:$0x1]
        %v2891 = vlaneseq
        %v2892 = vshrl.u32 %v2891, 7
        %v2893 = vsub.s32 0, %v2892
        %v2894 = vrot.slane %v2889, %v2893
        %v2897 = vsel %vm696, %v2863, 0
        %v2900 = vsel %vm696, %v2864, 0
        %v2903 = vsel %vm696, %v2865, 0
        %v2906 = vsel %vm696, %v2866, 0
        %v2909 = vsel %vm696, %v2867, 0
        %v2912 = vsel %vm696, %v2868, 0
        %v2915 = vsel %vm696, %v2869, 0
        %v2918 = vsel %vm696, %v2870, 0
        %v2921 = vsel %vm696, %v2871, 0
        %v2924 = vsel %vm696, %v2872, 0
        %v2927 = vsel %vm696, %v2873, 0
        %v2930 = vsel %vm696, %v2874, 0
        %v2933 = vsel %vm696, %v2875, 0
        %v2936 = vsel %vm696, %v2876, 0
        %v2939 = vsel %vm696, %v2877, 0
        %v2942 = vsel %vm696, %v2878, 0
        %2944 = vmatprep.subr.mxu0 0.0
        %2945 = vmatpush1.msra.mxu0 %v2880
        %2946 = vmatprep.subr.mxu0 0.0
        %2947 = vmatpush1.msra.mxu0 %v2881
        %2948 = vmatprep.subr.mxu0 0.0
        %2949 = vmatpush1.msra.mxu0 %v2882
        %2950 = vmatprep.subr.mxu0 0.0
        %2951 = vmatpush1.msra.mxu0 %v2883
        %2952 = vmatprep.subr.mxu0 0.0
        %2953 = vmatpush1.msra.mxu0 %v2884
        %2954 = vmatprep.subr.mxu0 0.0
        %2955 = vmatpush1.msra.mxu0 %v2885
        %2956 = vmatprep.subr.mxu0 0.0
        %2957 = vmatpush1.msra.mxu0 %v2886
        %2958 = vmatprep.subr.mxu0 0.0
        %2959 = vmatpush1.msra.mxu0 %v2887
        %2960 = vmatprep.subr.mxu0 0.0
        %2961 = vmatpush1.msra.mxu0 0.0
        %2962 = vmatprep.subr.mxu0 0.0
        %2963 = vmatpush1.msra.mxu0 0.0
        %2964 = vmatprep.subr.mxu0 0.0
        %2965 = vmatpush1.msra.mxu0 0.0
        %2966 = vmatprep.subr.mxu0 0.0
        %2967 = vmatpush1.msra.mxu0 0.0
        %2968 = vmatprep.subr.mxu0 0.0
        %2969 = vmatpush1.msra.mxu0 0.0
        %2970 = vmatprep.subr.mxu0 0.0
        %2971 = vmatpush1.msra.mxu0 0.0
        %2972 = vmatprep.subr.mxu0 0.0
        %2973 = vmatpush1.msra.mxu0 0.0
        %2974 = vmatprep.subr.mxu0 0.0
        %2975 = vmatpush1.msra.mxu0 0.0
        %2976 = vmatprep.subr.mxu0 0.0
        %2977 = vmatpush1.msra.mxu0 0.0
        %2978 = vmatprep.subr.mxu0 0.0
        %2979 = vmatpush1.msra.mxu0 0.0
        %2980 = vmatprep.subr.mxu0 0.0
        %2981 = vmatpush1.msra.mxu0 0.0
        %2982 = vmatprep.subr.mxu0 0.0
        %2983 = vmatpush1.msra.mxu0 0.0
        %2984 = vmatprep.subr.mxu0 0.0
        %2985 = vmatpush1.msra.mxu0 0.0
        %2986 = vmatprep.subr.mxu0 0.0
        %2987 = vmatpush1.msra.mxu0 0.0
        %2988 = vmatprep.subr.mxu0 0.0
        %2989 = vmatpush1.msra.mxu0 0.0
        %2990 = vmatprep.subr.mxu0 0.0
        %2991 = vmatpush1.msra.mxu0 0.0
        %2992 = vmatprep.subr.mxu0 0.0
        %2993 = vmatpush1.msra.mxu0 0.0
        %2994 = vmatprep.subr.mxu0 0.0
        %2995 = vmatpush1.msra.mxu0 0.0
        %2996 = vmatprep.subr.mxu0 0.0
        %2997 = vmatpush1.msra.mxu0 0.0
        %2998 = vmatprep.subr.mxu0 0.0
        %2999 = vmatpush1.msra.mxu0 0.0
        %3000 = vmatprep.subr.mxu0 0.0
        %3001 = vmatpush1.msra.mxu0 0.0
        %3002 = vmatprep.subr.mxu0 0.0
        %3003 = vmatpush1.msra.mxu0 0.0
        %3004 = vmatprep.subr.mxu0 0.0
        %3005 = vmatpush1.msra.mxu0 0.0
        %3006 = vmatprep.subr.mxu0 0.0
        %3007 = vmatpush1.msra.mxu0 0.0
        %3008 = vmatprep.mubr.f32.mxu0 0.0
        %3009 = vmatmul.mubr.f32.gmra.mrb[0].mxu0 %v2897
        %v3010 = vpop.f32.mrb[0].mxu0
        %v3011 = vadd.f32 %v2894, %v3010
        %v3012 = vpop.f32.mrb[0].mxu0
        %3013 = vmatprep.mubr.f32.mxu0 0.0
        %3014 = vmatmul.mubr.f32.gmra.mrb[0].mxu0 %v2900
        %v3015 = vpop.f32.mrb[0].mxu0
        %v3016 = vadd.f32 %v2894, %v3015
        %v3017 = vpop.f32.mrb[0].mxu0
        %3018 = vmatprep.mubr.f32.mxu0 0.0
        %3019 = vmatmul.mubr.f32.gmra.mrb[0].mxu0 %v2903
        %v3020 = vpop.f32.mrb[0].mxu0
        %v3021 = vadd.f32 %v2894, %v3020
        %v3022 = vpop.f32.mrb[0].mxu0
        %3023 = vmatprep.mubr.f32.mxu0 0.0
        %3024 = vmatmul.mubr.f32.gmra.mrb[0].mxu0 %v2906
        %v3025 = vpop.f32.mrb[0].mxu0
        %v3026 = vadd.f32 %v2894, %v3025
        %v3027 = vpop.f32.mrb[0].mxu0
        %3028 = vmatprep.mubr.f32.mxu0 0.0
        %3029 = vmatmul.mubr.f32.gmra.mrb[0].mxu0 %v2909
        %v3030 = vpop.f32.mrb[0].mxu0
        %v3031 = vadd.f32 %v2894, %v3030
        %v3032 = vpop.f32.mrb[0].mxu0
        %3033 = vmatprep.mubr.f32.mxu0 0.0
        %3034 = vmatmul.mubr.f32.gmra.mrb[0].mxu0 %v2912
        %v3035 = vpop.f32.mrb[0].mxu0
        %v3036 = vadd.f32 %v2894, %v3035
        %v3037 = vpop.f32.mrb[0].mxu0
        %3038 = vmatprep.mubr.f32.mxu0 0.0
        %3039 = vmatmul.mubr.f32.gmra.mrb[0].mxu0 %v2915
        %v3040 = vpop.f32.mrb[0].mxu0
        %v3041 = vadd.f32 %v2894, %v3040
        %v3042 = vpop.f32.mrb[0].mxu0
        %3043 = vmatprep.mubr.f32.mxu0 0.0
        %3044 = vmatmul.mubr.f32.gmra.mrb[0].mxu0 %v2918
        %v3045 = vpop.f32.mrb[0].mxu0
        %v3046 = vadd.f32 %v2894, %v3045
        %v3047 = vpop.f32.mrb[0].mxu0
        %3048 = vmatprep.mubr.f32.mxu0 0.0
        %3049 = vmatmul.mubr.f32.gmra.mrb[0].mxu0 %v2921
        %v3050 = vpop.f32.mrb[0].mxu0
        %v3051 = vadd.f32 %v2894, %v3050
        %v3052 = vpop.f32.mrb[0].mxu0
        %3053 = vmatprep.mubr.f32.mxu0 0.0
        %3054 = vmatmul.mubr.f32.gmra.mrb[0].mxu0 %v2924
        %v3055 = vpop.f32.mrb[0].mxu0
        %v3056 = vadd.f32 %v2894, %v3055
        %v3057 = vpop.f32.mrb[0].mxu0
        %3058 = vmatprep.mubr.f32.mxu0 0.0
        %3059 = vmatmul.mubr.f32.gmra.mrb[0].mxu0 %v2927
        %v3060 = vpop.f32.mrb[0].mxu0
        %v3061 = vadd.f32 %v2894, %v3060
        %v3062 = vpop.f32.mrb[0].mxu0
        %3063 = vmatprep.mubr.f32.mxu0 0.0
        %3064 = vmatmul.mubr.f32.gmra.mrb[0].mxu0 %v2930
        %v3065 = vpop.f32.mrb[0].mxu0
        %v3066 = vadd.f32 %v2894, %v3065
        %v3067 = vpop.f32.mrb[0].mxu0
        %3068 = vmatprep.mubr.f32.mxu0 0.0
        %3069 = vmatmul.mubr.f32.gmra.mrb[0].mxu0 %v2933
        %v3070 = vpop.f32.mrb[0].mxu0
        %v3071 = vadd.f32 %v2894, %v3070
        %v3072 = vpop.f32.mrb[0].mxu0
        %3073 = vmatprep.mubr.f32.mxu0 0.0
        %3074 = vmatmul.mubr.f32.gmra.mrb[0].mxu0 %v2936
        %v3075 = vpop.f32.mrb[0].mxu0
        %v3076 = vadd.f32 %v2894, %v3075
        %v3077 = vpop.f32.mrb[0].mxu0
        %3078 = vmatprep.mubr.f32.mxu0 0.0
        %3079 = vmatmul.mubr.f32.gmra.mrb[0].mxu0 %v2939
        %v3080 = vpop.f32.mrb[0].mxu0
        %v3081 = vadd.f32 %v2894, %v3080
        %v3082 = vpop.f32.mrb[0].mxu0
        %3083 = vmatprep.mubr.f32.mxu0 0.0
        %3084 = vmatmul.mubr.f32.gmra.mrb[0].mxu0 %v2942
        %v3085 = vpop.f32.mrb[0].mxu0
        %v3086 = vadd.f32 %v2894, %v3085
        %v3087 = vpop.f32.mrb[0].mxu0
        %3088 = vdwg.mxu0
        %v3089 = vmax.f32 %v3011, 0.0
        %v3090 = vmax.f32 %v3016, 0.0
        %v3091 = vmax.f32 %v3021, 0.0
        %v3092 = vmax.f32 %v3026, 0.0
        %v3093 = vmax.f32 %v3031, 0.0
        %v3094 = vmax.f32 %v3036, 0.0
        %v3095 = vmax.f32 %v3041, 0.0
        %v3096 = vmax.f32 %v3046, 0.0
        %v3097 = vmax.f32 %v3051, 0.0
        %v3098 = vmax.f32 %v3056, 0.0
        %v3099 = vmax.f32 %v3061, 0.0
        %v3100 = vmax.f32 %v3066, 0.0
        %v3101 = vmax.f32 %v3071, 0.0
        %v3102 = vmax.f32 %v3076, 0.0
        %v3103 = vmax.f32 %v3081, 0.0
        %v3104 = vmax.f32 %v3086, 0.0
        %v3121 = vrot.slane %v3089, 4
        %v3122 = vrot.slane %v3090, 4
        %v3123 = vrot.slane %v3091, 4
        %v3124 = vrot.slane %v3092, 4
        %v3125 = vrot.slane %v3093, 4
        %v3126 = vrot.slane %v3094, 4
        %v3127 = vrot.slane %v3095, 4
        %v3128 = vrot.slane %v3096, 4
        %v3129 = vrot.slane %v3097, 4
        %v3130 = vrot.slane %v3098, 4
        %v3131 = vrot.slane %v3099, 4
        %v3132 = vrot.slane %v3100, 4
        %v3133 = vrot.slane %v3101, 4
        %v3134 = vrot.slane %v3102, 4
        %v3135 = vrot.slane %v3103, 4
        %v3136 = vrot.slane %v3104, 4
        %v3153 = vsel %vm1618, 0.0, %v3121
        %v3154 = vsel %vm1618, 0.0, %v3122
        %v3155 = vsel %vm1618, 0.0, %v3123
        %v3156 = vsel %vm1618, 0.0, %v3124
        %v3157 = vsel %vm1618, 0.0, %v3125
        %v3158 = vsel %vm1618, 0.0, %v3126
        %v3159 = vsel %vm1618, 0.0, %v3127
        %v3160 = vsel %vm1618, 0.0, %v3128
        %v3161 = vsel %vm1618, 0.0, %v3129
        %v3162 = vsel %vm1618, 0.0, %v3130
        %v3163 = vsel %vm1618, 0.0, %v3131
        %v3164 = vsel %vm1618, 0.0, %v3132
        %v3165 = vsel %vm1618, 0.0, %v3133
        %v3166 = vsel %vm1618, 0.0, %v3134
        %v3167 = vsel %vm1618, 0.0, %v3135
        %v3168 = vsel %vm1618, 0.0, %v3136
        %v3185 = vrot.slane %v3153, 4
        %v3186 = vrot.slane %v3121, 4
        %v3187 = vsel %vm1618, %v3185, %v3186
        %v3188 = vrot.slane %v3154, 4
        %v3189 = vrot.slane %v3122, 4
        %v3190 = vsel %vm1618, %v3188, %v3189
        %v3191 = vrot.slane %v3155, 4
        %v3192 = vrot.slane %v3123, 4
        %v3193 = vsel %vm1618, %v3191, %v3192
        %v3194 = vrot.slane %v3156, 4
        %v3195 = vrot.slane %v3124, 4
        %v3196 = vsel %vm1618, %v3194, %v3195
        %v3197 = vrot.slane %v3157, 4
        %v3198 = vrot.slane %v3125, 4
        %v3199 = vsel %vm1618, %v3197, %v3198
        %v3200 = vrot.slane %v3158, 4
        %v3201 = vrot.slane %v3126, 4
        %v3202 = vsel %vm1618, %v3200, %v3201
        %v3203 = vrot.slane %v3159, 4
        %v3204 = vrot.slane %v3127, 4
        %v3205 = vsel %vm1618, %v3203, %v3204
        %v3206 = vrot.slane %v3160, 4
        %v3207 = vrot.slane %v3128, 4
        %v3208 = vsel %vm1618, %v3206, %v3207
        %v3209 = vrot.slane %v3161, 4
        %v3210 = vrot.slane %v3129, 4
        %v3211 = vsel %vm1618, %v3209, %v3210
        %v3212 = vrot.slane %v3162, 4
        %v3213 = vrot.slane %v3130, 4
        %v3214 = vsel %vm1618, %v3212, %v3213
        %v3215 = vrot.slane %v3163, 4
        %v3216 = vrot.slane %v3131, 4
        %v3217 = vsel %vm1618, %v3215, %v3216
        %v3218 = vrot.slane %v3164, 4
        %v3219 = vrot.slane %v3132, 4
        %v3220 = vsel %vm1618, %v3218, %v3219
        %v3221 = vrot.slane %v3165, 4
        %v3222 = vrot.slane %v3133, 4
        %v3223 = vsel %vm1618, %v3221, %v3222
        %v3224 = vrot.slane %v3166, 4
        %v3225 = vrot.slane %v3134, 4
        %v3226 = vsel %vm1618, %v3224, %v3225
        %v3227 = vrot.slane %v3167, 4
        %v3228 = vrot.slane %v3135, 4
        %v3229 = vsel %vm1618, %v3227, %v3228
        %v3230 = vrot.slane %v3168, 4
        %v3231 = vrot.slane %v3136, 4
        %v3232 = vsel %vm1618, %v3230, %v3231
        %3233 = vrot.lane.b32.xlu0 %v3187, 32
        %v3234 = vpop.permute.xlu0 %3233
        %3235 = vrot.lane.b32.xlu0 %v3190, 32
        %v3236 = vpop.permute.xlu0 %3235
        %3237 = vrot.lane.b32.xlu0 %v3193, 32
        %v3238 = vpop.permute.xlu0 %3237
        %3239 = vrot.lane.b32.xlu0 %v3196, 32
        %v3240 = vpop.permute.xlu0 %3239
        %3241 = vrot.lane.b32.xlu0 %v3199, 32
        %v3242 = vpop.permute.xlu0 %3241
        %3243 = vrot.lane.b32.xlu0 %v3202, 32
        %v3244 = vpop.permute.xlu0 %3243
        %3245 = vrot.lane.b32.xlu0 %v3205, 32
        %v3246 = vpop.permute.xlu0 %3245
        %3247 = vrot.lane.b32.xlu0 %v3208, 32
        %v3248 = vpop.permute.xlu0 %3247
        %3249 = vrot.lane.b32.xlu0 %v3211, 32
        %v3250 = vpop.permute.xlu0 %3249
        %3251 = vrot.lane.b32.xlu0 %v3214, 32
        %v3252 = vpop.permute.xlu0 %3251
        %3253 = vrot.lane.b32.xlu0 %v3217, 32
        %v3254 = vpop.permute.xlu0 %3253
        %3255 = vrot.lane.b32.xlu0 %v3220, 32
        %v3256 = vpop.permute.xlu0 %3255
        %3257 = vrot.lane.b32.xlu0 %v3223, 32
        %v3258 = vpop.permute.xlu0 %3257
        %3259 = vrot.lane.b32.xlu0 %v3226, 32
        %v3260 = vpop.permute.xlu0 %3259
        %3261 = vrot.lane.b32.xlu0 %v3229, 32
        %v3262 = vpop.permute.xlu0 %3261
        %3263 = vrot.lane.b32.xlu0 %v3232, 32
        %v3264 = vpop.permute.xlu0 %3263
        %v3281 = vsel %vm679, %v3153, %v3234
        %v3282 = vsel %vm679, %v3154, %v3236
        %v3283 = vsel %vm679, %v3155, %v3238
        %v3284 = vsel %vm679, %v3156, %v3240
        %v3285 = vsel %vm679, %v3157, %v3242
        %v3286 = vsel %vm679, %v3158, %v3244
        %v3287 = vsel %vm679, %v3159, %v3246
        %v3288 = vsel %vm679, %v3160, %v3248
        %v3289 = vsel %vm679, %v3161, %v3250
        %v3290 = vsel %vm679, %v3162, %v3252
        %v3291 = vsel %vm679, %v3163, %v3254
        %v3292 = vsel %vm679, %v3164, %v3256
        %v3293 = vsel %vm679, %v3165, %v3258
        %v3294 = vsel %vm679, %v3166, %v3260
        %v3295 = vsel %vm679, %v3167, %v3262
        %v3296 = vsel %vm679, %v3168, %v3264
        %s3297 = scalar_lea.vmem %s5, 192
        %v3298 = vld [vmem:[%s3297 + $0x20] sm:$0xff]
        %v3299 = vld [vmem:[%s3297 + $0x28] sm:$0xff]
        %v3300 = vld [vmem:[%s3297 + $0x30] sm:$0xff]
        %v3301 = vld [vmem:[%s3297 + $0x38] sm:$0xff]
        %v3302 = vld [vmem:[%s3297 + $0x40] sm:$0xff]
        %v3303 = vld [vmem:[%s3297 + $0x48] sm:$0xff]
        %v3304 = vld [vmem:[%s3297 + $0x50] sm:$0xff]
        %v3305 = vld [vmem:[%s3297 + $0x58] sm:$0xff]
        %s3306 = scalar_lea.vmem %s6, 2
        %v3307 = vld [vmem:[%s3306] sm:$0x1]
        %v3309 = vlaneseq
        %v3310 = vshrl.u32 %v3309, 7
        %v3311 = vsub.s32 0, %v3310
        %v3312 = vrot.slane %v3307, %v3311
        %v3315 = vsel %vm696, %v3281, 0
        %v3318 = vsel %vm696, %v3282, 0
        %v3321 = vsel %vm696, %v3283, 0
        %v3324 = vsel %vm696, %v3284, 0
        %v3327 = vsel %vm696, %v3285, 0
        %v3330 = vsel %vm696, %v3286, 0
        %v3333 = vsel %vm696, %v3287, 0
        %v3336 = vsel %vm696, %v3288, 0
        %v3339 = vsel %vm696, %v3289, 0
        %v3342 = vsel %vm696, %v3290, 0
        %v3345 = vsel %vm696, %v3291, 0
        %v3348 = vsel %vm696, %v3292, 0
        %v3351 = vsel %vm696, %v3293, 0
        %v3354 = vsel %vm696, %v3294, 0
        %v3357 = vsel %vm696, %v3295, 0
        %v3360 = vsel %vm696, %v3296, 0
        %3362 = vmatprep.subr.mxu0 0.0
        %3363 = vmatpush1.msra.mxu0 %v3298
        %3364 = vmatprep.subr.mxu0 0.0
        %3365 = vmatpush1.msra.mxu0 %v3299
        %3366 = vmatprep.subr.mxu0 0.0
        %3367 = vmatpush1.msra.mxu0 %v3300
        %3368 = vmatprep.subr.mxu0 0.0
        %3369 = vmatpush1.msra.mxu0 %v3301
        %3370 = vmatprep.subr.mxu0 0.0
        %3371 = vmatpush1.msra.mxu0 %v3302
        %3372 = vmatprep.subr.mxu0 0.0
        %3373 = vmatpush1.msra.mxu0 %v3303
        %3374 = vmatprep.subr.mxu0 0.0
        %3375 = vmatpush1.msra.mxu0 %v3304
        %3376 = vmatprep.subr.mxu0 0.0
        %3377 = vmatpush1.msra.mxu0 %v3305
        %3378 = vmatprep.subr.mxu0 0.0
        %3379 = vmatpush1.msra.mxu0 0.0
        %3380 = vmatprep.subr.mxu0 0.0
        %3381 = vmatpush1.msra.mxu0 0.0
        %3382 = vmatprep.subr.mxu0 0.0
        %3383 = vmatpush1.msra.mxu0 0.0
        %3384 = vmatprep.subr.mxu0 0.0
        %3385 = vmatpush1.msra.mxu0 0.0
        %3386 = vmatprep.subr.mxu0 0.0
        %3387 = vmatpush1.msra.mxu0 0.0
        %3388 = vmatprep.subr.mxu0 0.0
        %3389 = vmatpush1.msra.mxu0 0.0
        %3390 = vmatprep.subr.mxu0 0.0
        %3391 = vmatpush1.msra.mxu0 0.0
        %3392 = vmatprep.subr.mxu0 0.0
        %3393 = vmatpush1.msra.mxu0 0.0
        %3394 = vmatprep.subr.mxu0 0.0
        %3395 = vmatpush1.msra.mxu0 0.0
        %3396 = vmatprep.subr.mxu0 0.0
        %3397 = vmatpush1.msra.mxu0 0.0
        %3398 = vmatprep.subr.mxu0 0.0
        %3399 = vmatpush1.msra.mxu0 0.0
        %3400 = vmatprep.subr.mxu0 0.0
        %3401 = vmatpush1.msra.mxu0 0.0
        %3402 = vmatprep.subr.mxu0 0.0
        %3403 = vmatpush1.msra.mxu0 0.0
        %3404 = vmatprep.subr.mxu0 0.0
        %3405 = vmatpush1.msra.mxu0 0.0
        %3406 = vmatprep.subr.mxu0 0.0
        %3407 = vmatpush1.msra.mxu0 0.0
        %3408 = vmatprep.subr.mxu0 0.0
        %3409 = vmatpush1.msra.mxu0 0.0
        %3410 = vmatprep.subr.mxu0 0.0
        %3411 = vmatpush1.msra.mxu0 0.0
        %3412 = vmatprep.subr.mxu0 0.0
        %3413 = vmatpush1.msra.mxu0 0.0
        %3414 = vmatprep.subr.mxu0 0.0
        %3415 = vmatpush1.msra.mxu0 0.0
        %3416 = vmatprep.subr.mxu0 0.0
        %3417 = vmatpush1.msra.mxu0 0.0
        %3418 = vmatprep.subr.mxu0 0.0
        %3419 = vmatpush1.msra.mxu0 0.0
        %3420 = vmatprep.subr.mxu0 0.0
        %3421 = vmatpush1.msra.mxu0 0.0
        %3422 = vmatprep.subr.mxu0 0.0
        %3423 = vmatpush1.msra.mxu0 0.0
        %3424 = vmatprep.subr.mxu0 0.0
        %3425 = vmatpush1.msra.mxu0 0.0
        %3426 = vmatprep.mubr.f32.mxu0 0.0
        %3427 = vmatmul.mubr.f32.gmra.mrb[0].mxu0 %v3315
        %v3428 = vpop.f32.mrb[0].mxu0
        %v3429 = vadd.f32 %v3312, %v3428
        %v3430 = vpop.f32.mrb[0].mxu0
        %3431 = vmatprep.mubr.f32.mxu0 0.0
        %3432 = vmatmul.mubr.f32.gmra.mrb[0].mxu0 %v3318
        %v3433 = vpop.f32.mrb[0].mxu0
        %v3434 = vadd.f32 %v3312, %v3433
        %v3435 = vpop.f32.mrb[0].mxu0
        %3436 = vmatprep.mubr.f32.mxu0 0.0
        %3437 = vmatmul.mubr.f32.gmra.mrb[0].mxu0 %v3321
        %v3438 = vpop.f32.mrb[0].mxu0
        %v3439 = vadd.f32 %v3312, %v3438
        %v3440 = vpop.f32.mrb[0].mxu0
        %3441 = vmatprep.mubr.f32.mxu0 0.0
        %3442 = vmatmul.mubr.f32.gmra.mrb[0].mxu0 %v3324
        %v3443 = vpop.f32.mrb[0].mxu0
        %v3444 = vadd.f32 %v3312, %v3443
        %v3445 = vpop.f32.mrb[0].mxu0
        %3446 = vmatprep.mubr.f32.mxu0 0.0
        %3447 = vmatmul.mubr.f32.gmra.mrb[0].mxu0 %v3327
        %v3448 = vpop.f32.mrb[0].mxu0
        %v3449 = vadd.f32 %v3312, %v3448
        %v3450 = vpop.f32.mrb[0].mxu0
        %3451 = vmatprep.mubr.f32.mxu0 0.0
        %3452 = vmatmul.mubr.f32.gmra.mrb[0].mxu0 %v3330
        %v3453 = vpop.f32.mrb[0].mxu0
        %v3454 = vadd.f32 %v3312, %v3453
        %v3455 = vpop.f32.mrb[0].mxu0
        %3456 = vmatprep.mubr.f32.mxu0 0.0
        %3457 = vmatmul.mubr.f32.gmra.mrb[0].mxu0 %v3333
        %v3458 = vpop.f32.mrb[0].mxu0
        %v3459 = vadd.f32 %v3312, %v3458
        %v3460 = vpop.f32.mrb[0].mxu0
        %3461 = vmatprep.mubr.f32.mxu0 0.0
        %3462 = vmatmul.mubr.f32.gmra.mrb[0].mxu0 %v3336
        %v3463 = vpop.f32.mrb[0].mxu0
        %v3464 = vadd.f32 %v3312, %v3463
        %v3465 = vpop.f32.mrb[0].mxu0
        %3466 = vmatprep.mubr.f32.mxu0 0.0
        %3467 = vmatmul.mubr.f32.gmra.mrb[0].mxu0 %v3339
        %v3468 = vpop.f32.mrb[0].mxu0
        %v3469 = vadd.f32 %v3312, %v3468
        %v3470 = vpop.f32.mrb[0].mxu0
        %3471 = vmatprep.mubr.f32.mxu0 0.0
        %3472 = vmatmul.mubr.f32.gmra.mrb[0].mxu0 %v3342
        %v3473 = vpop.f32.mrb[0].mxu0
        %v3474 = vadd.f32 %v3312, %v3473
        %v3475 = vpop.f32.mrb[0].mxu0
        %3476 = vmatprep.mubr.f32.mxu0 0.0
        %3477 = vmatmul.mubr.f32.gmra.mrb[0].mxu0 %v3345
        %v3478 = vpop.f32.mrb[0].mxu0
        %v3479 = vadd.f32 %v3312, %v3478
        %v3480 = vpop.f32.mrb[0].mxu0
        %3481 = vmatprep.mubr.f32.mxu0 0.0
        %3482 = vmatmul.mubr.f32.gmra.mrb[0].mxu0 %v3348
        %v3483 = vpop.f32.mrb[0].mxu0
        %v3484 = vadd.f32 %v3312, %v3483
        %v3485 = vpop.f32.mrb[0].mxu0
        %3486 = vmatprep.mubr.f32.mxu0 0.0
        %3487 = vmatmul.mubr.f32.gmra.mrb[0].mxu0 %v3351
        %v3488 = vpop.f32.mrb[0].mxu0
        %v3489 = vadd.f32 %v3312, %v3488
        %v3490 = vpop.f32.mrb[0].mxu0
        %3491 = vmatprep.mubr.f32.mxu0 0.0
        %3492 = vmatmul.mubr.f32.gmra.mrb[0].mxu0 %v3354
        %v3493 = vpop.f32.mrb[0].mxu0
        %v3494 = vadd.f32 %v3312, %v3493
        %v3495 = vpop.f32.mrb[0].mxu0
        %3496 = vmatprep.mubr.f32.mxu0 0.0
        %3497 = vmatmul.mubr.f32.gmra.mrb[0].mxu0 %v3357
        %v3498 = vpop.f32.mrb[0].mxu0
        %v3499 = vadd.f32 %v3312, %v3498
        %v3500 = vpop.f32.mrb[0].mxu0
        %3501 = vmatprep.mubr.f32.mxu0 0.0
        %3502 = vmatmul.mubr.f32.gmra.mrb[0].mxu0 %v3360
        %v3503 = vpop.f32.mrb[0].mxu0
        %v3504 = vadd.f32 %v3312, %v3503
        %v3505 = vpop.f32.mrb[0].mxu0
        %3506 = vdwg.mxu0
        %v3507 = vmax.f32 %v3429, 0.0
        %v3508 = vmax.f32 %v3434, 0.0
        %v3509 = vmax.f32 %v3439, 0.0
        %v3510 = vmax.f32 %v3444, 0.0
        %v3511 = vmax.f32 %v3449, 0.0
        %v3512 = vmax.f32 %v3454, 0.0
        %v3513 = vmax.f32 %v3459, 0.0
        %v3514 = vmax.f32 %v3464, 0.0
        %v3515 = vmax.f32 %v3469, 0.0
        %v3516 = vmax.f32 %v3474, 0.0
        %v3517 = vmax.f32 %v3479, 0.0
        %v3518 = vmax.f32 %v3484, 0.0
        %v3519 = vmax.f32 %v3489, 0.0
        %v3520 = vmax.f32 %v3494, 0.0
        %v3521 = vmax.f32 %v3499, 0.0
        %v3522 = vmax.f32 %v3504, 0.0
        %v3523 = vadd.f32 %v2639, %v3507
        %v3524 = vadd.f32 %v2640, %v3508
        %v3525 = vadd.f32 %v2641, %v3509
        %v3526 = vadd.f32 %v2642, %v3510
        %v3527 = vadd.f32 %v2643, %v3511
        %v3528 = vadd.f32 %v2644, %v3512
        %v3529 = vadd.f32 %v2645, %v3513
        %v3530 = vadd.f32 %v2646, %v3514
        %v3531 = vadd.f32 %v2647, %v3515
        %v3532 = vadd.f32 %v2648, %v3516
        %v3533 = vadd.f32 %v2649, %v3517
        %v3534 = vadd.f32 %v2650, %v3518
        %v3535 = vadd.f32 %v2651, %v3519
        %v3536 = vadd.f32 %v2652, %v3520
        %v3537 = vadd.f32 %v2653, %v3521
        %v3538 = vadd.f32 %v2654, %v3522
        %v3539 = vadd.f32 %v3507, %v2671
        %v3540 = vadd.f32 %v3508, %v2672
        %v3541 = vadd.f32 %v3509, %v2673
        %v3542 = vadd.f32 %v3510, %v2674
        %v3543 = vadd.f32 %v3511, %v2675
        %v3544 = vadd.f32 %v3512, %v2676
        %v3545 = vadd.f32 %v3513, %v2677
        %v3546 = vadd.f32 %v3514, %v2678
        %v3547 = vadd.f32 %v3515, %v2679
        %v3548 = vadd.f32 %v3516, %v2680
        %v3549 = vadd.f32 %v3517, %v2681
        %v3550 = vadd.f32 %v3518, %v2682
        %v3551 = vadd.f32 %v3519, %v2683
        %v3552 = vadd.f32 %v3520, %v2684
        %v3553 = vadd.f32 %v3521, %v2685
        %v3554 = vadd.f32 %v3522, %v2686
        %v3555 = vmax.f32 %v3539, 0.0
        %v3556 = vmax.f32 %v3540, 0.0
        %v3557 = vmax.f32 %v3541, 0.0
        %v3558 = vmax.f32 %v3542, 0.0
        %v3559 = vmax.f32 %v3543, 0.0
        %v3560 = vmax.f32 %v3544, 0.0
        %v3561 = vmax.f32 %v3545, 0.0
        %v3562 = vmax.f32 %v3546, 0.0
        %v3563 = vmax.f32 %v3547, 0.0
        %v3564 = vmax.f32 %v3548, 0.0
        %v3565 = vmax.f32 %v3549, 0.0
        %v3566 = vmax.f32 %v3550, 0.0
        %v3567 = vmax.f32 %v3551, 0.0
        %v3568 = vmax.f32 %v3552, 0.0
        %v3569 = vmax.f32 %v3553, 0.0
        %v3570 = vmax.f32 %v3554, 0.0
        %s3571 = scalar_lea.vmem %s3, 288
        %v3572 = vld [vmem:[%s3571 + $0x40] sm:$0xff]
        %v3573 = vld [vmem:[%s3571 + $0x48] sm:$0xff]
        %v3574 = vld [vmem:[%s3571 + $0x50] sm:$0xff]
        %v3575 = vld [vmem:[%s3571 + $0x58] sm:$0xff]
        %s3576 = scalar_lea.vmem %s4, 3
        %v3577 = vld [vmem:[%s3576] sm:$0x1]
        %v3579 = vlaneseq
        %v3580 = vshrl.u32 %v3579, 7
        %v3581 = vsub.s32 0, %v3580
        %v3582 = vrot.slane %v3577, %v3581
        %v3585 = vsel %vm679, %v3555, 0
        %v3588 = vsel %vm679, %v3556, 0
        %v3591 = vsel %vm679, %v3557, 0
        %v3594 = vsel %vm679, %v3558, 0
        %v3597 = vsel %vm679, %v3559, 0
        %v3600 = vsel %vm679, %v3560, 0
        %v3603 = vsel %vm679, %v3561, 0
        %v3606 = vsel %vm679, %v3562, 0
        %v3609 = vsel %vm679, %v3563, 0
        %v3612 = vsel %vm679, %v3564, 0
        %v3615 = vsel %vm679, %v3565, 0
        %v3618 = vsel %vm679, %v3566, 0
        %v3621 = vsel %vm679, %v3567, 0
        %v3624 = vsel %vm679, %v3568, 0
        %v3627 = vsel %vm679, %v3569, 0
        %v3630 = vsel %vm679, %v3570, 0
        %3632 = vmatprep.subr.mxu0 0.0
        %3633 = vmatpush1.msra.mxu0 %v3572
        %3634 = vmatprep.subr.mxu0 0.0
        %3635 = vmatpush1.msra.mxu0 %v3573
        %3636 = vmatprep.subr.mxu0 0.0
        %3637 = vmatpush1.msra.mxu0 %v3574
        %3638 = vmatprep.subr.mxu0 0.0
        %3639 = vmatpush1.msra.mxu0 %v3575
        %3640 = vmatprep.subr.mxu0 0.0
        %3641 = vmatpush1.msra.mxu0 0.0
        %3642 = vmatprep.subr.mxu0 0.0
        %3643 = vmatpush1.msra.mxu0 0.0
        %3644 = vmatprep.subr.mxu0 0.0
        %3645 = vmatpush1.msra.mxu0 0.0
        %3646 = vmatprep.subr.mxu0 0.0
        %3647 = vmatpush1.msra.mxu0 0.0
        %3648 = vmatprep.subr.mxu0 0.0
        %3649 = vmatpush1.msra.mxu0 0.0
        %3650 = vmatprep.subr.mxu0 0.0
        %3651 = vmatpush1.msra.mxu0 0.0
        %3652 = vmatprep.subr.mxu0 0.0
        %3653 = vmatpush1.msra.mxu0 0.0
        %3654 = vmatprep.subr.mxu0 0.0
        %3655 = vmatpush1.msra.mxu0 0.0
        %3656 = vmatprep.subr.mxu0 0.0
        %3657 = vmatpush1.msra.mxu0 0.0
        %3658 = vmatprep.subr.mxu0 0.0
        %3659 = vmatpush1.msra.mxu0 0.0
        %3660 = vmatprep.subr.mxu0 0.0
        %3661 = vmatpush1.msra.mxu0 0.0
        %3662 = vmatprep.subr.mxu0 0.0
        %3663 = vmatpush1.msra.mxu0 0.0
        %3664 = vmatprep.subr.mxu0 0.0
        %3665 = vmatpush1.msra.mxu0 0.0
        %3666 = vmatprep.subr.mxu0 0.0
        %3667 = vmatpush1.msra.mxu0 0.0
        %3668 = vmatprep.subr.mxu0 0.0
        %3669 = vmatpush1.msra.mxu0 0.0
        %3670 = vmatprep.subr.mxu0 0.0
        %3671 = vmatpush1.msra.mxu0 0.0
        %3672 = vmatprep.subr.mxu0 0.0
        %3673 = vmatpush1.msra.mxu0 0.0
        %3674 = vmatprep.subr.mxu0 0.0
        %3675 = vmatpush1.msra.mxu0 0.0
        %3676 = vmatprep.subr.mxu0 0.0
        %3677 = vmatpush1.msra.mxu0 0.0
        %3678 = vmatprep.subr.mxu0 0.0
        %3679 = vmatpush1.msra.mxu0 0.0
        %3680 = vmatprep.subr.mxu0 0.0
        %3681 = vmatpush1.msra.mxu0 0.0
        %3682 = vmatprep.subr.mxu0 0.0
        %3683 = vmatpush1.msra.mxu0 0.0
        %3684 = vmatprep.subr.mxu0 0.0
        %3685 = vmatpush1.msra.mxu0 0.0
        %3686 = vmatprep.subr.mxu0 0.0
        %3687 = vmatpush1.msra.mxu0 0.0
        %3688 = vmatprep.subr.mxu0 0.0
        %3689 = vmatpush1.msra.mxu0 0.0
        %3690 = vmatprep.subr.mxu0 0.0
        %3691 = vmatpush1.msra.mxu0 0.0
        %3692 = vmatprep.subr.mxu0 0.0
        %3693 = vmatpush1.msra.mxu0 0.0
        %3694 = vmatprep.subr.mxu0 0.0
        %3695 = vmatpush1.msra.mxu0 0.0
        %3696 = vmatprep.mubr.f32.mxu0 0.0
        %3697 = vmatmul.mubr.f32.gmra.mrb[0].mxu0 %v3585
        %v3698 = vpop.f32.mrb[0].mxu0
        %v3699 = vadd.f32 %v3582, %v3698
        %v3700 = vpop.f32.mrb[0].mxu0
        %3701 = vmatprep.mubr.f32.mxu0 0.0
        %3702 = vmatmul.mubr.f32.gmra.mrb[0].mxu0 %v3588
        %v3703 = vpop.f32.mrb[0].mxu0
        %v3704 = vadd.f32 %v3582, %v3703
        %v3705 = vpop.f32.mrb[0].mxu0
        %3706 = vmatprep.mubr.f32.mxu0 0.0
        %3707 = vmatmul.mubr.f32.gmra.mrb[0].mxu0 %v3591
        %v3708 = vpop.f32.mrb[0].mxu0
        %v3709 = vadd.f32 %v3582, %v3708
        %v3710 = vpop.f32.mrb[0].mxu0
        %3711 = vmatprep.mubr.f32.mxu0 0.0
        %3712 = vmatmul.mubr.f32.gmra.mrb[0].mxu0 %v3594
        %v3713 = vpop.f32.mrb[0].mxu0
        %v3714 = vadd.f32 %v3582, %v3713
        %v3715 = vpop.f32.mrb[0].mxu0
        %3716 = vmatprep.mubr.f32.mxu0 0.0
        %3717 = vmatmul.mubr.f32.gmra.mrb[0].mxu0 %v3597
        %v3718 = vpop.f32.mrb[0].mxu0
        %v3719 = vadd.f32 %v3582, %v3718
        %v3720 = vpop.f32.mrb[0].mxu0
        %3721 = vmatprep.mubr.f32.mxu0 0.0
        %3722 = vmatmul.mubr.f32.gmra.mrb[0].mxu0 %v3600
        %v3723 = vpop.f32.mrb[0].mxu0
        %v3724 = vadd.f32 %v3582, %v3723
        %v3725 = vpop.f32.mrb[0].mxu0
        %3726 = vmatprep.mubr.f32.mxu0 0.0
        %3727 = vmatmul.mubr.f32.gmra.mrb[0].mxu0 %v3603
        %v3728 = vpop.f32.mrb[0].mxu0
        %v3729 = vadd.f32 %v3582, %v3728
        %v3730 = vpop.f32.mrb[0].mxu0
        %3731 = vmatprep.mubr.f32.mxu0 0.0
        %3732 = vmatmul.mubr.f32.gmra.mrb[0].mxu0 %v3606
        %v3733 = vpop.f32.mrb[0].mxu0
        %v3734 = vadd.f32 %v3582, %v3733
        %v3735 = vpop.f32.mrb[0].mxu0
        %3736 = vmatprep.mubr.f32.mxu0 0.0
        %3737 = vmatmul.mubr.f32.gmra.mrb[0].mxu0 %v3609
        %v3738 = vpop.f32.mrb[0].mxu0
        %v3739 = vadd.f32 %v3582, %v3738
        %v3740 = vpop.f32.mrb[0].mxu0
        %3741 = vmatprep.mubr.f32.mxu0 0.0
        %3742 = vmatmul.mubr.f32.gmra.mrb[0].mxu0 %v3612
        %v3743 = vpop.f32.mrb[0].mxu0
        %v3744 = vadd.f32 %v3582, %v3743
        %v3745 = vpop.f32.mrb[0].mxu0
        %3746 = vmatprep.mubr.f32.mxu0 0.0
        %3747 = vmatmul.mubr.f32.gmra.mrb[0].mxu0 %v3615
        %v3748 = vpop.f32.mrb[0].mxu0
        %v3749 = vadd.f32 %v3582, %v3748
        %v3750 = vpop.f32.mrb[0].mxu0
        %3751 = vmatprep.mubr.f32.mxu0 0.0
        %3752 = vmatmul.mubr.f32.gmra.mrb[0].mxu0 %v3618
        %v3753 = vpop.f32.mrb[0].mxu0
        %v3754 = vadd.f32 %v3582, %v3753
        %v3755 = vpop.f32.mrb[0].mxu0
        %3756 = vmatprep.mubr.f32.mxu0 0.0
        %3757 = vmatmul.mubr.f32.gmra.mrb[0].mxu0 %v3621
        %v3758 = vpop.f32.mrb[0].mxu0
        %v3759 = vadd.f32 %v3582, %v3758
        %v3760 = vpop.f32.mrb[0].mxu0
        %3761 = vmatprep.mubr.f32.mxu0 0.0
        %3762 = vmatmul.mubr.f32.gmra.mrb[0].mxu0 %v3624
        %v3763 = vpop.f32.mrb[0].mxu0
        %v3764 = vadd.f32 %v3582, %v3763
        %v3765 = vpop.f32.mrb[0].mxu0
        %3766 = vmatprep.mubr.f32.mxu0 0.0
        %3767 = vmatmul.mubr.f32.gmra.mrb[0].mxu0 %v3627
        %v3768 = vpop.f32.mrb[0].mxu0
        %v3769 = vadd.f32 %v3582, %v3768
        %v3770 = vpop.f32.mrb[0].mxu0
        %3771 = vmatprep.mubr.f32.mxu0 0.0
        %3772 = vmatmul.mubr.f32.gmra.mrb[0].mxu0 %v3630
        %v3773 = vpop.f32.mrb[0].mxu0
        %v3774 = vadd.f32 %v3582, %v3773
        %v3775 = vpop.f32.mrb[0].mxu0
        %3776 = vdwg.mxu0
        %v3777 = vmax.f32 %v3699, 0.0
        %v3778 = vmax.f32 %v3704, 0.0
        %v3779 = vmax.f32 %v3709, 0.0
        %v3780 = vmax.f32 %v3714, 0.0
        %v3781 = vmax.f32 %v3719, 0.0
        %v3782 = vmax.f32 %v3724, 0.0
        %v3783 = vmax.f32 %v3729, 0.0
        %v3784 = vmax.f32 %v3734, 0.0
        %v3785 = vmax.f32 %v3739, 0.0
        %v3786 = vmax.f32 %v3744, 0.0
        %v3787 = vmax.f32 %v3749, 0.0
        %v3788 = vmax.f32 %v3754, 0.0
        %v3789 = vmax.f32 %v3759, 0.0
        %v3790 = vmax.f32 %v3764, 0.0
        %v3791 = vmax.f32 %v3769, 0.0
        %v3792 = vmax.f32 %v3774, 0.0
        %s3793 = scalar_lea.vmem %s5, 288
        %v3794 = vld [vmem:[%s3793 + $0x40] sm:$0xff]
        %v3795 = vld [vmem:[%s3793 + $0x48] sm:$0xff]
        %v3796 = vld [vmem:[%s3793 + $0x50] sm:$0xff]
        %v3797 = vld [vmem:[%s3793 + $0x58] sm:$0xff]
        %s3798 = scalar_lea.vmem %s6, 3
        %v3799 = vld [vmem:[%s3798] sm:$0x1]
        %v3801 = vlaneseq
        %v3802 = vshrl.u32 %v3801, 7
        %v3803 = vsub.s32 0, %v3802
        %v3804 = vrot.slane %v3799, %v3803
        %v3807 = vsel %vm679, %v3777, 0
        %v3810 = vsel %vm679, %v3778, 0
        %v3813 = vsel %vm679, %v3779, 0
        %v3816 = vsel %vm679, %v3780, 0
        %v3819 = vsel %vm679, %v3781, 0
        %v3822 = vsel %vm679, %v3782, 0
        %v3825 = vsel %vm679, %v3783, 0
        %v3828 = vsel %vm679, %v3784, 0
        %v3831 = vsel %vm679, %v3785, 0
        %v3834 = vsel %vm679, %v3786, 0
        %v3837 = vsel %vm679, %v3787, 0
        %v3840 = vsel %vm679, %v3788, 0
        %v3843 = vsel %vm679, %v3789, 0
        %v3846 = vsel %vm679, %v3790, 0
        %v3849 = vsel %vm679, %v3791, 0
        %v3852 = vsel %vm679, %v3792, 0
        %3854 = vmatprep.subr.mxu0 0.0
        %3855 = vmatpush1.msra.mxu0 %v3794
        %3856 = vmatprep.subr.mxu0 0.0
        %3857 = vmatpush1.msra.mxu0 %v3795
        %3858 = vmatprep.subr.mxu0 0.0
        %3859 = vmatpush1.msra.mxu0 %v3796
        %3860 = vmatprep.subr.mxu0 0.0
        %3861 = vmatpush1.msra.mxu0 %v3797
        %3862 = vmatprep.subr.mxu0 0.0
        %3863 = vmatpush1.msra.mxu0 0.0
        %3864 = vmatprep.subr.mxu0 0.0
        %3865 = vmatpush1.msra.mxu0 0.0
        %3866 = vmatprep.subr.mxu0 0.0
        %3867 = vmatpush1.msra.mxu0 0.0
        %3868 = vmatprep.subr.mxu0 0.0
        %3869 = vmatpush1.msra.mxu0 0.0
        %3870 = vmatprep.subr.mxu0 0.0
        %3871 = vmatpush1.msra.mxu0 0.0
        %3872 = vmatprep.subr.mxu0 0.0
        %3873 = vmatpush1.msra.mxu0 0.0
        %3874 = vmatprep.subr.mxu0 0.0
        %3875 = vmatpush1.msra.mxu0 0.0
        %3876 = vmatprep.subr.mxu0 0.0
        %3877 = vmatpush1.msra.mxu0 0.0
        %3878 = vmatprep.subr.mxu0 0.0
        %3879 = vmatpush1.msra.mxu0 0.0
        %3880 = vmatprep.subr.mxu0 0.0
        %3881 = vmatpush1.msra.mxu0 0.0
        %3882 = vmatprep.subr.mxu0 0.0
        %3883 = vmatpush1.msra.mxu0 0.0
        %3884 = vmatprep.subr.mxu0 0.0
        %3885 = vmatpush1.msra.mxu0 0.0
        %3886 = vmatprep.subr.mxu0 0.0
        %3887 = vmatpush1.msra.mxu0 0.0
        %3888 = vmatprep.subr.mxu0 0.0
        %3889 = vmatpush1.msra.mxu0 0.0
        %3890 = vmatprep.subr.mxu0 0.0
        %3891 = vmatpush1.msra.mxu0 0.0
        %3892 = vmatprep.subr.mxu0 0.0
        %3893 = vmatpush1.msra.mxu0 0.0
        %3894 = vmatprep.subr.mxu0 0.0
        %3895 = vmatpush1.msra.mxu0 0.0
        %3896 = vmatprep.subr.mxu0 0.0
        %3897 = vmatpush1.msra.mxu0 0.0
        %3898 = vmatprep.subr.mxu0 0.0
        %3899 = vmatpush1.msra.mxu0 0.0
        %3900 = vmatprep.subr.mxu0 0.0
        %3901 = vmatpush1.msra.mxu0 0.0
        %3902 = vmatprep.subr.mxu0 0.0
        %3903 = vmatpush1.msra.mxu0 0.0
        %3904 = vmatprep.subr.mxu0 0.0
        %3905 = vmatpush1.msra.mxu0 0.0
        %3906 = vmatprep.subr.mxu0 0.0
        %3907 = vmatpush1.msra.mxu0 0.0
        %3908 = vmatprep.subr.mxu0 0.0
        %3909 = vmatpush1.msra.mxu0 0.0
        %3910 = vmatprep.subr.mxu0 0.0
        %3911 = vmatpush1.msra.mxu0 0.0
        %3912 = vmatprep.subr.mxu0 0.0
        %3913 = vmatpush1.msra.mxu0 0.0
        %3914 = vmatprep.subr.mxu0 0.0
        %3915 = vmatpush1.msra.mxu0 0.0
        %3916 = vmatprep.subr.mxu0 0.0
        %3917 = vmatpush1.msra.mxu0 0.0
        %3918 = vmatprep.mubr.f32.mxu0 0.0
        %3919 = vmatmul.mubr.f32.gmra.mrb[0].mxu0 %v3807
        %v3920 = vpop.f32.mrb[0].mxu0
        %v3921 = vadd.f32 %v3804, %v3920
        %v3922 = vpop.f32.mrb[0].mxu0
        %3923 = vmatprep.mubr.f32.mxu0 0.0
        %3924 = vmatmul.mubr.f32.gmra.mrb[0].mxu0 %v3810
        %v3925 = vpop.f32.mrb[0].mxu0
        %v3926 = vadd.f32 %v3804, %v3925
        %v3927 = vpop.f32.mrb[0].mxu0
        %3928 = vmatprep.mubr.f32.mxu0 0.0
        %3929 = vmatmul.mubr.f32.gmra.mrb[0].mxu0 %v3813
        %v3930 = vpop.f32.mrb[0].mxu0
        %v3931 = vadd.f32 %v3804, %v3930
        %v3932 = vpop.f32.mrb[0].mxu0
        %3933 = vmatprep.mubr.f32.mxu0 0.0
        %3934 = vmatmul.mubr.f32.gmra.mrb[0].mxu0 %v3816
        %v3935 = vpop.f32.mrb[0].mxu0
        %v3936 = vadd.f32 %v3804, %v3935
        %v3937 = vpop.f32.mrb[0].mxu0
        %3938 = vmatprep.mubr.f32.mxu0 0.0
        %3939 = vmatmul.mubr.f32.gmra.mrb[0].mxu0 %v3819
        %v3940 = vpop.f32.mrb[0].mxu0
        %v3941 = vadd.f32 %v3804, %v3940
        %v3942 = vpop.f32.mrb[0].mxu0
        %3943 = vmatprep.mubr.f32.mxu0 0.0
        %3944 = vmatmul.mubr.f32.gmra.mrb[0].mxu0 %v3822
        %v3945 = vpop.f32.mrb[0].mxu0
        %v3946 = vadd.f32 %v3804, %v3945
        %v3947 = vpop.f32.mrb[0].mxu0
        %3948 = vmatprep.mubr.f32.mxu0 0.0
        %3949 = vmatmul.mubr.f32.gmra.mrb[0].mxu0 %v3825
        %v3950 = vpop.f32.mrb[0].mxu0
        %v3951 = vadd.f32 %v3804, %v3950
        %v3952 = vpop.f32.mrb[0].mxu0
        %3953 = vmatprep.mubr.f32.mxu0 0.0
        %3954 = vmatmul.mubr.f32.gmra.mrb[0].mxu0 %v3828
        %v3955 = vpop.f32.mrb[0].mxu0
        %v3956 = vadd.f32 %v3804, %v3955
        %v3957 = vpop.f32.mrb[0].mxu0
        %3958 = vmatprep.mubr.f32.mxu0 0.0
        %3959 = vmatmul.mubr.f32.gmra.mrb[0].mxu0 %v3831
        %v3960 = vpop.f32.mrb[0].mxu0
        %v3961 = vadd.f32 %v3804, %v3960
        %v3962 = vpop.f32.mrb[0].mxu0
        %3963 = vmatprep.mubr.f32.mxu0 0.0
        %3964 = vmatmul.mubr.f32.gmra.mrb[0].mxu0 %v3834
        %v3965 = vpop.f32.mrb[0].mxu0
        %v3966 = vadd.f32 %v3804, %v3965
        %v3967 = vpop.f32.mrb[0].mxu0
        %3968 = vmatprep.mubr.f32.mxu0 0.0
        %3969 = vmatmul.mubr.f32.gmra.mrb[0].mxu0 %v3837
        %v3970 = vpop.f32.mrb[0].mxu0
        %v3971 = vadd.f32 %v3804, %v3970
        %v3972 = vpop.f32.mrb[0].mxu0
        %3973 = vmatprep.mubr.f32.mxu0 0.0
        %3974 = vmatmul.mubr.f32.gmra.mrb[0].mxu0 %v3840
        %v3975 = vpop.f32.mrb[0].mxu0
        %v3976 = vadd.f32 %v3804, %v3975
        %v3977 = vpop.f32.mrb[0].mxu0
        %3978 = vmatprep.mubr.f32.mxu0 0.0
        %3979 = vmatmul.mubr.f32.gmra.mrb[0].mxu0 %v3843
        %v3980 = vpop.f32.mrb[0].mxu0
        %v3981 = vadd.f32 %v3804, %v3980
        %v3982 = vpop.f32.mrb[0].mxu0
        %3983 = vmatprep.mubr.f32.mxu0 0.0
        %3984 = vmatmul.mubr.f32.gmra.mrb[0].mxu0 %v3846
        %v3985 = vpop.f32.mrb[0].mxu0
        %v3986 = vadd.f32 %v3804, %v3985
        %v3987 = vpop.f32.mrb[0].mxu0
        %3988 = vmatprep.mubr.f32.mxu0 0.0
        %3989 = vmatmul.mubr.f32.gmra.mrb[0].mxu0 %v3849
        %v3990 = vpop.f32.mrb[0].mxu0
        %v3991 = vadd.f32 %v3804, %v3990
        %v3992 = vpop.f32.mrb[0].mxu0
        %3993 = vmatprep.mubr.f32.mxu0 0.0
        %3994 = vmatmul.mubr.f32.gmra.mrb[0].mxu0 %v3852
        %v3995 = vpop.f32.mrb[0].mxu0
        %v3996 = vadd.f32 %v3804, %v3995
        %v3997 = vpop.f32.mrb[0].mxu0
        %3998 = vdwg.mxu0
        %v3999 = vmax.f32 %v3921, 0.0
        %v4000 = vmax.f32 %v3926, 0.0
        %v4001 = vmax.f32 %v3931, 0.0
        %v4002 = vmax.f32 %v3936, 0.0
        %v4003 = vmax.f32 %v3941, 0.0
        %v4004 = vmax.f32 %v3946, 0.0
        %v4005 = vmax.f32 %v3951, 0.0
        %v4006 = vmax.f32 %v3956, 0.0
        %v4007 = vmax.f32 %v3961, 0.0
        %v4008 = vmax.f32 %v3966, 0.0
        %v4009 = vmax.f32 %v3971, 0.0
        %v4010 = vmax.f32 %v3976, 0.0
        %v4011 = vmax.f32 %v3981, 0.0
        %v4012 = vmax.f32 %v3986, 0.0
        %v4013 = vmax.f32 %v3991, 0.0
        %v4014 = vmax.f32 %v3996, 0.0
        %v4015 = vadd.f32 %v3523, %v3999
        %v4016 = vadd.f32 %v3524, %v4000
        %v4017 = vadd.f32 %v3525, %v4001
        %v4018 = vadd.f32 %v3526, %v4002
        %v4019 = vadd.f32 %v3527, %v4003
        %v4020 = vadd.f32 %v3528, %v4004
        %v4021 = vadd.f32 %v3529, %v4005
        %v4022 = vadd.f32 %v3530, %v4006
        %v4023 = vadd.f32 %v3531, %v4007
        %v4024 = vadd.f32 %v3532, %v4008
        %v4025 = vadd.f32 %v3533, %v4009
        %v4026 = vadd.f32 %v3534, %v4010
        %v4027 = vadd.f32 %v3535, %v4011
        %v4028 = vadd.f32 %v3536, %v4012
        %v4029 = vadd.f32 %v3537, %v4013
        %v4030 = vadd.f32 %v3538, %v4014
        %v4031 = vmax.f32 %v4015, 0.0
        %v4032 = vmax.f32 %v4016, 0.0
        %v4033 = vmax.f32 %v4017, 0.0
        %v4034 = vmax.f32 %v4018, 0.0
        %v4035 = vmax.f32 %v4019, 0.0
        %v4036 = vmax.f32 %v4020, 0.0
        %v4037 = vmax.f32 %v4021, 0.0
        %v4038 = vmax.f32 %v4022, 0.0
        %v4039 = vmax.f32 %v4023, 0.0
        %v4040 = vmax.f32 %v4024, 0.0
        %v4041 = vmax.f32 %v4025, 0.0
        %v4042 = vmax.f32 %v4026, 0.0
        %v4043 = vmax.f32 %v4027, 0.0
        %v4044 = vmax.f32 %v4028, 0.0
        %v4045 = vmax.f32 %v4029, 0.0
        %v4046 = vmax.f32 %v4030, 0.0
        %v4047 = vld [vmem:[%s7] sm:$0xff]
        %v4048 = vld [vmem:[%s7 + $0x8] sm:$0xff]
        %v4049 = vld [vmem:[%s7 + $0x10] sm:$0xff]
        %v4050 = vld [vmem:[%s7 + $0x18] sm:$0xff]
        %v4051 = vld [vmem:[%s8] sm:$0x1]
        %v4053 = vlaneseq
        %v4054 = vshrl.u32 %v4053, 7
        %v4055 = vsub.s32 0, %v4054
        %v4056 = vrot.slane %v4051, %v4055
        %v4074 = vrot.slane %v4031, 7
        %v4075 = vrot.slane %v4032, 6
        %vm4076 = vcmask 1041409
        %v4077 = vsel %vm4076, %v4075, %v4074
        %v4078 = vrot.slane %v4033, 5
        %vm4079 = vcmask 1042434
        %v4080 = vsel %vm4079, %v4078, %v4077
        %v4081 = vrot.slane %v4034, 4
        %vm4082 = vcmask 1043459
        %v4083 = vsel %vm4082, %v4081, %v4080
        %v4084 = vrot.slane %v4035, 3
        %vm4085 = vcmask 1044484
        %v4086 = vsel %vm4085, %v4084, %v4083
        %v4087 = vrot.slane %v4036, 2
        %vm4088 = vcmask 1045509
        %v4089 = vsel %vm4088, %v4087, %v4086
        %v4090 = vrot.slane %v4037, 1
        %vm4091 = vcmask 1046534
        %v4092 = vsel %vm4091, %v4090, %v4089
        %vm4093 = vcmask 1047559
        %v4094 = vsel %vm4093, %v4038, %v4092
        %v4095 = vrot.slane %v4039, 7
        %v4096 = vrot.slane %v4040, 6
        %v4097 = vsel %vm4076, %v4096, %v4095
        %v4098 = vrot.slane %v4041, 5
        %v4099 = vsel %vm4079, %v4098, %v4097
        %v4100 = vrot.slane %v4042, 4
        %v4101 = vsel %vm4082, %v4100, %v4099
        %v4102 = vrot.slane %v4043, 3
        %v4103 = vsel %vm4085, %v4102, %v4101
        %v4104 = vrot.slane %v4044, 2
        %v4105 = vsel %vm4088, %v4104, %v4103
        %v4106 = vrot.slane %v4045, 1
        %v4107 = vsel %vm4091, %v4106, %v4105
        %v4108 = vsel %vm4093, %v4046, %v4107
        %v4109 = vsel %vm679, %v4094, 0
        %v4111 = vsel %vm679, %v4108, 0
        %4113 = vmatprep.subr.mxu0 0.0
        %4114 = vmatpush1.msra.mxu0 %v4047
        %4115 = vmatprep.subr.mxu0 0.0
        %4116 = vmatpush1.msra.mxu0 %v4048
        %4117 = vmatprep.subr.mxu0 0.0
        %4118 = vmatpush1.msra.mxu0 %v4049
        %4119 = vmatprep.subr.mxu0 0.0
        %4120 = vmatpush1.msra.mxu0 %v4050
        %4121 = vmatprep.subr.mxu0 0.0
        %4122 = vmatpush1.msra.mxu0 0.0
        %4123 = vmatprep.subr.mxu0 0.0
        %4124 = vmatpush1.msra.mxu0 0.0
        %4125 = vmatprep.subr.mxu0 0.0
        %4126 = vmatpush1.msra.mxu0 0.0
        %4127 = vmatprep.subr.mxu0 0.0
        %4128 = vmatpush1.msra.mxu0 0.0
        %4129 = vmatprep.subr.mxu0 0.0
        %4130 = vmatpush1.msra.mxu0 0.0
        %4131 = vmatprep.subr.mxu0 0.0
        %4132 = vmatpush1.msra.mxu0 0.0
        %4133 = vmatprep.subr.mxu0 0.0
        %4134 = vmatpush1.msra.mxu0 0.0
        %4135 = vmatprep.subr.mxu0 0.0
        %4136 = vmatpush1.msra.mxu0 0.0
        %4137 = vmatprep.subr.mxu0 0.0
        %4138 = vmatpush1.msra.mxu0 0.0
        %4139 = vmatprep.subr.mxu0 0.0
        %4140 = vmatpush1.msra.mxu0 0.0
        %4141 = vmatprep.subr.mxu0 0.0
        %4142 = vmatpush1.msra.mxu0 0.0
        %4143 = vmatprep.subr.mxu0 0.0
        %4144 = vmatpush1.msra.mxu0 0.0
        %4145 = vmatprep.subr.mxu0 0.0
        %4146 = vmatpush1.msra.mxu0 0.0
        %4147 = vmatprep.subr.mxu0 0.0
        %4148 = vmatpush1.msra.mxu0 0.0
        %4149 = vmatprep.subr.mxu0 0.0
        %4150 = vmatpush1.msra.mxu0 0.0
        %4151 = vmatprep.subr.mxu0 0.0
        %4152 = vmatpush1.msra.mxu0 0.0
        %4153 = vmatprep.subr.mxu0 0.0
        %4154 = vmatpush1.msra.mxu0 0.0
        %4155 = vmatprep.subr.mxu0 0.0
        %4156 = vmatpush1.msra.mxu0 0.0
        %4157 = vmatprep.subr.mxu0 0.0
        %4158 = vmatpush1.msra.mxu0 0.0
        %4159 = vmatprep.subr.mxu0 0.0
        %4160 = vmatpush1.msra.mxu0 0.0
        %4161 = vmatprep.subr.mxu0 0.0
        %4162 = vmatpush1.msra.mxu0 0.0
        %4163 = vmatprep.subr.mxu0 0.0
        %4164 = vmatpush1.msra.mxu0 0.0
        %4165 = vmatprep.subr.mxu0 0.0
        %4166 = vmatpush1.msra.mxu0 0.0
        %4167 = vmatprep.subr.mxu0 0.0
        %4168 = vmatpush1.msra.mxu0 0.0
        %4169 = vmatprep.subr.mxu0 0.0
        %4170 = vmatpush1.msra.mxu0 0.0
        %4171 = vmatprep.subr.mxu0 0.0
        %4172 = vmatpush1.msra.mxu0 0.0
        %4173 = vmatprep.subr.mxu0 0.0
        %4174 = vmatpush1.msra.mxu0 0.0
        %4175 = vmatprep.subr.mxu0 0.0
        %4176 = vmatpush1.msra.mxu0 0.0
        %4177 = vmatprep.mubr.f32.mxu0 0.0
        %4178 = vmatmul.mubr.f32.gmra.mrb[0].mxu0 %v4109
        %v4179 = vpop.f32.mrb[0].mxu0
        %v4180 = vadd.f32 %v4056, %v4179
        %v4181 = vpop.f32.mrb[0].mxu0
        %4182 = vmatprep.mubr.f32.mxu0 0.0
        %4183 = vmatmul.mubr.f32.gmra.mrb[0].mxu0 %v4111
        %v4184 = vpop.f32.mrb[0].mxu0
        %v4185 = vadd.f32 %v4056, %v4184
        %v4186 = vpop.f32.mrb[0].mxu0
        %4187 = vdwg.mxu0
        %v4188 = vmax.f32 %v4180, 0.0
        %v4189 = vmax.f32 %v4185, 0.0
        %v4190 = vld [vmem:[%s9] sm:$0xff]
        %v4191 = vld [vmem:[%s9 + $0x8] sm:$0xff]
        %v4192 = vld [vmem:[%s10] sm:$0x1]
        %v4194 = vlaneseq
        %v4195 = vshrl.u32 %v4194, 7
        %v4196 = vsub.s32 0, %v4195
        %v4197 = vrot.slane %v4192, %v4196
        %vm4199 = vcmask 130048
        %v4201 = vsel %vm4199, %v4188, 0
        %v4204 = vsel %vm4199, %v4189, 0
        %4206 = vmatprep.subr.mxu0 0.0
        %4207 = vmatpush1.msra.mxu0 %v4190
        %4208 = vmatprep.subr.mxu0 0.0
        %4209 = vmatpush1.msra.mxu0 %v4191
        %4210 = vmatprep.subr.mxu0 0.0
        %4211 = vmatpush1.msra.mxu0 0.0
        %4212 = vmatprep.subr.mxu0 0.0
        %4213 = vmatpush1.msra.mxu0 0.0
        %4214 = vmatprep.subr.mxu0 0.0
        %4215 = vmatpush1.msra.mxu0 0.0
        %4216 = vmatprep.subr.mxu0 0.0
        %4217 = vmatpush1.msra.mxu0 0.0
        %4218 = vmatprep.subr.mxu0 0.0
        %4219 = vmatpush1.msra.mxu0 0.0
        %4220 = vmatprep.subr.mxu0 0.0
        %4221 = vmatpush1.msra.mxu0 0.0
        %4222 = vmatprep.subr.mxu0 0.0
        %4223 = vmatpush1.msra.mxu0 0.0
        %4224 = vmatprep.subr.mxu0 0.0
        %4225 = vmatpush1.msra.mxu0 0.0
        %4226 = vmatprep.subr.mxu0 0.0
        %4227 = vmatpush1.msra.mxu0 0.0
        %4228 = vmatprep.subr.mxu0 0.0
        %4229 = vmatpush1.msra.mxu0 0.0
        %4230 = vmatprep.subr.mxu0 0.0
        %4231 = vmatpush1.msra.mxu0 0.0
        %4232 = vmatprep.subr.mxu0 0.0
        %4233 = vmatpush1.msra.mxu0 0.0
        %4234 = vmatprep.subr.mxu0 0.0
        %4235 = vmatpush1.msra.mxu0 0.0
        %4236 = vmatprep.subr.mxu0 0.0
        %4237 = vmatpush1.msra.mxu0 0.0
        %4238 = vmatprep.subr.mxu0 0.0
        %4239 = vmatpush1.msra.mxu0 0.0
        %4240 = vmatprep.subr.mxu0 0.0
        %4241 = vmatpush1.msra.mxu0 0.0
        %4242 = vmatprep.subr.mxu0 0.0
        %4243 = vmatpush1.msra.mxu0 0.0
        %4244 = vmatprep.subr.mxu0 0.0
        %4245 = vmatpush1.msra.mxu0 0.0
        %4246 = vmatprep.subr.mxu0 0.0
        %4247 = vmatpush1.msra.mxu0 0.0
        %4248 = vmatprep.subr.mxu0 0.0
        %4249 = vmatpush1.msra.mxu0 0.0
        %4250 = vmatprep.subr.mxu0 0.0
        %4251 = vmatpush1.msra.mxu0 0.0
        %4252 = vmatprep.subr.mxu0 0.0
        %4253 = vmatpush1.msra.mxu0 0.0
        %4254 = vmatprep.subr.mxu0 0.0
        %4255 = vmatpush1.msra.mxu0 0.0
        %4256 = vmatprep.subr.mxu0 0.0
        %4257 = vmatpush1.msra.mxu0 0.0
        %4258 = vmatprep.subr.mxu0 0.0
        %4259 = vmatpush1.msra.mxu0 0.0
        %4260 = vmatprep.subr.mxu0 0.0
        %4261 = vmatpush1.msra.mxu0 0.0
        %4262 = vmatprep.subr.mxu0 0.0
        %4263 = vmatpush1.msra.mxu0 0.0
        %4264 = vmatprep.subr.mxu0 0.0
        %4265 = vmatpush1.msra.mxu0 0.0
        %4266 = vmatprep.subr.mxu0 0.0
        %4267 = vmatpush1.msra.mxu0 0.0
        %4268 = vmatprep.subr.mxu0 0.0
        %4269 = vmatpush1.msra.mxu0 0.0
        %4270 = vmatprep.mubr.f32.mxu0 0.0
        %4271 = vmatmul.mubr.f32.gmra.mrb[0].mxu0 %v4201
        %v4272 = vpop.f32.mrb[0].mxu0
        %v4273 = vadd.f32 %v4197, %v4272
        %v4274 = vpop.f32.mrb[0].mxu0
        %4275 = vmatprep.mubr.f32.mxu0 0.0
        %4276 = vmatmul.mubr.f32.gmra.mrb[0].mxu0 %v4204
        %v4277 = vpop.f32.mrb[0].mxu0
        %v4278 = vadd.f32 %v4197, %v4277
        %v4279 = vpop.f32.mrb[0].mxu0
        %4280 = vdwg.mxu0
        %4281 = vst [vmem:[%s380] sm:$0xff] %v4273
        %4282 = vst [vmem:[%s380 + $0x8] sm:$0xff] %v4278
        %s4283 = sand.u32 %s269, 1
        %s4284 = scalar_lea.sflag [#allocation3], %s4283
        %s4285 = sand.u32 %s269, 1
        %s4286 = smul.addr %s4285, 16
        %s4287 = scalar_lea.vmem [#allocation2], %s4286
        // Predicated region
        $region65: #{tpu_custom_call.1} parent=63 // pred_check
          %p4288 = pneg %p279
        $region66: #{tpu_custom_call.1} parent=63 // pred_check_branch
          %4290 = sbr.rel (%p4288) target = $region68
        $region67: #{tpu_custom_call.1} parent=63 // pred_region
          %s4291 = smul.u32 2, %s25
          %s4293 = ssub.s32 256, 256
          %4294 = vsyncadd %s4284, %s4293
          %s4295 = smul.addr %s4291, 128
          %s4296 = scalar_lea.hbm %s11, %s4295
          %s4297 = sshll.u32 %s4287, 4
          %s4298 = int_to_ptr.vmem [resolvable:$true] %s4297
          %4303 = dma.vmem_to_hbm [thread:$0]  %s4298, 256, %s4296, %s4284, 128, 128, 8
        $region68: #{tpu_custom_call.1} parent=63 // pred_fallthru
          _
      $region64: #{tpu_custom_call.1} parent=5 // pred_fallthru
        _
      %p4304 = scmp.le.s32.totalorder 2, %s20
      // Predicated region
      $region69: #{tpu_custom_call.1} parent=5 // pred_check
        %p4305 = pneg %p4304
      $region70: #{tpu_custom_call.1} parent=5 // pred_check_branch
        %4307 = sbr.rel (%p4305) target = $region72
      $region71: #{tpu_custom_call.1} parent=5 // pred_region
        %s4308 = ssub.s32 %s20, 2
        // Predicated region
        $region73: #{tpu_custom_call.1} parent=71 // pred_check
          %p4309 = pneg %p285
        $region74: #{tpu_custom_call.1} parent=71 // pred_check_branch
          %4311 = sbr.rel (%p4309) target = $region76
        $region75: #{tpu_custom_call.1} parent=71 // pred_region
          %s4312 = sand.u32 %s270, 1
          %s4313 = scalar_lea.sflag [#allocation3], %s4312
          %s4314 = sand.u32 %s270, 1
          %s4315 = smul.addr %s4314, 16
          %s4316 = scalar_lea.vmem [#allocation2], %s4315
          %4317 = dma.done %s4313, 256
        $region76: #{tpu_custom_call.1} parent=71 // pred_fallthru
          _
      $region72: #{tpu_custom_call.1} parent=5 // pred_fallthru
        _
    $region6: #{tpu_custom_call.1} parent=1 // loop_footer
      %s24 = sadd.s32 1, %s20
    $region7: #{tpu_custom_call.1} parent=1 // loop_footer_branch
      %19 = sbr.rel target = $region3
    $region8: #{tpu_custom_call.1} parent=1 // loop_exit
      _
    %4318 = vsyncpa [#allocation3], 1
    %s4319 = scalar_lea.sflag [#allocation3], 1
    %4320 = vsyncpa %s4319, 1

</llo_original>
